<compile_context>
chip_gen: v7x
topology: tpu7x:2x2x1
jax: 0.10.0
libtpu: 0.0.40
codegen_flags: <defaults>
</compile_context>

<pallas_src>
import jax
import jax.numpy as jnp
from jax import lax
from jax.experimental import pallas as pl
from jax.experimental.pallas import tpu as pltpu


_OFF = 8  # sublane-aligned interior column offset (left pad of the W axis)


def _residual_block_kernel(xpad_ref, w1_ref, b1_ref, w2_ref, b2_ref,
                           out_ref, acc_ref, mid_ref):
    """Fused out = relu(conv2(relu(conv1(x))) + x), stride=1, padding=1.

    xpad_ref : (H+4, W+16, Cp) f32  zero-padded input, one batch element
                                    (2-row pad top/bottom, 8-col pad left/right)
    w1_ref   : (9, Cp, Cp)  cdt     conv1 weights, one (Cin,Cout) block per tap
    b1_ref   : (1, Cp)      f32     conv1 bias
    w2_ref   : (9, Cp, Cp)  cdt     conv2 weights
    b2_ref   : (1, Cp)      f32     conv2 bias
    out_ref  : (Th, W, Cp)          output tile (rows t*Th .. t*Th+Th-1)
    acc_ref  : ((Th+2)*W, Cp) f32   VMEM accumulator (conv1 uses all rows,
                                    conv2 uses the first Th*W rows)
    mid_ref  : (Th+2, W+16, Cp) cdt VMEM scratch: relu(conv1) + zero halo,
                                    interior at cols _OFF.._OFF+W
    """
    Th, W, Cp = out_ref.shape
    Hm = Th + 2                      # conv1 rows computed (incl. conv2 halo)
    cdt = mid_ref.dtype              # compute (MXU operand) dtype

    t = pl.program_id(1)
    n_t = pl.num_programs(1)
    row0 = pl.multiple_of(t * Th, Th)

    # ---------------- conv1: 9 per-tap accumulated matmuls ------------------
    # mid row j (j=0..Hm-1) = conv1 output at image row (t*Th - 1 + j);
    # tap (ky,kx) for that row block reads xpad rows row0+ky .. row0+ky+Hm-1
    # and cols (_OFF-1+kx) .. (_OFF-1+kx+W).
    for k in range(9):
        ky, kx = divmod(k, 3)
        tap = xpad_ref[pl.ds(row0 + ky, Hm), _OFF - 1 + kx:_OFF - 1 + kx + W, :]
        tap = tap.reshape(Hm * W, Cp).astype(cdt)
        contrib = jnp.dot(tap, w1_ref[k], preferred_element_type=jnp.float32)
        if k == 0:
            acc_ref[...] = contrib
        else:
            acc_ref[...] += contrib
    y1 = jnp.maximum(acc_ref[...] + b1_ref[...], 0.0)

    # ---------------- stage relu(conv1) into mid with a zero halo -----------
    # Aligned full 8-wide side strips and aligned interior -> unmasked stores.
    mid_ref[:, 0:_OFF, :] = jnp.zeros((Hm, _OFF, Cp), cdt)
    mid_ref[:, _OFF + W:_OFF + W + 8, :] = jnp.zeros((Hm, 8, Cp), cdt)
    mid_ref[:, _OFF:_OFF + W, :] = y1.reshape(Hm, W, Cp).astype(cdt)

    # Rows that fall outside the image are conv2's zero padding, not conv1
    # evaluated out of range: force them to zero (full-width, unmasked).
    @pl.when(t == 0)
    def _():
        mid_ref[0:1, :, :] = jnp.zeros((1, W + 16, Cp), cdt)

    @pl.when(t == n_t - 1)
    def _():
        mid_ref[Hm - 1:Hm, :, :] = jnp.zeros((1, W + 16, Cp), cdt)

    # ---------------- conv2: 9 per-tap accumulated matmuls ------------------
    for k in range(9):
        ky, kx = divmod(k, 3)
        tap = mid_ref[ky:ky + Th, _OFF - 1 + kx:_OFF - 1 + kx + W, :]
        tap = tap.reshape(Th * W, Cp)            # already in compute dtype
        contrib = jnp.dot(tap, w2_ref[k], preferred_element_type=jnp.float32)
        if k == 0:
            acc_ref[0:Th * W, :] = contrib
        else:
            acc_ref[0:Th * W, :] += contrib

    # ---------------- bias + residual add + final ReLU (f32) ----------------
    identity = xpad_ref[pl.ds(row0 + 2, Th), _OFF:_OFF + W, :]   # aligned read
    y2 = (acc_ref[0:Th * W, :] + b2_ref[...]).reshape(Th, W, Cp)
    out_ref[...] = jnp.maximum(y2 + identity, 0.0).astype(out_ref.dtype)


def _prep_weight(w, C, Cp, dtype):
    """(Cout, Cin, 3, 3) OIHW -> (9, Cp, Cp): one lane-dense (Cin, Cout)
    matrix per tap, zero-padded so padded lanes stay exactly zero."""
    w_t = jnp.transpose(w, (2, 3, 1, 0)).reshape(9, C, C)     # (9, Cin, Cout)
    w_t = jnp.pad(w_t, ((0, 0), (0, Cp - C), (0, Cp - C)))
    return w_t.astype(dtype)


def residual_block_nhwc(x_nhwc, w1, b1, w2, b2, *, h_tile=None, use_bf16=True):
    """Core entry (NHWC). x_nhwc: (N, H, W, C) f32; w*: (C, C, 3, 3) OIHW."""
    N, H, W, C = x_nhwc.shape
    Cp = pl.cdiv(C, 128) * 128                   # lane-dense channel width
    cdt = jnp.bfloat16 if use_bf16 else jnp.float32

    if h_tile is None:
        h_tile = 8 if (H % 8 == 0 and H > 8) else H
    assert H % h_tile == 0, "H must be divisible by h_tile"
    n_tiles = H // h_tile

    # One pad op: 2-row halo (conv1 + conv2 recompute halo), 8-col aligned
    # halo, and the channel pad to Cp.  Kept f32 (identity read needs f32).
    x_pad = jnp.pad(x_nhwc, ((0, 0), (2, 2), (8, 8), (0, Cp - C)))

    w1p = _prep_weight(w1, C, Cp, cdt)
    w2p = _prep_weight(w2, C, Cp, cdt)
    b1p = jnp.pad(b1.reshape(1, C), ((0, 0), (0, Cp - C))).astype(jnp.float32)
    b2p = jnp.pad(b2.reshape(1, C), ((0, 0), (0, Cp - C))).astype(jnp.float32)

    out = pl.pallas_call(
        _residual_block_kernel,
        out_shape=jax.ShapeDtypeStruct((N, H, W, Cp), x_nhwc.dtype),
        grid_spec=pltpu.PrefetchScalarGridSpec(
            num_scalar_prefetch=0,
            grid=(N, n_tiles),
            in_specs=[
                # Full padded slab per batch element; block index is constant
                # over the h axis so it is only re-DMA'd when n changes.
                pl.BlockSpec((None, H + 4, W + 16, Cp),
                             lambda n, t: (n, 0, 0, 0)),
                pl.BlockSpec((9, Cp, Cp), lambda n, t: (0, 0, 0)),
                pl.BlockSpec((1, Cp), lambda n, t: (0, 0)),
                pl.BlockSpec((9, Cp, Cp), lambda n, t: (0, 0, 0)),
                pl.BlockSpec((1, Cp), lambda n, t: (0, 0)),
            ],
            out_specs=pl.BlockSpec((None, h_tile, W, Cp),
                                   lambda n, t: (n, t, 0, 0)),
            scratch_shapes=[
                pltpu.VMEM(((h_tile + 2) * W, Cp), jnp.float32),  # accumulator
                pltpu.VMEM((h_tile + 2, W + 16, Cp), cdt),        # mid + halo
            ],
        ),
        compiler_params=pltpu.CompilerParams(
            dimension_semantics=("parallel", "arbitrary")),
    )(x_pad, w1p, b1p, w2p, b2p)

    return out[..., :C]                          # drop channel padding


def residual_block(x_nchw, w1, b1, w2, b2, *, h_tile=None, use_bf16=True):
    """PyTorch-layout adapter: NCHW in / NCHW out."""
    x_nhwc = jnp.transpose(x_nchw, (0, 2, 3, 1))
    out = residual_block_nhwc(x_nhwc, w1, b1, w2, b2,
                              h_tile=h_tile, use_bf16=use_bf16)
    return jnp.transpose(out, (0, 3, 1, 2))


def _reference(x_nchw, w1, b1, w2, b2):
    """Pure-JAX reference (NCHW, matches PyTorch semantics, f32)."""
    dn = lax.conv_dimension_numbers(x_nchw.shape, w1.shape,
                                    ("NCHW", "OIHW", "NCHW"))

    def conv(x, w, b):
        y = lax.conv_general_dilated(x, w, (1, 1), ((1, 1), (1, 1)),
                                     dimension_numbers=dn)
        return y + b.reshape(1, -1, 1, 1)

    out = jnp.maximum(conv(x_nchw, w1, b1), 0.0)
    out = conv(out, w2, b2)
    return jnp.maximum(out + x_nchw, 0.0)


if __name__ == "__main__":
    N, C, H, W = 2, 4, 16, 16
    key = jax.random.PRNGKey(0)
    k_x, kw1, kb1, kw2, kb2 = jax.random.split(key, 5)

    x = jax.random.normal(k_x, (N, C, H, W), dtype=jnp.float32)
    # Deterministic parameter init (shapes per nn.Conv2d(channels, channels, 3)).
    w1 = jax.random.normal(kw1, (C, C, 3, 3), dtype=jnp.float32) * 0.1
    b1 = jax.random.normal(kb1, (C,), dtype=jnp.float32) * 0.1
    w2 = jax.random.normal(kw2, (C, C, 3, 3), dtype=jnp.float32) * 0.1
    b2 = jax.random.normal(kb2, (C,), dtype=jnp.float32) * 0.1

    ref = _reference(x, w1, b1, w2, b2)

    # f32-operand path: tight tolerance.
    out_f32 = residual_block(x, w1, b1, w2, b2, use_bf16=False)
    out_f32 = jax.block_until_ready(out_f32)
    assert out_f32.shape == (N, C, H, W)
    err_f32 = float(jnp.max(jnp.abs(out_f32 - ref)))
    assert err_f32 < 1e-3, f"f32 path mismatch: max abs err = {err_f32}"

    # bf16-operand path (f32 accumulation + f32 tail): bf16-appropriate tol.
    out_bf16 = residual_block(x, w1, b1, w2, b2, use_bf16=True)
    out_bf16 = jax.block_until_ready(out_bf16)
    assert out_bf16.shape == (N, C, H, W)
    err_bf16 = float(jnp.max(jnp.abs(out_bf16 - ref)))
    assert err_bf16 < 5e-2, f"bf16 path mismatch: max abs err = {err_bf16}"

    print("KERNEL_OK")
</pallas_src>

<mosaic_0001>
module attributes {stable_mosaic.version = 11 : i64} {
  func.func @_residual_block_kernel(%arg0: i32, %arg1: i32, %arg2: memref<1x20x32x128xf32, #tpu.memory_space<vmem>>, %arg3: memref<9x128x128xf32, #tpu.memory_space<vmem>>, %arg4: memref<1x128xf32, #tpu.memory_space<vmem>>, %arg5: memref<9x128x128xf32, #tpu.memory_space<vmem>>, %arg6: memref<1x128xf32, #tpu.memory_space<vmem>>, %arg7: memref<1x8x16x128xf32, #tpu.memory_space<vmem>>, %arg8: memref<160x128xf32, #tpu.memory_space<vmem>>, %arg9: memref<10x32x128xf32, #tpu.memory_space<vmem>>) attributes {dimension_semantics = [#tpu.dimension_semantics<parallel>, #tpu.dimension_semantics<arbitrary>], iteration_bounds = array<i64: 2, 2>, scalar_prefetch = 0 : i64, scratch_operands = 2 : i64, tpu.core_type = #tpu.core_type<tc>, window_params = [{transform_indices = @transform_0, window_bounds = array<i64: 1, 20, 32, 128>}, {pipeline_mode = #tpu.pipeline_mode<synchronous>, transform_indices = @transform_1, window_bounds = array<i64: 9, 128, 128>}, {pipeline_mode = #tpu.pipeline_mode<synchronous>, transform_indices = @transform_2, window_bounds = array<i64: 1, 128>}, {pipeline_mode = #tpu.pipeline_mode<synchronous>, transform_indices = @transform_3, window_bounds = array<i64: 9, 128, 128>}, {pipeline_mode = #tpu.pipeline_mode<synchronous>, transform_indices = @transform_4, window_bounds = array<i64: 1, 128>}, {transform_indices = @transform_5, window_bounds = array<i64: 1, 8, 16, 128>}]} {
    %c8_i32 = arith.constant 8 : i32
    %0 = arith.muli %arg1, %c8_i32 : i32
    %1 = tpu.assume_multiple %0, 8 : i32
    %c0_i32 = arith.constant 0 : i32
    %2 = arith.addi %1, %c0_i32 : i32
    %c0 = arith.constant 0 : index
    %3 = arith.index_cast %2 : i32 to index
    %c7 = arith.constant 7 : index
    %c0_0 = arith.constant 0 : index
    %4 = vector.load %arg2[%c0, %3, %c7, %c0_0] : memref<1x20x32x128xf32, #tpu.memory_space<vmem>>, vector<1x10x16x128xf32>
    %5 = vector.shape_cast %4 : vector<1x10x16x128xf32> to vector<10x16x128xf32>
    %6 = vector.shape_cast %5 : vector<10x16x128xf32> to vector<160x128xf32>
    %c0_1 = arith.constant 0 : index
    %c0_2 = arith.constant 0 : index
    %c0_3 = arith.constant 0 : index
    %7 = vector.load %arg3[%c0_1, %c0_2, %c0_3] : memref<9x128x128xf32, #tpu.memory_space<vmem>>, vector<1x128x128xf32>
    %8 = vector.shape_cast %7 : vector<1x128x128xf32> to vector<128x128xf32>
    %cst = arith.constant dense<0.000000e+00> : vector<160x128xf32>
    %9 = tpu.matmul %6, %8, %cst {dimension_numbers = #tpu.dot_dimension_numbers<[1], [0], [0], [1], [0, 0, 1, 1], [], []>} : vector<160x128xf32>, vector<128x128xf32>, vector<160x128xf32> -> vector<160x128xf32>
    %c0_4 = arith.constant 0 : index
    %c0_5 = arith.constant 0 : index
    %10 = vector.load %arg8[%c0_4, %c0_5] : memref<160x128xf32, #tpu.memory_space<vmem>>, vector<160x128xf32>
    tpu.vector_store %arg8[%c0_4, %c0_5], %9 {strides = array<i32>} : memref<160x128xf32, #tpu.memory_space<vmem>>, vector<160x128xf32>,
    %c0_i32_6 = arith.constant 0 : i32
    %11 = arith.addi %1, %c0_i32_6 : i32
    %c0_7 = arith.constant 0 : index
    %12 = arith.index_cast %11 : i32 to index
    %c8 = arith.constant 8 : index
    %c0_8 = arith.constant 0 : index
    %13 = vector.load %arg2[%c0_7, %12, %c8, %c0_8] : memref<1x20x32x128xf32, #tpu.memory_space<vmem>>, vector<1x10x16x128xf32>
    %14 = vector.shape_cast %13 : vector<1x10x16x128xf32> to vector<10x16x128xf32>
    %15 = vector.shape_cast %14 : vector<10x16x128xf32> to vector<160x128xf32>
    %c1 = arith.constant 1 : index
    %c0_9 = arith.constant 0 : index
    %c0_10 = arith.constant 0 : index
    %16 = vector.load %arg3[%c1, %c0_9, %c0_10] : memref<9x128x128xf32, #tpu.memory_space<vmem>>, vector<1x128x128xf32>
    %17 = vector.shape_cast %16 : vector<1x128x128xf32> to vector<128x128xf32>
    %cst_11 = arith.constant dense<0.000000e+00> : vector<160x128xf32>
    %18 = tpu.matmul %15, %17, %cst_11 {dimension_numbers = #tpu.dot_dimension_numbers<[1], [0], [0], [1], [0, 0, 1, 1], [], []>} : vector<160x128xf32>, vector<128x128xf32>, vector<160x128xf32> -> vector<160x128xf32>
    %c0_12 = arith.constant 0 : index
    %c0_13 = arith.constant 0 : index
    %19 = vector.load %arg8[%c0_12, %c0_13] : memref<160x128xf32, #tpu.memory_space<vmem>>, vector<160x128xf32>
    %20 = arith.addf %19, %18 : vector<160x128xf32>
    %c0_14 = arith.constant 0 : index
    %c0_15 = arith.constant 0 : index
    %21 = vector.load %arg8[%c0_14, %c0_15] : memref<160x128xf32, #tpu.memory_space<vmem>>, vector<160x128xf32>
    tpu.vector_store %arg8[%c0_14, %c0_15], %20 {strides = array<i32>} : memref<160x128xf32, #tpu.memory_space<vmem>>, vector<160x128xf32>,
    %c0_i32_16 = arith.constant 0 : i32
    %22 = arith.addi %1, %c0_i32_16 : i32
    %c0_17 = arith.constant 0 : index
    %23 = arith.index_cast %22 : i32 to index
    %c9 = arith.constant 9 : index
    %c0_18 = arith.constant 0 : index
    %24 = vector.load %arg2[%c0_17, %23, %c9, %c0_18] : memref<1x20x32x128xf32, #tpu.memory_space<vmem>>, vector<1x10x16x128xf32>
    %25 = vector.shape_cast %24 : vector<1x10x16x128xf32> to vector<10x16x128xf32>
    %26 = vector.shape_cast %25 : vector<10x16x128xf32> to vector<160x128xf32>
    %c2 = arith.constant 2 : index
    %c0_19 = arith.constant 0 : index
    %c0_20 = arith.constant 0 : index
    %27 = vector.load %arg3[%c2, %c0_19, %c0_20] : memref<9x128x128xf32, #tpu.memory_space<vmem>>, vector<1x128x128xf32>
    %28 = vector.shape_cast %27 : vector<1x128x128xf32> to vector<128x128xf32>
    %cst_21 = arith.constant dense<0.000000e+00> : vector<160x128xf32>
    %29 = tpu.matmul %26, %28, %cst_21 {dimension_numbers = #tpu.dot_dimension_numbers<[1], [0], [0], [1], [0, 0, 1, 1], [], []>} : vector<160x128xf32>, vector<128x128xf32>, vector<160x128xf32> -> vector<160x128xf32>
    %c0_22 = arith.constant 0 : index
    %c0_23 = arith.constant 0 : index
    %30 = vector.load %arg8[%c0_22, %c0_23] : memref<160x128xf32, #tpu.memory_space<vmem>>, vector<160x128xf32>
    %31 = arith.addf %30, %29 : vector<160x128xf32>
    %c0_24 = arith.constant 0 : index
    %c0_25 = arith.constant 0 : index
    %32 = vector.load %arg8[%c0_24, %c0_25] : memref<160x128xf32, #tpu.memory_space<vmem>>, vector<160x128xf32>
    tpu.vector_store %arg8[%c0_24, %c0_25], %31 {strides = array<i32>} : memref<160x128xf32, #tpu.memory_space<vmem>>, vector<160x128xf32>,
    %c1_i32 = arith.constant 1 : i32
    %33 = arith.addi %1, %c1_i32 : i32
    %c0_26 = arith.constant 0 : index
    %34 = arith.index_cast %33 : i32 to index
    %c7_27 = arith.constant 7 : index
    %c0_28 = arith.constant 0 : index
    %35 = vector.load %arg2[%c0_26, %34, %c7_27, %c0_28] : memref<1x20x32x128xf32, #tpu.memory_space<vmem>>, vector<1x10x16x128xf32>
    %36 = vector.shape_cast %35 : vector<1x10x16x128xf32> to vector<10x16x128xf32>
    %37 = vector.shape_cast %36 : vector<10x16x128xf32> to vector<160x128xf32>
    %c3 = arith.constant 3 : index
    %c0_29 = arith.constant 0 : index
    %c0_30 = arith.constant 0 : index
    %38 = vector.load %arg3[%c3, %c0_29, %c0_30] : memref<9x128x128xf32, #tpu.memory_space<vmem>>, vector<1x128x128xf32>
    %39 = vector.shape_cast %38 : vector<1x128x128xf32> to vector<128x128xf32>
    %cst_31 = arith.constant dense<0.000000e+00> : vector<160x128xf32>
    %40 = tpu.matmul %37, %39, %cst_31 {dimension_numbers = #tpu.dot_dimension_numbers<[1], [0], [0], [1], [0, 0, 1, 1], [], []>} : vector<160x128xf32>, vector<128x128xf32>, vector<160x128xf32> -> vector<160x128xf32>
    %c0_32 = arith.constant 0 : index
    %c0_33 = arith.constant 0 : index
    %41 = vector.load %arg8[%c0_32, %c0_33] : memref<160x128xf32, #tpu.memory_space<vmem>>, vector<160x128xf32>
    %42 = arith.addf %41, %40 : vector<160x128xf32>
    %c0_34 = arith.constant 0 : index
    %c0_35 = arith.constant 0 : index
    %43 = vector.load %arg8[%c0_34, %c0_35] : memref<160x128xf32, #tpu.memory_space<vmem>>, vector<160x128xf32>
    tpu.vector_store %arg8[%c0_34, %c0_35], %42 {strides = array<i32>} : memref<160x128xf32, #tpu.memory_space<vmem>>, vector<160x128xf32>,
    %c1_i32_36 = arith.constant 1 : i32
    %44 = arith.addi %1, %c1_i32_36 : i32
    %c0_37 = arith.constant 0 : index
    %45 = arith.index_cast %44 : i32 to index
    %c8_38 = arith.constant 8 : index
    %c0_39 = arith.constant 0 : index
    %46 = vector.load %arg2[%c0_37, %45, %c8_38, %c0_39] : memref<1x20x32x128xf32, #tpu.memory_space<vmem>>, vector<1x10x16x128xf32>
    %47 = vector.shape_cast %46 : vector<1x10x16x128xf32> to vector<10x16x128xf32>
    %48 = vector.shape_cast %47 : vector<10x16x128xf32> to vector<160x128xf32>
    %c4 = arith.constant 4 : index
    %c0_40 = arith.constant 0 : index
    %c0_41 = arith.constant 0 : index
    %49 = vector.load %arg3[%c4, %c0_40, %c0_41] : memref<9x128x128xf32, #tpu.memory_space<vmem>>, vector<1x128x128xf32>
    %50 = vector.shape_cast %49 : vector<1x128x128xf32> to vector<128x128xf32>
    %cst_42 = arith.constant dense<0.000000e+00> : vector<160x128xf32>
    %51 = tpu.matmul %48, %50, %cst_42 {dimension_numbers = #tpu.dot_dimension_numbers<[1], [0], [0], [1], [0, 0, 1, 1], [], []>} : vector<160x128xf32>, vector<128x128xf32>, vector<160x128xf32> -> vector<160x128xf32>
    %c0_43 = arith.constant 0 : index
    %c0_44 = arith.constant 0 : index
    %52 = vector.load %arg8[%c0_43, %c0_44] : memref<160x128xf32, #tpu.memory_space<vmem>>, vector<160x128xf32>
    %53 = arith.addf %52, %51 : vector<160x128xf32>
    %c0_45 = arith.constant 0 : index
    %c0_46 = arith.constant 0 : index
    %54 = vector.load %arg8[%c0_45, %c0_46] : memref<160x128xf32, #tpu.memory_space<vmem>>, vector<160x128xf32>
    tpu.vector_store %arg8[%c0_45, %c0_46], %53 {strides = array<i32>} : memref<160x128xf32, #tpu.memory_space<vmem>>, vector<160x128xf32>,
    %c1_i32_47 = arith.constant 1 : i32
    %55 = arith.addi %1, %c1_i32_47 : i32
    %c0_48 = arith.constant 0 : index
    %56 = arith.index_cast %55 : i32 to index
    %c9_49 = arith.constant 9 : index
    %c0_50 = arith.constant 0 : index
    %57 = vector.load %arg2[%c0_48, %56, %c9_49, %c0_50] : memref<1x20x32x128xf32, #tpu.memory_space<vmem>>, vector<1x10x16x128xf32>
    %58 = vector.shape_cast %57 : vector<1x10x16x128xf32> to vector<10x16x128xf32>
    %59 = vector.shape_cast %58 : vector<10x16x128xf32> to vector<160x128xf32>
    %c5 = arith.constant 5 : index
    %c0_51 = arith.constant 0 : index
    %c0_52 = arith.constant 0 : index
    %60 = vector.load %arg3[%c5, %c0_51, %c0_52] : memref<9x128x128xf32, #tpu.memory_space<vmem>>, vector<1x128x128xf32>
    %61 = vector.shape_cast %60 : vector<1x128x128xf32> to vector<128x128xf32>
    %cst_53 = arith.constant dense<0.000000e+00> : vector<160x128xf32>
    %62 = tpu.matmul %59, %61, %cst_53 {dimension_numbers = #tpu.dot_dimension_numbers<[1], [0], [0], [1], [0, 0, 1, 1], [], []>} : vector<160x128xf32>, vector<128x128xf32>, vector<160x128xf32> -> vector<160x128xf32>
    %c0_54 = arith.constant 0 : index
    %c0_55 = arith.constant 0 : index
    %63 = vector.load %arg8[%c0_54, %c0_55] : memref<160x128xf32, #tpu.memory_space<vmem>>, vector<160x128xf32>
    %64 = arith.addf %63, %62 : vector<160x128xf32>
    %c0_56 = arith.constant 0 : index
    %c0_57 = arith.constant 0 : index
    %65 = vector.load %arg8[%c0_56, %c0_57] : memref<160x128xf32, #tpu.memory_space<vmem>>, vector<160x128xf32>
    tpu.vector_store %arg8[%c0_56, %c0_57], %64 {strides = array<i32>} : memref<160x128xf32, #tpu.memory_space<vmem>>, vector<160x128xf32>,
    %c2_i32 = arith.constant 2 : i32
    %66 = arith.addi %1, %c2_i32 : i32
    %c0_58 = arith.constant 0 : index
    %67 = arith.index_cast %66 : i32 to index
    %c7_59 = arith.constant 7 : index
    %c0_60 = arith.constant 0 : index
    %68 = vector.load %arg2[%c0_58, %67, %c7_59, %c0_60] : memref<1x20x32x128xf32, #tpu.memory_space<vmem>>, vector<1x10x16x128xf32>
    %69 = vector.shape_cast %68 : vector<1x10x16x128xf32> to vector<10x16x128xf32>
    %70 = vector.shape_cast %69 : vector<10x16x128xf32> to vector<160x128xf32>
    %c6 = arith.constant 6 : index
    %c0_61 = arith.constant 0 : index
    %c0_62 = arith.constant 0 : index
    %71 = vector.load %arg3[%c6, %c0_61, %c0_62] : memref<9x128x128xf32, #tpu.memory_space<vmem>>, vector<1x128x128xf32>
    %72 = vector.shape_cast %71 : vector<1x128x128xf32> to vector<128x128xf32>
    %cst_63 = arith.constant dense<0.000000e+00> : vector<160x128xf32>
    %73 = tpu.matmul %70, %72, %cst_63 {dimension_numbers = #tpu.dot_dimension_numbers<[1], [0], [0], [1], [0, 0, 1, 1], [], []>} : vector<160x128xf32>, vector<128x128xf32>, vector<160x128xf32> -> vector<160x128xf32>
    %c0_64 = arith.constant 0 : index
    %c0_65 = arith.constant 0 : index
    %74 = vector.load %arg8[%c0_64, %c0_65] : memref<160x128xf32, #tpu.memory_space<vmem>>, vector<160x128xf32>
    %75 = arith.addf %74, %73 : vector<160x128xf32>
    %c0_66 = arith.constant 0 : index
    %c0_67 = arith.constant 0 : index
    %76 = vector.load %arg8[%c0_66, %c0_67] : memref<160x128xf32, #tpu.memory_space<vmem>>, vector<160x128xf32>
    tpu.vector_store %arg8[%c0_66, %c0_67], %75 {strides = array<i32>} : memref<160x128xf32, #tpu.memory_space<vmem>>, vector<160x128xf32>,
    %c2_i32_68 = arith.constant 2 : i32
    %77 = arith.addi %1, %c2_i32_68 : i32
    %c0_69 = arith.constant 0 : index
    %78 = arith.index_cast %77 : i32 to index
    %c8_70 = arith.constant 8 : index
    %c0_71 = arith.constant 0 : index
    %79 = vector.load %arg2[%c0_69, %78, %c8_70, %c0_71] : memref<1x20x32x128xf32, #tpu.memory_space<vmem>>, vector<1x10x16x128xf32>
    %80 = vector.shape_cast %79 : vector<1x10x16x128xf32> to vector<10x16x128xf32>
    %81 = vector.shape_cast %80 : vector<10x16x128xf32> to vector<160x128xf32>
    %c7_72 = arith.constant 7 : index
    %c0_73 = arith.constant 0 : index
    %c0_74 = arith.constant 0 : index
    %82 = vector.load %arg3[%c7_72, %c0_73, %c0_74] : memref<9x128x128xf32, #tpu.memory_space<vmem>>, vector<1x128x128xf32>
    %83 = vector.shape_cast %82 : vector<1x128x128xf32> to vector<128x128xf32>
    %cst_75 = arith.constant dense<0.000000e+00> : vector<160x128xf32>
    %84 = tpu.matmul %81, %83, %cst_75 {dimension_numbers = #tpu.dot_dimension_numbers<[1], [0], [0], [1], [0, 0, 1, 1], [], []>} : vector<160x128xf32>, vector<128x128xf32>, vector<160x128xf32> -> vector<160x128xf32>
    %c0_76 = arith.constant 0 : index
    %c0_77 = arith.constant 0 : index
    %85 = vector.load %arg8[%c0_76, %c0_77] : memref<160x128xf32, #tpu.memory_space<vmem>>, vector<160x128xf32>
    %86 = arith.addf %85, %84 : vector<160x128xf32>
    %c0_78 = arith.constant 0 : index
    %c0_79 = arith.constant 0 : index
    %87 = vector.load %arg8[%c0_78, %c0_79] : memref<160x128xf32, #tpu.memory_space<vmem>>, vector<160x128xf32>
    tpu.vector_store %arg8[%c0_78, %c0_79], %86 {strides = array<i32>} : memref<160x128xf32, #tpu.memory_space<vmem>>, vector<160x128xf32>,
    %c2_i32_80 = arith.constant 2 : i32
    %88 = arith.addi %1, %c2_i32_80 : i32
    %c0_81 = arith.constant 0 : index
    %89 = arith.index_cast %88 : i32 to index
    %c9_82 = arith.constant 9 : index
    %c0_83 = arith.constant 0 : index
    %90 = vector.load %arg2[%c0_81, %89, %c9_82, %c0_83] : memref<1x20x32x128xf32, #tpu.memory_space<vmem>>, vector<1x10x16x128xf32>
    %91 = vector.shape_cast %90 : vector<1x10x16x128xf32> to vector<10x16x128xf32>
    %92 = vector.shape_cast %91 : vector<10x16x128xf32> to vector<160x128xf32>
    %c8_84 = arith.constant 8 : index
    %c0_85 = arith.constant 0 : index
    %c0_86 = arith.constant 0 : index
    %93 = vector.load %arg3[%c8_84, %c0_85, %c0_86] : memref<9x128x128xf32, #tpu.memory_space<vmem>>, vector<1x128x128xf32>
    %94 = vector.shape_cast %93 : vector<1x128x128xf32> to vector<128x128xf32>
    %cst_87 = arith.constant dense<0.000000e+00> : vector<160x128xf32>
    %95 = tpu.matmul %92, %94, %cst_87 {dimension_numbers = #tpu.dot_dimension_numbers<[1], [0], [0], [1], [0, 0, 1, 1], [], []>} : vector<160x128xf32>, vector<128x128xf32>, vector<160x128xf32> -> vector<160x128xf32>
    %c0_88 = arith.constant 0 : index
    %c0_89 = arith.constant 0 : index
    %96 = vector.load %arg8[%c0_88, %c0_89] : memref<160x128xf32, #tpu.memory_space<vmem>>, vector<160x128xf32>
    %97 = arith.addf %96, %95 : vector<160x128xf32>
    %c0_90 = arith.constant 0 : index
    %c0_91 = arith.constant 0 : index
    %98 = vector.load %arg8[%c0_90, %c0_91] : memref<160x128xf32, #tpu.memory_space<vmem>>, vector<160x128xf32>
    tpu.vector_store %arg8[%c0_90, %c0_91], %97 {strides = array<i32>} : memref<160x128xf32, #tpu.memory_space<vmem>>, vector<160x128xf32>,
    %c0_92 = arith.constant 0 : index
    %c0_93 = arith.constant 0 : index
    %99 = vector.load %arg8[%c0_92, %c0_93] : memref<160x128xf32, #tpu.memory_space<vmem>>, vector<160x128xf32>
    %c0_94 = arith.constant 0 : index
    %c0_95 = arith.constant 0 : index
    %100 = vector.load %arg4[%c0_94, %c0_95] : memref<1x128xf32, #tpu.memory_space<vmem>>, vector<1x128xf32>
    %101 = vector.broadcast %100 : vector<1x128xf32> to vector<160x128xf32>
    %102 = arith.addf %99, %101 : vector<160x128xf32>
    %cst_96 = arith.constant 0.000000e+00 : f32
    %103 = vector.broadcast %cst_96 : f32 to vector<160x128xf32>
    %104 = arith.maximumf %102, %103 : vector<160x128xf32>
    %cst_97 = arith.constant 0.000000e+00 : f32
    %105 = vector.broadcast %cst_97 : f32 to vector<10x8x128xf32>
    %c0_98 = arith.constant 0 : index
    %c0_99 = arith.constant 0 : index
    %c0_100 = arith.constant 0 : index
    %106 = vector.load %arg9[%c0_98, %c0_99, %c0_100] : memref<10x32x128xf32, #tpu.memory_space<vmem>>, vector<10x8x128xf32>
    tpu.vector_store %arg9[%c0_98, %c0_99, %c0_100], %105 {strides = array<i32>} : memref<10x32x128xf32, #tpu.memory_space<vmem>>, vector<10x8x128xf32>,
    %cst_101 = arith.constant 0.000000e+00 : f32
    %107 = vector.broadcast %cst_101 : f32 to vector<10x8x128xf32>
    %c0_102 = arith.constant 0 : index
    %c24 = arith.constant 24 : index
    %c0_103 = arith.constant 0 : index
    %108 = vector.load %arg9[%c0_102, %c24, %c0_103] : memref<10x32x128xf32, #tpu.memory_space<vmem>>, vector<10x8x128xf32>
    tpu.vector_store %arg9[%c0_102, %c24, %c0_103], %107 {strides = array<i32>} : memref<10x32x128xf32, #tpu.memory_space<vmem>>, vector<10x8x128xf32>,
    %109 = vector.shape_cast %104 : vector<160x128xf32> to vector<10x16x128xf32>
    %c0_104 = arith.constant 0 : index
    %c8_105 = arith.constant 8 : index
    %c0_106 = arith.constant 0 : index
    %110 = vector.load %arg9[%c0_104, %c8_105, %c0_106] : memref<10x32x128xf32, #tpu.memory_space<vmem>>, vector<10x16x128xf32>
    tpu.vector_store %arg9[%c0_104, %c8_105, %c0_106], %109 {strides = array<i32>} : memref<10x32x128xf32, #tpu.memory_space<vmem>>, vector<10x16x128xf32>,
    %c0_i32_107 = arith.constant 0 : i32
    %111 = arith.cmpi eq, %arg1, %c0_i32_107 : i32
    %112 = arith.extui %111 : i1 to i32
    %c0_i32_108 = arith.constant 0 : i32
    %113 = arith.cmpi ne, %112, %c0_i32_108 : i32
    scf.if %113 {
      %cst_221 = arith.constant 0.000000e+00 : f32
      %202 = vector.broadcast %cst_221 : f32 to vector<1x32x128xf32>
      %c0_222 = arith.constant 0 : index
      %c0_223 = arith.constant 0 : index
      %c0_224 = arith.constant 0 : index
      %203 = vector.load %arg9[%c0_222, %c0_223, %c0_224] : memref<10x32x128xf32, #tpu.memory_space<vmem>>, vector<1x32x128xf32>
      tpu.vector_store %arg9[%c0_222, %c0_223, %c0_224], %202 {strides = array<i32>} : memref<10x32x128xf32, #tpu.memory_space<vmem>>, vector<1x32x128xf32>,
    } else {
    }
    %c1_i32_109 = arith.constant 1 : i32
    %114 = arith.cmpi eq, %arg1, %c1_i32_109 : i32
    %115 = arith.extui %114 : i1 to i32
    %c0_i32_110 = arith.constant 0 : i32
    %116 = arith.cmpi ne, %115, %c0_i32_110 : i32
    scf.if %116 {
      %cst_221 = arith.constant 0.000000e+00 : f32
      %202 = vector.broadcast %cst_221 : f32 to vector<1x32x128xf32>
      %c9_222 = arith.constant 9 : index
      %c0_223 = arith.constant 0 : index
      %c0_224 = arith.constant 0 : index
      %203 = vector.load %arg9[%c9_222, %c0_223, %c0_224] : memref<10x32x128xf32, #tpu.memory_space<vmem>>, vector<1x32x128xf32>
      tpu.vector_store %arg9[%c9_222, %c0_223, %c0_224], %202 {strides = array<i32>} : memref<10x32x128xf32, #tpu.memory_space<vmem>>, vector<1x32x128xf32>,
    } else {
    }
    %c0_111 = arith.constant 0 : index
    %c7_112 = arith.constant 7 : index
    %c0_113 = arith.constant 0 : index
    %117 = vector.load %arg9[%c0_111, %c7_112, %c0_113] : memref<10x32x128xf32, #tpu.memory_space<vmem>>, vector<8x16x128xf32>
    %118 = vector.shape_cast %117 : vector<8x16x128xf32> to vector<128x128xf32>
    %c0_114 = arith.constant 0 : index
    %c0_115 = arith.constant 0 : index
    %c0_116 = arith.constant 0 : index
    %119 = vector.load %arg5[%c0_114, %c0_115, %c0_116] : memref<9x128x128xf32, #tpu.memory_space<vmem>>, vector<1x128x128xf32>
    %120 = vector.shape_cast %119 : vector<1x128x128xf32> to vector<128x128xf32>
    %cst_117 = arith.constant dense<0.000000e+00> : vector<128x128xf32>
    %121 = tpu.matmul %118, %120, %cst_117 {dimension_numbers = #tpu.dot_dimension_numbers<[1], [0], [0], [1], [0, 0, 1, 1], [], []>} : vector<128x128xf32>, vector<128x128xf32>, vector<128x128xf32> -> vector<128x128xf32>
    %c0_118 = arith.constant 0 : index
    %c0_119 = arith.constant 0 : index
    %122 = vector.load %arg8[%c0_118, %c0_119] : memref<160x128xf32, #tpu.memory_space<vmem>>, vector<128x128xf32>
    tpu.vector_store %arg8[%c0_118, %c0_119], %121 {strides = array<i32>} : memref<160x128xf32, #tpu.memory_space<vmem>>, vector<128x128xf32>,
    %c0_120 = arith.constant 0 : index
    %c8_121 = arith.constant 8 : index
    %c0_122 = arith.constant 0 : index
    %123 = vector.load %arg9[%c0_120, %c8_121, %c0_122] : memref<10x32x128xf32, #tpu.memory_space<vmem>>, vector<8x16x128xf32>
    %124 = vector.shape_cast %123 : vector<8x16x128xf32> to vector<128x128xf32>
    %c1_123 = arith.constant 1 : index
    %c0_124 = arith.constant 0 : index
    %c0_125 = arith.constant 0 : index
    %125 = vector.load %arg5[%c1_123, %c0_124, %c0_125] : memref<9x128x128xf32, #tpu.memory_space<vmem>>, vector<1x128x128xf32>
    %126 = vector.shape_cast %125 : vector<1x128x128xf32> to vector<128x128xf32>
    %cst_126 = arith.constant dense<0.000000e+00> : vector<128x128xf32>
    %127 = tpu.matmul %124, %126, %cst_126 {dimension_numbers = #tpu.dot_dimension_numbers<[1], [0], [0], [1], [0, 0, 1, 1], [], []>} : vector<128x128xf32>, vector<128x128xf32>, vector<128x128xf32> -> vector<128x128xf32>
    %c0_127 = arith.constant 0 : index
    %c0_128 = arith.constant 0 : index
    %128 = vector.load %arg8[%c0_127, %c0_128] : memref<160x128xf32, #tpu.memory_space<vmem>>, vector<128x128xf32>
    %129 = arith.addf %128, %127 : vector<128x128xf32>
    %c0_129 = arith.constant 0 : index
    %c0_130 = arith.constant 0 : index
    %130 = vector.load %arg8[%c0_129, %c0_130] : memref<160x128xf32, #tpu.memory_space<vmem>>, vector<128x128xf32>
    tpu.vector_store %arg8[%c0_129, %c0_130], %129 {strides = array<i32>} : memref<160x128xf32, #tpu.memory_space<vmem>>, vector<128x128xf32>,
    %c0_131 = arith.constant 0 : index
    %c9_132 = arith.constant 9 : index
    %c0_133 = arith.constant 0 : index
    %131 = vector.load %arg9[%c0_131, %c9_132, %c0_133] : memref<10x32x128xf32, #tpu.memory_space<vmem>>, vector<8x16x128xf32>
    %132 = vector.shape_cast %131 : vector<8x16x128xf32> to vector<128x128xf32>
    %c2_134 = arith.constant 2 : index
    %c0_135 = arith.constant 0 : index
    %c0_136 = arith.constant 0 : index
    %133 = vector.load %arg5[%c2_134, %c0_135, %c0_136] : memref<9x128x128xf32, #tpu.memory_space<vmem>>, vector<1x128x128xf32>
    %134 = vector.shape_cast %133 : vector<1x128x128xf32> to vector<128x128xf32>
    %cst_137 = arith.constant dense<0.000000e+00> : vector<128x128xf32>
    %135 = tpu.matmul %132, %134, %cst_137 {dimension_numbers = #tpu.dot_dimension_numbers<[1], [0], [0], [1], [0, 0, 1, 1], [], []>} : vector<128x128xf32>, vector<128x128xf32>, vector<128x128xf32> -> vector<128x128xf32>
    %c0_138 = arith.constant 0 : index
    %c0_139 = arith.constant 0 : index
    %136 = vector.load %arg8[%c0_138, %c0_139] : memref<160x128xf32, #tpu.memory_space<vmem>>, vector<128x128xf32>
    %137 = arith.addf %136, %135 : vector<128x128xf32>
    %c0_140 = arith.constant 0 : index
    %c0_141 = arith.constant 0 : index
    %138 = vector.load %arg8[%c0_140, %c0_141] : memref<160x128xf32, #tpu.memory_space<vmem>>, vector<128x128xf32>
    tpu.vector_store %arg8[%c0_140, %c0_141], %137 {strides = array<i32>} : memref<160x128xf32, #tpu.memory_space<vmem>>, vector<128x128xf32>,
    %c1_142 = arith.constant 1 : index
    %c7_143 = arith.constant 7 : index
    %c0_144 = arith.constant 0 : index
    %139 = vector.load %arg9[%c1_142, %c7_143, %c0_144] : memref<10x32x128xf32, #tpu.memory_space<vmem>>, vector<8x16x128xf32>
    %140 = vector.shape_cast %139 : vector<8x16x128xf32> to vector<128x128xf32>
    %c3_145 = arith.constant 3 : index
    %c0_146 = arith.constant 0 : index
    %c0_147 = arith.constant 0 : index
    %141 = vector.load %arg5[%c3_145, %c0_146, %c0_147] : memref<9x128x128xf32, #tpu.memory_space<vmem>>, vector<1x128x128xf32>
    %142 = vector.shape_cast %141 : vector<1x128x128xf32> to vector<128x128xf32>
    %cst_148 = arith.constant dense<0.000000e+00> : vector<128x128xf32>
    %143 = tpu.matmul %140, %142, %cst_148 {dimension_numbers = #tpu.dot_dimension_numbers<[1], [0], [0], [1], [0, 0, 1, 1], [], []>} : vector<128x128xf32>, vector<128x128xf32>, vector<128x128xf32> -> vector<128x128xf32>
    %c0_149 = arith.constant 0 : index
    %c0_150 = arith.constant 0 : index
    %144 = vector.load %arg8[%c0_149, %c0_150] : memref<160x128xf32, #tpu.memory_space<vmem>>, vector<128x128xf32>
    %145 = arith.addf %144, %143 : vector<128x128xf32>
    %c0_151 = arith.constant 0 : index
    %c0_152 = arith.constant 0 : index
    %146 = vector.load %arg8[%c0_151, %c0_152] : memref<160x128xf32, #tpu.memory_space<vmem>>, vector<128x128xf32>
    tpu.vector_store %arg8[%c0_151, %c0_152], %145 {strides = array<i32>} : memref<160x128xf32, #tpu.memory_space<vmem>>, vector<128x128xf32>,
    %c1_153 = arith.constant 1 : index
    %c8_154 = arith.constant 8 : index
    %c0_155 = arith.constant 0 : index
    %147 = vector.load %arg9[%c1_153, %c8_154, %c0_155] : memref<10x32x128xf32, #tpu.memory_space<vmem>>, vector<8x16x128xf32>
    %148 = vector.shape_cast %147 : vector<8x16x128xf32> to vector<128x128xf32>
    %c4_156 = arith.constant 4 : index
    %c0_157 = arith.constant 0 : index
    %c0_158 = arith.constant 0 : index
    %149 = vector.load %arg5[%c4_156, %c0_157, %c0_158] : memref<9x128x128xf32, #tpu.memory_space<vmem>>, vector<1x128x128xf32>
    %150 = vector.shape_cast %149 : vector<1x128x128xf32> to vector<128x128xf32>
    %cst_159 = arith.constant dense<0.000000e+00> : vector<128x128xf32>
    %151 = tpu.matmul %148, %150, %cst_159 {dimension_numbers = #tpu.dot_dimension_numbers<[1], [0], [0], [1], [0, 0, 1, 1], [], []>} : vector<128x128xf32>, vector<128x128xf32>, vector<128x128xf32> -> vector<128x128xf32>
    %c0_160 = arith.constant 0 : index
    %c0_161 = arith.constant 0 : index
    %152 = vector.load %arg8[%c0_160, %c0_161] : memref<160x128xf32, #tpu.memory_space<vmem>>, vector<128x128xf32>
    %153 = arith.addf %152, %151 : vector<128x128xf32>
    %c0_162 = arith.constant 0 : index
    %c0_163 = arith.constant 0 : index
    %154 = vector.load %arg8[%c0_162, %c0_163] : memref<160x128xf32, #tpu.memory_space<vmem>>, vector<128x128xf32>
    tpu.vector_store %arg8[%c0_162, %c0_163], %153 {strides = array<i32>} : memref<160x128xf32, #tpu.memory_space<vmem>>, vector<128x128xf32>,
    %c1_164 = arith.constant 1 : index
    %c9_165 = arith.constant 9 : index
    %c0_166 = arith.constant 0 : index
    %155 = vector.load %arg9[%c1_164, %c9_165, %c0_166] : memref<10x32x128xf32, #tpu.memory_space<vmem>>, vector<8x16x128xf32>
    %156 = vector.shape_cast %155 : vector<8x16x128xf32> to vector<128x128xf32>
    %c5_167 = arith.constant 5 : index
    %c0_168 = arith.constant 0 : index
    %c0_169 = arith.constant 0 : index
    %157 = vector.load %arg5[%c5_167, %c0_168, %c0_169] : memref<9x128x128xf32, #tpu.memory_space<vmem>>, vector<1x128x128xf32>
    %158 = vector.shape_cast %157 : vector<1x128x128xf32> to vector<128x128xf32>
    %cst_170 = arith.constant dense<0.000000e+00> : vector<128x128xf32>
    %159 = tpu.matmul %156, %158, %cst_170 {dimension_numbers = #tpu.dot_dimension_numbers<[1], [0], [0], [1], [0, 0, 1, 1], [], []>} : vector<128x128xf32>, vector<128x128xf32>, vector<128x128xf32> -> vector<128x128xf32>
    %c0_171 = arith.constant 0 : index
    %c0_172 = arith.constant 0 : index
    %160 = vector.load %arg8[%c0_171, %c0_172] : memref<160x128xf32, #tpu.memory_space<vmem>>, vector<128x128xf32>
    %161 = arith.addf %160, %159 : vector<128x128xf32>
    %c0_173 = arith.constant 0 : index
    %c0_174 = arith.constant 0 : index
    %162 = vector.load %arg8[%c0_173, %c0_174] : memref<160x128xf32, #tpu.memory_space<vmem>>, vector<128x128xf32>
    tpu.vector_store %arg8[%c0_173, %c0_174], %161 {strides = array<i32>} : memref<160x128xf32, #tpu.memory_space<vmem>>, vector<128x128xf32>,
    %c2_175 = arith.constant 2 : index
    %c7_176 = arith.constant 7 : index
    %c0_177 = arith.constant 0 : index
    %163 = vector.load %arg9[%c2_175, %c7_176, %c0_177] : memref<10x32x128xf32, #tpu.memory_space<vmem>>, vector<8x16x128xf32>
    %164 = vector.shape_cast %163 : vector<8x16x128xf32> to vector<128x128xf32>
    %c6_178 = arith.constant 6 : index
    %c0_179 = arith.constant 0 : index
    %c0_180 = arith.constant 0 : index
    %165 = vector.load %arg5[%c6_178, %c0_179, %c0_180] : memref<9x128x128xf32, #tpu.memory_space<vmem>>, vector<1x128x128xf32>
    %166 = vector.shape_cast %165 : vector<1x128x128xf32> to vector<128x128xf32>
    %cst_181 = arith.constant dense<0.000000e+00> : vector<128x128xf32>
    %167 = tpu.matmul %164, %166, %cst_181 {dimension_numbers = #tpu.dot_dimension_numbers<[1], [0], [0], [1], [0, 0, 1, 1], [], []>} : vector<128x128xf32>, vector<128x128xf32>, vector<128x128xf32> -> vector<128x128xf32>
    %c0_182 = arith.constant 0 : index
    %c0_183 = arith.constant 0 : index
    %168 = vector.load %arg8[%c0_182, %c0_183] : memref<160x128xf32, #tpu.memory_space<vmem>>, vector<128x128xf32>
    %169 = arith.addf %168, %167 : vector<128x128xf32>
    %c0_184 = arith.constant 0 : index
    %c0_185 = arith.constant 0 : index
    %170 = vector.load %arg8[%c0_184, %c0_185] : memref<160x128xf32, #tpu.memory_space<vmem>>, vector<128x128xf32>
    tpu.vector_store %arg8[%c0_184, %c0_185], %169 {strides = array<i32>} : memref<160x128xf32, #tpu.memory_space<vmem>>, vector<128x128xf32>,
    %c2_186 = arith.constant 2 : index
    %c8_187 = arith.constant 8 : index
    %c0_188 = arith.constant 0 : index
    %171 = vector.load %arg9[%c2_186, %c8_187, %c0_188] : memref<10x32x128xf32, #tpu.memory_space<vmem>>, vector<8x16x128xf32>
    %172 = vector.shape_cast %171 : vector<8x16x128xf32> to vector<128x128xf32>
    %c7_189 = arith.constant 7 : index
    %c0_190 = arith.constant 0 : index
    %c0_191 = arith.constant 0 : index
    %173 = vector.load %arg5[%c7_189, %c0_190, %c0_191] : memref<9x128x128xf32, #tpu.memory_space<vmem>>, vector<1x128x128xf32>
    %174 = vector.shape_cast %173 : vector<1x128x128xf32> to vector<128x128xf32>
    %cst_192 = arith.constant dense<0.000000e+00> : vector<128x128xf32>
    %175 = tpu.matmul %172, %174, %cst_192 {dimension_numbers = #tpu.dot_dimension_numbers<[1], [0], [0], [1], [0, 0, 1, 1], [], []>} : vector<128x128xf32>, vector<128x128xf32>, vector<128x128xf32> -> vector<128x128xf32>
    %c0_193 = arith.constant 0 : index
    %c0_194 = arith.constant 0 : index
    %176 = vector.load %arg8[%c0_193, %c0_194] : memref<160x128xf32, #tpu.memory_space<vmem>>, vector<128x128xf32>
    %177 = arith.addf %176, %175 : vector<128x128xf32>
    %c0_195 = arith.constant 0 : index
    %c0_196 = arith.constant 0 : index
    %178 = vector.load %arg8[%c0_195, %c0_196] : memref<160x128xf32, #tpu.memory_space<vmem>>, vector<128x128xf32>
    tpu.vector_store %arg8[%c0_195, %c0_196], %177 {strides = array<i32>} : memref<160x128xf32, #tpu.memory_space<vmem>>, vector<128x128xf32>,
    %c2_197 = arith.constant 2 : index
    %c9_198 = arith.constant 9 : index
    %c0_199 = arith.constant 0 : index
    %179 = vector.load %arg9[%c2_197, %c9_198, %c0_199] : memref<10x32x128xf32, #tpu.memory_space<vmem>>, vector<8x16x128xf32>
    %180 = vector.shape_cast %179 : vector<8x16x128xf32> to vector<128x128xf32>
    %c8_200 = arith.constant 8 : index
    %c0_201 = arith.constant 0 : index
    %c0_202 = arith.constant 0 : index
    %181 = vector.load %arg5[%c8_200, %c0_201, %c0_202] : memref<9x128x128xf32, #tpu.memory_space<vmem>>, vector<1x128x128xf32>
    %182 = vector.shape_cast %181 : vector<1x128x128xf32> to vector<128x128xf32>
    %cst_203 = arith.constant dense<0.000000e+00> : vector<128x128xf32>
    %183 = tpu.matmul %180, %182, %cst_203 {dimension_numbers = #tpu.dot_dimension_numbers<[1], [0], [0], [1], [0, 0, 1, 1], [], []>} : vector<128x128xf32>, vector<128x128xf32>, vector<128x128xf32> -> vector<128x128xf32>
    %c0_204 = arith.constant 0 : index
    %c0_205 = arith.constant 0 : index
    %184 = vector.load %arg8[%c0_204, %c0_205] : memref<160x128xf32, #tpu.memory_space<vmem>>, vector<128x128xf32>
    %185 = arith.addf %184, %183 : vector<128x128xf32>
    %c0_206 = arith.constant 0 : index
    %c0_207 = arith.constant 0 : index
    %186 = vector.load %arg8[%c0_206, %c0_207] : memref<160x128xf32, #tpu.memory_space<vmem>>, vector<128x128xf32>
    tpu.vector_store %arg8[%c0_206, %c0_207], %185 {strides = array<i32>} : memref<160x128xf32, #tpu.memory_space<vmem>>, vector<128x128xf32>,
    %c2_i32_208 = arith.constant 2 : i32
    %187 = arith.addi %1, %c2_i32_208 : i32
    %c0_209 = arith.constant 0 : index
    %188 = arith.index_cast %187 : i32 to index
    %c8_210 = arith.constant 8 : index
    %c0_211 = arith.constant 0 : index
    %189 = vector.load %arg2[%c0_209, %188, %c8_210, %c0_211] : memref<1x20x32x128xf32, #tpu.memory_space<vmem>>, vector<1x8x16x128xf32>
    %190 = vector.shape_cast %189 : vector<1x8x16x128xf32> to vector<8x16x128xf32>
    %c0_212 = arith.constant 0 : index
    %c0_213 = arith.constant 0 : index
    %191 = vector.load %arg8[%c0_212, %c0_213] : memref<160x128xf32, #tpu.memory_space<vmem>>, vector<128x128xf32>
    %c0_214 = arith.constant 0 : index
    %c0_215 = arith.constant 0 : index
    %192 = vector.load %arg6[%c0_214, %c0_215] : memref<1x128xf32, #tpu.memory_space<vmem>>, vector<1x128xf32>
    %193 = vector.broadcast %192 : vector<1x128xf32> to vector<128x128xf32>
    %194 = arith.addf %191, %193 : vector<128x128xf32>
    %195 = vector.shape_cast %194 : vector<128x128xf32> to vector<8x16x128xf32>
    %196 = arith.addf %195, %190 : vector<8x16x128xf32>
    %cst_216 = arith.constant 0.000000e+00 : f32
    %197 = vector.broadcast %cst_216 : f32 to vector<8x16x128xf32>
    %198 = arith.maximumf %196, %197 : vector<8x16x128xf32>
    %c0_217 = arith.constant 0 : index
    %c0_218 = arith.constant 0 : index
    %c0_219 = arith.constant 0 : index
    %c0_220 = arith.constant 0 : index
    %199 = vector.load %arg7[%c0_217, %c0_218, %c0_219, %c0_220] : memref<1x8x16x128xf32, #tpu.memory_space<vmem>>, vector<1x8x16x128xf32>
    %200 = vector.shape_cast %199 : vector<1x8x16x128xf32> to vector<8x16x128xf32>
    %201 = vector.shape_cast %198 : vector<8x16x128xf32> to vector<1x8x16x128xf32>
    tpu.vector_store %arg7[%c0_217, %c0_218, %c0_219, %c0_220], %201 {strides = array<i32>} : memref<1x8x16x128xf32, #tpu.memory_space<vmem>>, vector<1x8x16x128xf32>,
    return
  }
  func.func @transform_0(%arg0: i32, %arg1: i32) -> (i32, i32, i32, i32) {
    %c0_i32 = arith.constant 0 : i32
    %c0_i32_0 = arith.constant 0 : i32
    %c0_i32_1 = arith.constant 0 : i32
    %c0_i32_2 = arith.constant 0 : i32
    return %arg0, %c0_i32, %c0_i32_0, %c0_i32_1 : i32, i32, i32, i32
  }
  func.func @transform_1(%arg0: i32, %arg1: i32) -> (i32, i32, i32) {
    %c0_i32 = arith.constant 0 : i32
    %c0_i32_0 = arith.constant 0 : i32
    %c0_i32_1 = arith.constant 0 : i32
    %c0_i32_2 = arith.constant 0 : i32
    return %c0_i32, %c0_i32_0, %c0_i32_1 : i32, i32, i32
  }
  func.func @transform_2(%arg0: i32, %arg1: i32) -> (i32, i32) {
    %c0_i32 = arith.constant 0 : i32
    %c0_i32_0 = arith.constant 0 : i32
    %c0_i32_1 = arith.constant 0 : i32
    return %c0_i32, %c0_i32_0 : i32, i32
  }
  func.func @transform_3(%arg0: i32, %arg1: i32) -> (i32, i32, i32) {
    %c0_i32 = arith.constant 0 : i32
    %c0_i32_0 = arith.constant 0 : i32
    %c0_i32_1 = arith.constant 0 : i32
    %c0_i32_2 = arith.constant 0 : i32
    return %c0_i32, %c0_i32_0, %c0_i32_1 : i32, i32, i32
  }
  func.func @transform_4(%arg0: i32, %arg1: i32) -> (i32, i32) {
    %c0_i32 = arith.constant 0 : i32
    %c0_i32_0 = arith.constant 0 : i32
    %c0_i32_1 = arith.constant 0 : i32
    return %c0_i32, %c0_i32_0 : i32, i32
  }
  func.func @transform_5(%arg0: i32, %arg1: i32) -> (i32, i32, i32, i32) {
    %c0_i32 = arith.constant 0 : i32
    %c0_i32_0 = arith.constant 0 : i32
    %c0_i32_1 = arith.constant 0 : i32
    return %arg0, %arg1, %c0_i32, %c0_i32_0 : i32, i32, i32, i32
  }
}

</mosaic_0001>

<llo_original>
// kernel: tpu_custom_call.1
$region0: #{tpu_custom_call.1}
  #allocation0 [shape = 'u32[]', space=smem, size = 0x4, offset = 0x4, fixed_abs, tag = 'smem constant byte address 0x4 - core index']
  #allocation1 [shape = 'u32[144,128]{1,0:T(1,128)}', space=vmem, size = 0x12000, scoped, tag = 'internal scratch']
  #allocation2 [shape = 'f32[160,128]{1,0:T(8,128)}', space=vmem, size = 0x14000, scoped, tag = 'scratch operand']
  #allocation3 [shape = 'f32[10,32,128]{2,1,0:T(8,128)}', space=vmem, size = 0x28000, scoped, tag = 'scratch operand']
  %s0 = inlined_call_operand.hbm [shape: f32[2,20,32,128], index: 0, kind: input, shape index: {}]
  %s1 = inlined_call_operand.hbm [shape: f32[9,128,128], index: 1, kind: input, shape index: {}]
  %s2 = inlined_call_operand.vmem [shape: f32[1,128], index: 2, kind: input, shape index: {}]
  %s3 = inlined_call_operand.hbm [shape: f32[9,128,128], index: 3, kind: input, shape index: {}]
  %s4 = inlined_call_operand.vmem [shape: f32[1,128], index: 4, kind: input, shape index: {}]
  %s5 = inlined_call_operand.hbm [shape: f32[2,16,16,128], index: 5, kind: output, shape index: {}]
  %s6 = sld [smem:[#allocation0]]
  $region73: #{tpu_custom_call.1} parent=0
    _
  %s8 = ssub.s32 1, %s6
  %s9 = scalar_select 0, %s8, %s6
  $region1: #{tpu_custom_call.1} parent=0
    #allocation4 [shape = 'u8[655360]{0}', space=vmem, size = 0xa0000, scoped, tag = 'input window, operand 0']
    #allocation5 [shape = 's32[2]{0}', space=sflag, size = 0x8, scoped, tag = 'scoped memory for tpu_custom_call.1']
    #allocation6 [shape = 's32[2]{0}', space=sflag, size = 0x8, scoped, tag = 'scoped memory for tpu_custom_call.1']
    #allocation7 [shape = 'u8[589824]{0}', space=vmem, size = 0x90000, scoped, tag = 'input window, operand 1, single buffered']
    #allocation8 [shape = 's32[1]{0}', space=sflag, size = 0x4, scoped, tag = 'scoped memory for tpu_custom_call.1']
    #allocation9 [shape = 'u8[589824]{0}', space=vmem, size = 0x90000, scoped, tag = 'input window, operand 3, single buffered']
    #allocation10 [shape = 'u8[131072]{0}', space=vmem, size = 0x20000, scoped, tag = 'output window, operand 0']
    %10 = vsyncpa [#allocation5], 0
    %s11 = scalar_lea.sflag [#allocation5], 1
    %12 = vsyncpa %s11, 0
    %13 = vsyncpa [#allocation8], 0
    %14 = vsyncpa [#allocation6], 0
    %s15 = scalar_lea.sflag [#allocation6], 1
    %16 = vsyncpa %s15, 0
    loop: start=0, step=1, limit=6
    $region2: #{tpu_custom_call.1} parent=1 // loop_pre_header
      _
    $region3: #{tpu_custom_call.1} parent=1 // loop_header
      %s18 = sphi 0, %s22
      %p19 = scmp.ge.s32.totalorder %s18, 6
      %s25 = sphi 0, %s37
      %s26 = sphi 0, %s33
      %s27 = sphi 0, %s25
      %s28 = sphi 0, %s26
      %s29 = sphi 0, %s27
      %s30 = sphi 0, %s28
      %s40 = sphi 0, %s42
      %s43 = sphi 0, %s40
      %s44 = sphi 0, %s43
      %s60 = sphi 0, %s44
      %s64 = sphi 0, %s64
      %s66 = sphi 0, %s64
      %s67 = sphi 0, %s66
      %s81 = sphi 0, %s67
      %s85 = sphi 0, %s85
      %s87 = sphi 0, %s85
      %s88 = sphi 0, %s87
      %s102 = sphi 0, %s88
      %s106 = sphi 0, %s106
      %s108 = sphi 0, %s106
      %s109 = sphi 0, %s108
      %s123 = sphi 0, %s109
      %s127 = sphi 0, %s127
      %s129 = sphi 0, %s127
      %s130 = sphi 0, %s129
      %s144 = sphi 0, %s130
      %s152 = sphi 0, %s154
      %s155 = sphi 0, %s152
      %s156 = sphi 0, %s155
      %s172 = sphi 0, %s156
    $region4: #{tpu_custom_call.1} parent=1 // loop_header_branch
      %21 = sbr.rel (%p19) target = $region8
    $region5: #{tpu_custom_call.1} parent=1 // loop_body
      %s23 = ssub.s32 %s18, 1
      %s24 = ssub.s32 %s18, 2
      %s31 = sadd.s32 1, %s26
      %p32 = scmp.ge.s32.totalorder %s31, 2
      %s33 = scalar_select %p32, 0, %s31
      %s34 = sadd.s32 1, %s25
      %s35 = scalar_select %p32, %s34, %s25
      %p36 = scmp.ge.s32.totalorder %s35, 2
      %s37 = scalar_select %p36, 0, %s35
      %s38 = ssub.s32 %s25, %s37
      %p39 = scmp.eq.s32.totalorder %s38, 0
      %s41 = sadd.s32 %s40, 1
      %s42 = scalar_select %p39, %s40, %s41
      %p45 = pneg %p39
      %p46 = scmp.eq.s32.totalorder %s18, 3
      %p47 = por %p45, %p46
      %p48 = scmp.ne.s32.totalorder %s40, %s43
      %p49 = scmp.eq.s32.totalorder %s18, 0
      %p50 = por %p48, %p49
      %p51 = scmp.ne.s32.totalorder %s40, %s43
      %p52 = scmp.eq.s32.totalorder %s23, 3
      %p53 = por %p51, %p52
      %p54 = scmp.ne.s32.totalorder %s43, %s44
      %p55 = scmp.eq.s32.totalorder %s23, 0
      %p56 = por %p54, %p55
      %p57 = scmp.ne.s32.totalorder %s43, %s44
      %p58 = scmp.eq.s32.totalorder %s24, 3
      %p59 = por %p57, %p58
      %p61 = scmp.ne.s32.totalorder %s44, %s60
      %p62 = scmp.eq.s32.totalorder %s24, 0
      %p63 = por %p61, %p62
      %s65 = sadd.s32 %s64, 1
      %p68 = scmp.eq.s32.totalorder %s18, 3
      %p69 = scmp.ne.s32.totalorder %s64, %s66
      %p70 = scmp.eq.s32.totalorder %s18, 0
      %p71 = por %p69, %p70
      %p72 = scmp.ne.s32.totalorder %s64, %s66
      %p73 = scmp.eq.s32.totalorder %s23, 3
      %p74 = por %p72, %p73
      %p75 = scmp.ne.s32.totalorder %s66, %s67
      %p76 = scmp.eq.s32.totalorder %s23, 0
      %p77 = por %p75, %p76
      %p78 = scmp.ne.s32.totalorder %s66, %s67
      %p79 = scmp.eq.s32.totalorder %s24, 3
      %p80 = por %p78, %p79
      %p82 = scmp.ne.s32.totalorder %s67, %s81
      %p83 = scmp.eq.s32.totalorder %s24, 0
      %p84 = por %p82, %p83
      %s86 = sadd.s32 %s85, 1
      %p89 = scmp.eq.s32.totalorder %s18, 3
      %p90 = scmp.ne.s32.totalorder %s85, %s87
      %p91 = scmp.eq.s32.totalorder %s18, 0
      %p92 = por %p90, %p91
      %p93 = scmp.ne.s32.totalorder %s85, %s87
      %p94 = scmp.eq.s32.totalorder %s23, 3
      %p95 = por %p93, %p94
      %p96 = scmp.ne.s32.totalorder %s87, %s88
      %p97 = scmp.eq.s32.totalorder %s23, 0
      %p98 = por %p96, %p97
      %p99 = scmp.ne.s32.totalorder %s87, %s88
      %p100 = scmp.eq.s32.totalorder %s24, 3
      %p101 = por %p99, %p100
      %p103 = scmp.ne.s32.totalorder %s88, %s102
      %p104 = scmp.eq.s32.totalorder %s24, 0
      %p105 = por %p103, %p104
      %s107 = sadd.s32 %s106, 1
      %p110 = scmp.eq.s32.totalorder %s18, 3
      %p111 = scmp.ne.s32.totalorder %s106, %s108
      %p112 = scmp.eq.s32.totalorder %s18, 0
      %p113 = por %p111, %p112
      %p114 = scmp.ne.s32.totalorder %s106, %s108
      %p115 = scmp.eq.s32.totalorder %s23, 3
      %p116 = por %p114, %p115
      %p117 = scmp.ne.s32.totalorder %s108, %s109
      %p118 = scmp.eq.s32.totalorder %s23, 0
      %p119 = por %p117, %p118
      %p120 = scmp.ne.s32.totalorder %s108, %s109
      %p121 = scmp.eq.s32.totalorder %s24, 3
      %p122 = por %p120, %p121
      %p124 = scmp.ne.s32.totalorder %s109, %s123
      %p125 = scmp.eq.s32.totalorder %s24, 0
      %p126 = por %p124, %p125
      %s128 = sadd.s32 %s127, 1
      %p131 = scmp.eq.s32.totalorder %s18, 3
      %p132 = scmp.ne.s32.totalorder %s127, %s129
      %p133 = scmp.eq.s32.totalorder %s18, 0
      %p134 = por %p132, %p133
      %p135 = scmp.ne.s32.totalorder %s127, %s129
      %p136 = scmp.eq.s32.totalorder %s23, 3
      %p137 = por %p135, %p136
      %p138 = scmp.ne.s32.totalorder %s129, %s130
      %p139 = scmp.eq.s32.totalorder %s23, 0
      %p140 = por %p138, %p139
      %p141 = scmp.ne.s32.totalorder %s129, %s130
      %p142 = scmp.eq.s32.totalorder %s24, 3
      %p143 = por %p141, %p142
      %p145 = scmp.ne.s32.totalorder %s130, %s144
      %p146 = scmp.eq.s32.totalorder %s24, 0
      %p147 = por %p145, %p146
      %s148 = ssub.s32 %s25, %s37
      %s149 = ssub.s32 %s26, %s33
      %s150 = sor.u32 %s148, %s149
      %p151 = scmp.eq.s32.totalorder %s150, 0
      %s153 = sadd.s32 %s152, 1
      %s154 = scalar_select %p151, %s152, %s153
      %p157 = pneg %p151
      %p158 = scmp.eq.s32.totalorder %s18, 3
      %p159 = por %p157, %p158
      %p160 = scmp.ne.s32.totalorder %s152, %s155
      %p161 = scmp.eq.s32.totalorder %s18, 0
      %p162 = por %p160, %p161
      %p163 = scmp.ne.s32.totalorder %s152, %s155
      %p164 = scmp.eq.s32.totalorder %s23, 3
      %p165 = por %p163, %p164
      %p166 = scmp.ne.s32.totalorder %s155, %s156
      %p167 = scmp.eq.s32.totalorder %s23, 0
      %p168 = por %p166, %p167
      %p169 = scmp.ne.s32.totalorder %s155, %s156
      %p170 = scmp.eq.s32.totalorder %s24, 3
      %p171 = por %p169, %p170
      %p173 = scmp.ne.s32.totalorder %s156, %s172
      %p174 = scmp.eq.s32.totalorder %s24, 0
      %p175 = por %p173, %p174
      %p176 = scmp.le.s32.totalorder 1, %s18
      %p177 = scmp.lt.s32.totalorder %s18, 5
      %p178 = pnand %p176, %p177
      %p179 = pneg %p178
      // Predicated region
      $region9: #{tpu_custom_call.1} parent=5 // pred_check
        _
      $region10: #{tpu_custom_call.1} parent=5 // pred_check_branch
        %181 = sbr.rel (%p178) target = $region12
      $region11: #{tpu_custom_call.1} parent=5 // pred_region
        %s182 = ssub.s32 %s18, 1
        // Predicated region
        $region13: #{tpu_custom_call.1} parent=11 // pred_check
          %p183 = pneg %p77
        $region14: #{tpu_custom_call.1} parent=11 // pred_check_branch
          %185 = sbr.rel (%p183) target = $region16
        $region15: #{tpu_custom_call.1} parent=11 // pred_region
          %s187 = ssub.s32 18432, 18432
          %188 = vsyncadd [#allocation8], %s187
          %s189 = sshll.u32 [#allocation7], 4
          %s190 = int_to_ptr.vmem [resolvable:$true] %s189
          %195 = dma.hbm_to_vmem [thread:$0]  %s1, 18432, %s190, [#allocation8], 128, 128, 8
        $region16: #{tpu_custom_call.1} parent=11 // pred_fallthru
          _
        // Predicated region
        $region17: #{tpu_custom_call.1} parent=11 // pred_check
          %p196 = pneg %p98
        $region18: #{tpu_custom_call.1} parent=11 // pred_check_branch
          %198 = sbr.rel (%p196) target = $region20
        $region19: #{tpu_custom_call.1} parent=11 // pred_region
          _
        $region20: #{tpu_custom_call.1} parent=11 // pred_fallthru
          _
        // Predicated region
        $region21: #{tpu_custom_call.1} parent=11 // pred_check
          %p199 = pneg %p119
        $region22: #{tpu_custom_call.1} parent=11 // pred_check_branch
          %201 = sbr.rel (%p199) target = $region24
        $region23: #{tpu_custom_call.1} parent=11 // pred_region
          %s203 = ssub.s32 18432, 18432
          %204 = vsyncadd [#allocation8], %s203
          %s205 = sshll.u32 [#allocation9], 4
          %s206 = int_to_ptr.vmem [resolvable:$true] %s205
          %211 = dma.hbm_to_vmem [thread:$0]  %s3, 18432, %s206, [#allocation8], 128, 128, 8
        $region24: #{tpu_custom_call.1} parent=11 // pred_fallthru
          _
        // Predicated region
        $region25: #{tpu_custom_call.1} parent=11 // pred_check
          %p212 = pneg %p140
        $region26: #{tpu_custom_call.1} parent=11 // pred_check_branch
          %214 = sbr.rel (%p212) target = $region28
        $region27: #{tpu_custom_call.1} parent=11 // pred_region
          _
        $region28: #{tpu_custom_call.1} parent=11 // pred_fallthru
          _
      $region12: #{tpu_custom_call.1} parent=5 // pred_fallthru
        _
      %p215 = scmp.lt.s32.totalorder %s18, 4
      // Predicated region
      $region29: #{tpu_custom_call.1} parent=5 // pred_check
        %p216 = pneg %p215
      $region30: #{tpu_custom_call.1} parent=5 // pred_check_branch
        %218 = sbr.rel (%p216) target = $region32
      $region31: #{tpu_custom_call.1} parent=5 // pred_region
        // Predicated region
        $region33: #{tpu_custom_call.1} parent=31 // pred_check
          %p219 = pneg %p50
        $region34: #{tpu_custom_call.1} parent=31 // pred_check_branch
          %221 = sbr.rel (%p219) target = $region36
        $region35: #{tpu_custom_call.1} parent=31 // pred_region
          %s222 = sand.u32 %s40, 1
          %s223 = scalar_lea.sflag [#allocation5], %s222
          %s224 = sand.u32 %s40, 1
          %s225 = smul.addr %s224, 640
          %s226 = scalar_lea.vmem [#allocation4], %s225
          %s228 = ssub.s32 10240, 10240
          %229 = vsyncadd %s223, %s228
          %s230 = smul.addr %s25, 80
          %s231 = smul.addr %s230, 128
          %s232 = scalar_lea.hbm %s0, %s231
          %s233 = sshll.u32 %s226, 4
          %s234 = int_to_ptr.vmem [resolvable:$true] %s233
          %239 = dma.hbm_to_vmem [thread:$0]  %s232, 10240, %s234, %s223, 128, 128, 8
        $region36: #{tpu_custom_call.1} parent=31 // pred_fallthru
          _
      $region32: #{tpu_custom_call.1} parent=5 // pred_fallthru
        _
      %p240 = scmp.le.s32.totalorder 1, %s18
      %p241 = scmp.lt.s32.totalorder %s18, 5
      %p242 = pnand %p240, %p241
      %p243 = pneg %p242
      // Predicated region
      $region37: #{tpu_custom_call.1} parent=5 // pred_check
        _
      $region38: #{tpu_custom_call.1} parent=5 // pred_check_branch
        %245 = sbr.rel (%p242) target = $region40
      $region39: #{tpu_custom_call.1} parent=5 // pred_region
        %s246 = ssub.s32 %s18, 1
        %s247 = sand.u32 %s43, 1
        %s248 = scalar_lea.sflag [#allocation5], %s247
        %s249 = sand.u32 %s43, 1
        %s250 = smul.addr %s249, 640
        %s251 = scalar_lea.vmem [#allocation4], %s250
        // Predicated region
        $region41: #{tpu_custom_call.1} parent=39 // pred_check
          %p252 = pneg %p56
        $region42: #{tpu_custom_call.1} parent=39 // pred_check_branch
          %254 = sbr.rel (%p252) target = $region44
        $region43: #{tpu_custom_call.1} parent=39 // pred_region
          %255 = dma.done %s248, 10240
        $region44: #{tpu_custom_call.1} parent=39 // pred_fallthru
          _
        // Predicated region
        $region45: #{tpu_custom_call.1} parent=39 // pred_check
          %p256 = pneg %p77
        $region46: #{tpu_custom_call.1} parent=39 // pred_check_branch
          %258 = sbr.rel (%p256) target = $region48
        $region47: #{tpu_custom_call.1} parent=39 // pred_region
          %259 = dma.done [#allocation8], 18432
        $region48: #{tpu_custom_call.1} parent=39 // pred_fallthru
          _
        // Predicated region
        $region49: #{tpu_custom_call.1} parent=39 // pred_check
          %p260 = pneg %p119
        $region50: #{tpu_custom_call.1} parent=39 // pred_check_branch
          %262 = sbr.rel (%p260) target = $region52
        $region51: #{tpu_custom_call.1} parent=39 // pred_region
          %263 = dma.done [#allocation8], 18432
        $region52: #{tpu_custom_call.1} parent=39 // pred_fallthru
          _
        %s264 = sand.u32 %s43, 1
        %s265 = scalar_lea.sflag [#allocation5], %s264
        %s266 = sand.u32 %s43, 1
        %s267 = smul.addr %s266, 640
        %s268 = scalar_lea.vmem [#allocation4], %s267
        %p269 = pneg %p56
        %p270 = pneg %p53
        %p271 = pneg %p77
        %p272 = pneg %p74
        %p273 = pneg %p98
        %p274 = pneg %p95
        %p275 = pneg %p119
        %p276 = pneg %p116
        %p277 = pneg %p140
        %p278 = pneg %p137
        %p279 = pneg %p168
        %p280 = pneg %p165
        %s281 = sand.u32 %s155, 1
        %s282 = scalar_lea.sflag [#allocation6], %s281
        %s283 = sand.u32 %s155, 1
        %s284 = smul.addr %s283, 128
        %s285 = scalar_lea.vmem [#allocation10], %s284
        %s286 = smul.u32 8, %s28
        %s287 = smul.u32 %s28, 8
        %s288 = smul.u32 %s287, 32
        %s289 = scalar_lea.vmem %s251, %s288 [#allocation4]
        %v290 = vld [vmem:[%s289 + $0x7] sm:$0xff]
        %v291 = vld [vmem:[%s289 + $0xf] sm:$0xff]
        %v292 = vld [vmem:[%s289 + $0x27] sm:$0xff]
        %v293 = vld [vmem:[%s289 + $0x2f] sm:$0xff]
        %v294 = vld [vmem:[%s289 + $0x47] sm:$0xff]
        %v295 = vld [vmem:[%s289 + $0x4f] sm:$0xff]
        %v296 = vld [vmem:[%s289 + $0x67] sm:$0xff]
        %v297 = vld [vmem:[%s289 + $0x6f] sm:$0xff]
        %v298 = vld [vmem:[%s289 + $0x87] sm:$0xff]
        %v299 = vld [vmem:[%s289 + $0x8f] sm:$0xff]
        %v300 = vld [vmem:[%s289 + $0xa7] sm:$0xff]
        %v301 = vld [vmem:[%s289 + $0xaf] sm:$0xff]
        %v302 = vld [vmem:[%s289 + $0xc7] sm:$0xff]
        %v303 = vld [vmem:[%s289 + $0xcf] sm:$0xff]
        %v304 = vld [vmem:[%s289 + $0xe7] sm:$0xff]
        %v305 = vld [vmem:[%s289 + $0xef] sm:$0xff]
        %v306 = vld [vmem:[%s289 + $0x107] sm:$0xff]
        %v307 = vld [vmem:[%s289 + $0x10f] sm:$0xff]
        %v308 = vld [vmem:[%s289 + $0x127] sm:$0xff]
        %v309 = vld [vmem:[%s289 + $0x12f] sm:$0xff]
        %v310 = vld [vmem:[#allocation7] sm:$0xff]
        %v311 = vld [vmem:[#allocation7 + $0x8] sm:$0xff]
        %v312 = vld [vmem:[#allocation7 + $0x10] sm:$0xff]
        %v313 = vld [vmem:[#allocation7 + $0x18] sm:$0xff]
        %v314 = vld [vmem:[#allocation7 + $0x20] sm:$0xff]
        %v315 = vld [vmem:[#allocation7 + $0x28] sm:$0xff]
        %v316 = vld [vmem:[#allocation7 + $0x30] sm:$0xff]
        %v317 = vld [vmem:[#allocation7 + $0x38] sm:$0xff]
        %v318 = vld [vmem:[#allocation7 + $0x40] sm:$0xff]
        %v319 = vld [vmem:[#allocation7 + $0x48] sm:$0xff]
        %v320 = vld [vmem:[#allocation7 + $0x50] sm:$0xff]
        %v321 = vld [vmem:[#allocation7 + $0x58] sm:$0xff]
        %v322 = vld [vmem:[#allocation7 + $0x60] sm:$0xff]
        %v323 = vld [vmem:[#allocation7 + $0x68] sm:$0xff]
        %v324 = vld [vmem:[#allocation7 + $0x70] sm:$0xff]
        %v325 = vld [vmem:[#allocation7 + $0x78] sm:$0xff]
        %326 = vmatprep.subr.mxu0 0.0
        %327 = vmatpush1.msra.mxu0 %v310
        %328 = vmatprep.subr.mxu0 0.0
        %329 = vmatpush1.msra.mxu0 %v311
        %330 = vmatprep.subr.mxu0 0.0
        %331 = vmatpush1.msra.mxu0 %v312
        %332 = vmatprep.subr.mxu0 0.0
        %333 = vmatpush1.msra.mxu0 %v313
        %334 = vmatprep.subr.mxu0 0.0
        %335 = vmatpush1.msra.mxu0 %v314
        %336 = vmatprep.subr.mxu0 0.0
        %337 = vmatpush1.msra.mxu0 %v315
        %338 = vmatprep.subr.mxu0 0.0
        %339 = vmatpush1.msra.mxu0 %v316
        %340 = vmatprep.subr.mxu0 0.0
        %341 = vmatpush1.msra.mxu0 %v317
        %342 = vmatprep.subr.mxu0 0.0
        %343 = vmatpush1.msra.mxu0 %v318
        %344 = vmatprep.subr.mxu0 0.0
        %345 = vmatpush1.msra.mxu0 %v319
        %346 = vmatprep.subr.mxu0 0.0
        %347 = vmatpush1.msra.mxu0 %v320
        %348 = vmatprep.subr.mxu0 0.0
        %349 = vmatpush1.msra.mxu0 %v321
        %350 = vmatprep.subr.mxu0 0.0
        %351 = vmatpush1.msra.mxu0 %v322
        %352 = vmatprep.subr.mxu0 0.0
        %353 = vmatpush1.msra.mxu0 %v323
        %354 = vmatprep.subr.mxu0 0.0
        %355 = vmatpush1.msra.mxu0 %v324
        %356 = vmatprep.subr.mxu0 0.0
        %357 = vmatpush1.msra.mxu0 %v325
        %358 = vmatprep.subr.mxu0 0.0
        %359 = vmatpush1.msra.mxu0 0.0
        %360 = vmatprep.subr.mxu0 0.0
        %361 = vmatpush1.msra.mxu0 0.0
        %362 = vmatprep.subr.mxu0 0.0
        %363 = vmatpush1.msra.mxu0 0.0
        %364 = vmatprep.subr.mxu0 0.0
        %365 = vmatpush1.msra.mxu0 0.0
        %366 = vmatprep.subr.mxu0 0.0
        %367 = vmatpush1.msra.mxu0 0.0
        %368 = vmatprep.subr.mxu0 0.0
        %369 = vmatpush1.msra.mxu0 0.0
        %370 = vmatprep.subr.mxu0 0.0
        %371 = vmatpush1.msra.mxu0 0.0
        %372 = vmatprep.subr.mxu0 0.0
        %373 = vmatpush1.msra.mxu0 0.0
        %374 = vmatprep.subr.mxu0 0.0
        %375 = vmatpush1.msra.mxu0 0.0
        %376 = vmatprep.subr.mxu0 0.0
        %377 = vmatpush1.msra.mxu0 0.0
        %378 = vmatprep.subr.mxu0 0.0
        %379 = vmatpush1.msra.mxu0 0.0
        %380 = vmatprep.subr.mxu0 0.0
        %381 = vmatpush1.msra.mxu0 0.0
        %382 = vmatprep.subr.mxu0 0.0
        %383 = vmatpush1.msra.mxu0 0.0
        %384 = vmatprep.subr.mxu0 0.0
        %385 = vmatpush1.msra.mxu0 0.0
        %386 = vmatprep.subr.mxu0 0.0
        %387 = vmatpush1.msra.mxu0 0.0
        %388 = vmatprep.subr.mxu0 0.0
        %389 = vmatpush1.msra.mxu0 0.0
        %390 = vmatprep.mubr.f32.mxu0 0.0
        %391 = vmatmul.mubr.f32.gmra.mrb[0].mxu0 %v290
        %v392 = vpop.f32.mrb[0].mxu0
        %v393 = vadd.f32 0.0, %v392
        %v394 = vpop.f32.mrb[0].mxu0
        %395 = vmatprep.mubr.f32.mxu0 0.0
        %396 = vmatmul.mubr.f32.gmra.mrb[0].mxu0 %v291
        %v397 = vpop.f32.mrb[0].mxu0
        %v398 = vadd.f32 0.0, %v397
        %v399 = vpop.f32.mrb[0].mxu0
        %400 = vmatprep.mubr.f32.mxu0 0.0
        %401 = vmatmul.mubr.f32.gmra.mrb[0].mxu0 %v292
        %v402 = vpop.f32.mrb[0].mxu0
        %v403 = vadd.f32 0.0, %v402
        %v404 = vpop.f32.mrb[0].mxu0
        %405 = vmatprep.mubr.f32.mxu0 0.0
        %406 = vmatmul.mubr.f32.gmra.mrb[0].mxu0 %v293
        %v407 = vpop.f32.mrb[0].mxu0
        %v408 = vadd.f32 0.0, %v407
        %v409 = vpop.f32.mrb[0].mxu0
        %410 = vmatprep.mubr.f32.mxu0 0.0
        %411 = vmatmul.mubr.f32.gmra.mrb[0].mxu0 %v294
        %v412 = vpop.f32.mrb[0].mxu0
        %v413 = vadd.f32 0.0, %v412
        %v414 = vpop.f32.mrb[0].mxu0
        %415 = vmatprep.mubr.f32.mxu0 0.0
        %416 = vmatmul.mubr.f32.gmra.mrb[0].mxu0 %v295
        %v417 = vpop.f32.mrb[0].mxu0
        %v418 = vadd.f32 0.0, %v417
        %v419 = vpop.f32.mrb[0].mxu0
        %420 = vmatprep.mubr.f32.mxu0 0.0
        %421 = vmatmul.mubr.f32.gmra.mrb[0].mxu0 %v296
        %v422 = vpop.f32.mrb[0].mxu0
        %v423 = vadd.f32 0.0, %v422
        %v424 = vpop.f32.mrb[0].mxu0
        %425 = vmatprep.mubr.f32.mxu0 0.0
        %426 = vmatmul.mubr.f32.gmra.mrb[0].mxu0 %v297
        %v427 = vpop.f32.mrb[0].mxu0
        %v428 = vadd.f32 0.0, %v427
        %v429 = vpop.f32.mrb[0].mxu0
        %430 = vmatprep.mubr.f32.mxu0 0.0
        %431 = vmatmul.mubr.f32.gmra.mrb[0].mxu0 %v298
        %v432 = vpop.f32.mrb[0].mxu0
        %v433 = vadd.f32 0.0, %v432
        %v434 = vpop.f32.mrb[0].mxu0
        %435 = vmatprep.mubr.f32.mxu0 0.0
        %436 = vmatmul.mubr.f32.gmra.mrb[0].mxu0 %v299
        %v437 = vpop.f32.mrb[0].mxu0
        %v438 = vadd.f32 0.0, %v437
        %v439 = vpop.f32.mrb[0].mxu0
        %440 = vmatprep.mubr.f32.mxu0 0.0
        %441 = vmatmul.mubr.f32.gmra.mrb[0].mxu0 %v300
        %v442 = vpop.f32.mrb[0].mxu0
        %v443 = vadd.f32 0.0, %v442
        %v444 = vpop.f32.mrb[0].mxu0
        %445 = vmatprep.mubr.f32.mxu0 0.0
        %446 = vmatmul.mubr.f32.gmra.mrb[0].mxu0 %v301
        %v447 = vpop.f32.mrb[0].mxu0
        %v448 = vadd.f32 0.0, %v447
        %v449 = vpop.f32.mrb[0].mxu0
        %450 = vmatprep.mubr.f32.mxu0 0.0
        %451 = vmatmul.mubr.f32.gmra.mrb[0].mxu0 %v302
        %v452 = vpop.f32.mrb[0].mxu0
        %v453 = vadd.f32 0.0, %v452
        %v454 = vpop.f32.mrb[0].mxu0
        %455 = vmatprep.mubr.f32.mxu0 0.0
        %456 = vmatmul.mubr.f32.gmra.mrb[0].mxu0 %v303
        %v457 = vpop.f32.mrb[0].mxu0
        %v458 = vadd.f32 0.0, %v457
        %v459 = vpop.f32.mrb[0].mxu0
        %460 = vmatprep.mubr.f32.mxu0 0.0
        %461 = vmatmul.mubr.f32.gmra.mrb[0].mxu0 %v304
        %v462 = vpop.f32.mrb[0].mxu0
        %v463 = vadd.f32 0.0, %v462
        %v464 = vpop.f32.mrb[0].mxu0
        %465 = vmatprep.mubr.f32.mxu0 0.0
        %466 = vmatmul.mubr.f32.gmra.mrb[0].mxu0 %v305
        %v467 = vpop.f32.mrb[0].mxu0
        %v468 = vadd.f32 0.0, %v467
        %v469 = vpop.f32.mrb[0].mxu0
        %470 = vmatprep.mubr.f32.mxu0 0.0
        %471 = vmatmul.mubr.f32.gmra.mrb[0].mxu0 %v306
        %v472 = vpop.f32.mrb[0].mxu0
        %v473 = vadd.f32 0.0, %v472
        %v474 = vpop.f32.mrb[0].mxu0
        %475 = vmatprep.mubr.f32.mxu0 0.0
        %476 = vmatmul.mubr.f32.gmra.mrb[0].mxu0 %v307
        %v477 = vpop.f32.mrb[0].mxu0
        %v478 = vadd.f32 0.0, %v477
        %v479 = vpop.f32.mrb[0].mxu0
        %480 = vmatprep.mubr.f32.mxu0 0.0
        %481 = vmatmul.mubr.f32.gmra.mrb[0].mxu0 %v308
        %v482 = vpop.f32.mrb[0].mxu0
        %v483 = vadd.f32 0.0, %v482
        %v484 = vpop.f32.mrb[0].mxu0
        %485 = vmatprep.mubr.f32.mxu0 0.0
        %486 = vmatmul.mubr.f32.gmra.mrb[0].mxu0 %v309
        %v487 = vpop.f32.mrb[0].mxu0
        %v488 = vadd.f32 0.0, %v487
        %v489 = vpop.f32.mrb[0].mxu0
        %490 = vdwg.mxu0
        %491 = vst [vmem:[#allocation2] sm:$0xff] %v393
        %492 = vst [vmem:[#allocation2 + $0x8] sm:$0xff] %v398
        %493 = vst [vmem:[#allocation2 + $0x10] sm:$0xff] %v403
        %494 = vst [vmem:[#allocation2 + $0x18] sm:$0xff] %v408
        %495 = vst [vmem:[#allocation2 + $0x20] sm:$0xff] %v413
        %496 = vst [vmem:[#allocation2 + $0x28] sm:$0xff] %v418
        %497 = vst [vmem:[#allocation2 + $0x30] sm:$0xff] %v423
        %498 = vst [vmem:[#allocation2 + $0x38] sm:$0xff] %v428
        %499 = vst [vmem:[#allocation2 + $0x40] sm:$0xff] %v433
        %500 = vst [vmem:[#allocation2 + $0x48] sm:$0xff] %v438
        %501 = vst [vmem:[#allocation2 + $0x50] sm:$0xff] %v443
        %502 = vst [vmem:[#allocation2 + $0x58] sm:$0xff] %v448
        %503 = vst [vmem:[#allocation2 + $0x60] sm:$0xff] %v453
        %504 = vst [vmem:[#allocation2 + $0x68] sm:$0xff] %v458
        %505 = vst [vmem:[#allocation2 + $0x70] sm:$0xff] %v463
        %506 = vst [vmem:[#allocation2 + $0x78] sm:$0xff] %v468
        %507 = vst [vmem:[#allocation2 + $0x80] sm:$0xff] %v473
        %508 = vst [vmem:[#allocation2 + $0x88] sm:$0xff] %v478
        %509 = vst [vmem:[#allocation2 + $0x90] sm:$0xff] %v483
        %510 = vst [vmem:[#allocation2 + $0x98] sm:$0xff] %v488
        %v511 = vld [vmem:[%s289 + $0x8] sm:$0xff]
        %v512 = vld [vmem:[%s289 + $0x10] sm:$0xff]
        %v513 = vld [vmem:[%s289 + $0x28] sm:$0xff]
        %v514 = vld [vmem:[%s289 + $0x30] sm:$0xff]
        %v515 = vld [vmem:[%s289 + $0x48] sm:$0xff]
        %v516 = vld [vmem:[%s289 + $0x50] sm:$0xff]
        %v517 = vld [vmem:[%s289 + $0x68] sm:$0xff]
        %v518 = vld [vmem:[%s289 + $0x70] sm:$0xff]
        %v519 = vld [vmem:[%s289 + $0x88] sm:$0xff]
        %v520 = vld [vmem:[%s289 + $0x90] sm:$0xff]
        %v521 = vld [vmem:[%s289 + $0xa8] sm:$0xff]
        %v522 = vld [vmem:[%s289 + $0xb0] sm:$0xff]
        %v523 = vld [vmem:[%s289 + $0xc8] sm:$0xff]
        %v524 = vld [vmem:[%s289 + $0xd0] sm:$0xff]
        %v525 = vld [vmem:[%s289 + $0xe8] sm:$0xff]
        %v526 = vld [vmem:[%s289 + $0xf0] sm:$0xff]
        %v527 = vld [vmem:[%s289 + $0x108] sm:$0xff]
        %v528 = vld [vmem:[%s289 + $0x110] sm:$0xff]
        %v529 = vld [vmem:[%s289 + $0x128] sm:$0xff]
        %v530 = vld [vmem:[%s289 + $0x130] sm:$0xff]
        %s531 = scalar_lea.vmem [#allocation7], 128
        %v532 = vld [vmem:[%s531] sm:$0xff]
        %v533 = vld [vmem:[%s531 + $0x8] sm:$0xff]
        %v534 = vld [vmem:[%s531 + $0x10] sm:$0xff]
        %v535 = vld [vmem:[%s531 + $0x18] sm:$0xff]
        %v536 = vld [vmem:[%s531 + $0x20] sm:$0xff]
        %v537 = vld [vmem:[%s531 + $0x28] sm:$0xff]
        %v538 = vld [vmem:[%s531 + $0x30] sm:$0xff]
        %v539 = vld [vmem:[%s531 + $0x38] sm:$0xff]
        %v540 = vld [vmem:[%s531 + $0x40] sm:$0xff]
        %v541 = vld [vmem:[%s531 + $0x48] sm:$0xff]
        %v542 = vld [vmem:[%s531 + $0x50] sm:$0xff]
        %v543 = vld [vmem:[%s531 + $0x58] sm:$0xff]
        %v544 = vld [vmem:[%s531 + $0x60] sm:$0xff]
        %v545 = vld [vmem:[%s531 + $0x68] sm:$0xff]
        %v546 = vld [vmem:[%s531 + $0x70] sm:$0xff]
        %v547 = vld [vmem:[%s531 + $0x78] sm:$0xff]
        %548 = vmatprep.subr.mxu0 0.0
        %549 = vmatpush1.msra.mxu0 %v532
        %550 = vmatprep.subr.mxu0 0.0
        %551 = vmatpush1.msra.mxu0 %v533
        %552 = vmatprep.subr.mxu0 0.0
        %553 = vmatpush1.msra.mxu0 %v534
        %554 = vmatprep.subr.mxu0 0.0
        %555 = vmatpush1.msra.mxu0 %v535
        %556 = vmatprep.subr.mxu0 0.0
        %557 = vmatpush1.msra.mxu0 %v536
        %558 = vmatprep.subr.mxu0 0.0
        %559 = vmatpush1.msra.mxu0 %v537
        %560 = vmatprep.subr.mxu0 0.0
        %561 = vmatpush1.msra.mxu0 %v538
        %562 = vmatprep.subr.mxu0 0.0
        %563 = vmatpush1.msra.mxu0 %v539
        %564 = vmatprep.subr.mxu0 0.0
        %565 = vmatpush1.msra.mxu0 %v540
        %566 = vmatprep.subr.mxu0 0.0
        %567 = vmatpush1.msra.mxu0 %v541
        %568 = vmatprep.subr.mxu0 0.0
        %569 = vmatpush1.msra.mxu0 %v542
        %570 = vmatprep.subr.mxu0 0.0
        %571 = vmatpush1.msra.mxu0 %v543
        %572 = vmatprep.subr.mxu0 0.0
        %573 = vmatpush1.msra.mxu0 %v544
        %574 = vmatprep.subr.mxu0 0.0
        %575 = vmatpush1.msra.mxu0 %v545
        %576 = vmatprep.subr.mxu0 0.0
        %577 = vmatpush1.msra.mxu0 %v546
        %578 = vmatprep.subr.mxu0 0.0
        %579 = vmatpush1.msra.mxu0 %v547
        %580 = vmatprep.subr.mxu0 0.0
        %581 = vmatpush1.msra.mxu0 0.0
        %582 = vmatprep.subr.mxu0 0.0
        %583 = vmatpush1.msra.mxu0 0.0
        %584 = vmatprep.subr.mxu0 0.0
        %585 = vmatpush1.msra.mxu0 0.0
        %586 = vmatprep.subr.mxu0 0.0
        %587 = vmatpush1.msra.mxu0 0.0
        %588 = vmatprep.subr.mxu0 0.0
        %589 = vmatpush1.msra.mxu0 0.0
        %590 = vmatprep.subr.mxu0 0.0
        %591 = vmatpush1.msra.mxu0 0.0
        %592 = vmatprep.subr.mxu0 0.0
        %593 = vmatpush1.msra.mxu0 0.0
        %594 = vmatprep.subr.mxu0 0.0
        %595 = vmatpush1.msra.mxu0 0.0
        %596 = vmatprep.subr.mxu0 0.0
        %597 = vmatpush1.msra.mxu0 0.0
        %598 = vmatprep.subr.mxu0 0.0
        %599 = vmatpush1.msra.mxu0 0.0
        %600 = vmatprep.subr.mxu0 0.0
        %601 = vmatpush1.msra.mxu0 0.0
        %602 = vmatprep.subr.mxu0 0.0
        %603 = vmatpush1.msra.mxu0 0.0
        %604 = vmatprep.subr.mxu0 0.0
        %605 = vmatpush1.msra.mxu0 0.0
        %606 = vmatprep.subr.mxu0 0.0
        %607 = vmatpush1.msra.mxu0 0.0
        %608 = vmatprep.subr.mxu0 0.0
        %609 = vmatpush1.msra.mxu0 0.0
        %610 = vmatprep.subr.mxu0 0.0
        %611 = vmatpush1.msra.mxu0 0.0
        %612 = vmatprep.mubr.f32.mxu0 0.0
        %613 = vmatmul.mubr.f32.gmra.mrb[0].mxu0 %v511
        %v614 = vpop.f32.mrb[0].mxu0
        %v615 = vadd.f32 0.0, %v614
        %v616 = vpop.f32.mrb[0].mxu0
        %617 = vmatprep.mubr.f32.mxu0 0.0
        %618 = vmatmul.mubr.f32.gmra.mrb[0].mxu0 %v512
        %v619 = vpop.f32.mrb[0].mxu0
        %v620 = vadd.f32 0.0, %v619
        %v621 = vpop.f32.mrb[0].mxu0
        %622 = vmatprep.mubr.f32.mxu0 0.0
        %623 = vmatmul.mubr.f32.gmra.mrb[0].mxu0 %v513
        %v624 = vpop.f32.mrb[0].mxu0
        %v625 = vadd.f32 0.0, %v624
        %v626 = vpop.f32.mrb[0].mxu0
        %627 = vmatprep.mubr.f32.mxu0 0.0
        %628 = vmatmul.mubr.f32.gmra.mrb[0].mxu0 %v514
        %v629 = vpop.f32.mrb[0].mxu0
        %v630 = vadd.f32 0.0, %v629
        %v631 = vpop.f32.mrb[0].mxu0
        %632 = vmatprep.mubr.f32.mxu0 0.0
        %633 = vmatmul.mubr.f32.gmra.mrb[0].mxu0 %v515
        %v634 = vpop.f32.mrb[0].mxu0
        %v635 = vadd.f32 0.0, %v634
        %v636 = vpop.f32.mrb[0].mxu0
        %637 = vmatprep.mubr.f32.mxu0 0.0
        %638 = vmatmul.mubr.f32.gmra.mrb[0].mxu0 %v516
        %v639 = vpop.f32.mrb[0].mxu0
        %v640 = vadd.f32 0.0, %v639
        %v641 = vpop.f32.mrb[0].mxu0
        %642 = vmatprep.mubr.f32.mxu0 0.0
        %643 = vmatmul.mubr.f32.gmra.mrb[0].mxu0 %v517
        %v644 = vpop.f32.mrb[0].mxu0
        %v645 = vadd.f32 0.0, %v644
        %v646 = vpop.f32.mrb[0].mxu0
        %647 = vmatprep.mubr.f32.mxu0 0.0
        %648 = vmatmul.mubr.f32.gmra.mrb[0].mxu0 %v518
        %v649 = vpop.f32.mrb[0].mxu0
        %v650 = vadd.f32 0.0, %v649
        %v651 = vpop.f32.mrb[0].mxu0
        %652 = vmatprep.mubr.f32.mxu0 0.0
        %653 = vmatmul.mubr.f32.gmra.mrb[0].mxu0 %v519
        %v654 = vpop.f32.mrb[0].mxu0
        %v655 = vadd.f32 0.0, %v654
        %v656 = vpop.f32.mrb[0].mxu0
        %657 = vmatprep.mubr.f32.mxu0 0.0
        %658 = vmatmul.mubr.f32.gmra.mrb[0].mxu0 %v520
        %v659 = vpop.f32.mrb[0].mxu0
        %v660 = vadd.f32 0.0, %v659
        %v661 = vpop.f32.mrb[0].mxu0
        %662 = vmatprep.mubr.f32.mxu0 0.0
        %663 = vmatmul.mubr.f32.gmra.mrb[0].mxu0 %v521
        %v664 = vpop.f32.mrb[0].mxu0
        %v665 = vadd.f32 0.0, %v664
        %v666 = vpop.f32.mrb[0].mxu0
        %667 = vmatprep.mubr.f32.mxu0 0.0
        %668 = vmatmul.mubr.f32.gmra.mrb[0].mxu0 %v522
        %v669 = vpop.f32.mrb[0].mxu0
        %v670 = vadd.f32 0.0, %v669
        %v671 = vpop.f32.mrb[0].mxu0
        %672 = vmatprep.mubr.f32.mxu0 0.0
        %673 = vmatmul.mubr.f32.gmra.mrb[0].mxu0 %v523
        %v674 = vpop.f32.mrb[0].mxu0
        %v675 = vadd.f32 0.0, %v674
        %v676 = vpop.f32.mrb[0].mxu0
        %677 = vmatprep.mubr.f32.mxu0 0.0
        %678 = vmatmul.mubr.f32.gmra.mrb[0].mxu0 %v524
        %v679 = vpop.f32.mrb[0].mxu0
        %v680 = vadd.f32 0.0, %v679
        %v681 = vpop.f32.mrb[0].mxu0
        %682 = vmatprep.mubr.f32.mxu0 0.0
        %683 = vmatmul.mubr.f32.gmra.mrb[0].mxu0 %v525
        %v684 = vpop.f32.mrb[0].mxu0
        %v685 = vadd.f32 0.0, %v684
        %v686 = vpop.f32.mrb[0].mxu0
        %687 = vmatprep.mubr.f32.mxu0 0.0
        %688 = vmatmul.mubr.f32.gmra.mrb[0].mxu0 %v526
        %v689 = vpop.f32.mrb[0].mxu0
        %v690 = vadd.f32 0.0, %v689
        %v691 = vpop.f32.mrb[0].mxu0
        %692 = vmatprep.mubr.f32.mxu0 0.0
        %693 = vmatmul.mubr.f32.gmra.mrb[0].mxu0 %v527
        %v694 = vpop.f32.mrb[0].mxu0
        %v695 = vadd.f32 0.0, %v694
        %v696 = vpop.f32.mrb[0].mxu0
        %697 = vmatprep.mubr.f32.mxu0 0.0
        %698 = vmatmul.mubr.f32.gmra.mrb[0].mxu0 %v528
        %v699 = vpop.f32.mrb[0].mxu0
        %v700 = vadd.f32 0.0, %v699
        %v701 = vpop.f32.mrb[0].mxu0
        %702 = vmatprep.mubr.f32.mxu0 0.0
        %703 = vmatmul.mubr.f32.gmra.mrb[0].mxu0 %v529
        %v704 = vpop.f32.mrb[0].mxu0
        %v705 = vadd.f32 0.0, %v704
        %v706 = vpop.f32.mrb[0].mxu0
        %707 = vmatprep.mubr.f32.mxu0 0.0
        %708 = vmatmul.mubr.f32.gmra.mrb[0].mxu0 %v530
        %v709 = vpop.f32.mrb[0].mxu0
        %v710 = vadd.f32 0.0, %v709
        %v711 = vpop.f32.mrb[0].mxu0
        %712 = vdwg.mxu0
        %v713 = vld [vmem:[#allocation2] sm:$0xff]
        %v714 = vld [vmem:[#allocation2 + $0x8] sm:$0xff]
        %v715 = vld [vmem:[#allocation2 + $0x10] sm:$0xff]
        %v716 = vld [vmem:[#allocation2 + $0x18] sm:$0xff]
        %v717 = vld [vmem:[#allocation2 + $0x20] sm:$0xff]
        %v718 = vld [vmem:[#allocation2 + $0x28] sm:$0xff]
        %v719 = vld [vmem:[#allocation2 + $0x30] sm:$0xff]
        %v720 = vld [vmem:[#allocation2 + $0x38] sm:$0xff]
        %v721 = vld [vmem:[#allocation2 + $0x40] sm:$0xff]
        %v722 = vld [vmem:[#allocation2 + $0x48] sm:$0xff]
        %v723 = vld [vmem:[#allocation2 + $0x50] sm:$0xff]
        %v724 = vld [vmem:[#allocation2 + $0x58] sm:$0xff]
        %v725 = vld [vmem:[#allocation2 + $0x60] sm:$0xff]
        %v726 = vld [vmem:[#allocation2 + $0x68] sm:$0xff]
        %v727 = vld [vmem:[#allocation2 + $0x70] sm:$0xff]
        %v728 = vld [vmem:[#allocation2 + $0x78] sm:$0xff]
        %v729 = vld [vmem:[#allocation2 + $0x80] sm:$0xff]
        %v730 = vld [vmem:[#allocation2 + $0x88] sm:$0xff]
        %v731 = vld [vmem:[#allocation2 + $0x90] sm:$0xff]
        %v732 = vld [vmem:[#allocation2 + $0x98] sm:$0xff]
        %v733 = vadd.f32 %v713, %v615
        %v734 = vadd.f32 %v714, %v620
        %v735 = vadd.f32 %v715, %v625
        %v736 = vadd.f32 %v716, %v630
        %v737 = vadd.f32 %v717, %v635
        %v738 = vadd.f32 %v718, %v640
        %v739 = vadd.f32 %v719, %v645
        %v740 = vadd.f32 %v720, %v650
        %v741 = vadd.f32 %v721, %v655
        %v742 = vadd.f32 %v722, %v660
        %v743 = vadd.f32 %v723, %v665
        %v744 = vadd.f32 %v724, %v670
        %v745 = vadd.f32 %v725, %v675
        %v746 = vadd.f32 %v726, %v680
        %v747 = vadd.f32 %v727, %v685
        %v748 = vadd.f32 %v728, %v690
        %v749 = vadd.f32 %v729, %v695
        %v750 = vadd.f32 %v730, %v700
        %v751 = vadd.f32 %v731, %v705
        %v752 = vadd.f32 %v732, %v710
        %753 = vst [vmem:[#allocation2] sm:$0xff] %v733
        %754 = vst [vmem:[#allocation2 + $0x8] sm:$0xff] %v734
        %755 = vst [vmem:[#allocation2 + $0x10] sm:$0xff] %v735
        %756 = vst [vmem:[#allocation2 + $0x18] sm:$0xff] %v736
        %757 = vst [vmem:[#allocation2 + $0x20] sm:$0xff] %v737
        %758 = vst [vmem:[#allocation2 + $0x28] sm:$0xff] %v738
        %759 = vst [vmem:[#allocation2 + $0x30] sm:$0xff] %v739
        %760 = vst [vmem:[#allocation2 + $0x38] sm:$0xff] %v740
        %761 = vst [vmem:[#allocation2 + $0x40] sm:$0xff] %v741
        %762 = vst [vmem:[#allocation2 + $0x48] sm:$0xff] %v742
        %763 = vst [vmem:[#allocation2 + $0x50] sm:$0xff] %v743
        %764 = vst [vmem:[#allocation2 + $0x58] sm:$0xff] %v744
        %765 = vst [vmem:[#allocation2 + $0x60] sm:$0xff] %v745
        %766 = vst [vmem:[#allocation2 + $0x68] sm:$0xff] %v746
        %767 = vst [vmem:[#allocation2 + $0x70] sm:$0xff] %v747
        %768 = vst [vmem:[#allocation2 + $0x78] sm:$0xff] %v748
        %769 = vst [vmem:[#allocation2 + $0x80] sm:$0xff] %v749
        %770 = vst [vmem:[#allocation2 + $0x88] sm:$0xff] %v750
        %771 = vst [vmem:[#allocation2 + $0x90] sm:$0xff] %v751
        %772 = vst [vmem:[#allocation2 + $0x98] sm:$0xff] %v752
        %v773 = vld [vmem:[%s289 + $0x9] sm:$0xff]
        %v774 = vld [vmem:[%s289 + $0x11] sm:$0xff]
        %v775 = vld [vmem:[%s289 + $0x29] sm:$0xff]
        %v776 = vld [vmem:[%s289 + $0x31] sm:$0xff]
        %v777 = vld [vmem:[%s289 + $0x49] sm:$0xff]
        %v778 = vld [vmem:[%s289 + $0x51] sm:$0xff]
        %v779 = vld [vmem:[%s289 + $0x69] sm:$0xff]
        %v780 = vld [vmem:[%s289 + $0x71] sm:$0xff]
        %v781 = vld [vmem:[%s289 + $0x89] sm:$0xff]
        %v782 = vld [vmem:[%s289 + $0x91] sm:$0xff]
        %v783 = vld [vmem:[%s289 + $0xa9] sm:$0xff]
        %v784 = vld [vmem:[%s289 + $0xb1] sm:$0xff]
        %v785 = vld [vmem:[%s289 + $0xc9] sm:$0xff]
        %v786 = vld [vmem:[%s289 + $0xd1] sm:$0xff]
        %v787 = vld [vmem:[%s289 + $0xe9] sm:$0xff]
        %v788 = vld [vmem:[%s289 + $0xf1] sm:$0xff]
        %v789 = vld [vmem:[%s289 + $0x109] sm:$0xff]
        %v790 = vld [vmem:[%s289 + $0x111] sm:$0xff]
        %v791 = vld [vmem:[%s289 + $0x129] sm:$0xff]
        %v792 = vld [vmem:[%s289 + $0x131] sm:$0xff]
        %s793 = scalar_lea.vmem [#allocation7], 256
        %v794 = vld [vmem:[%s793] sm:$0xff]
        %v795 = vld [vmem:[%s793 + $0x8] sm:$0xff]
        %v796 = vld [vmem:[%s793 + $0x10] sm:$0xff]
        %v797 = vld [vmem:[%s793 + $0x18] sm:$0xff]
        %v798 = vld [vmem:[%s793 + $0x20] sm:$0xff]
        %v799 = vld [vmem:[%s793 + $0x28] sm:$0xff]
        %v800 = vld [vmem:[%s793 + $0x30] sm:$0xff]
        %v801 = vld [vmem:[%s793 + $0x38] sm:$0xff]
        %v802 = vld [vmem:[%s793 + $0x40] sm:$0xff]
        %v803 = vld [vmem:[%s793 + $0x48] sm:$0xff]
        %v804 = vld [vmem:[%s793 + $0x50] sm:$0xff]
        %v805 = vld [vmem:[%s793 + $0x58] sm:$0xff]
        %v806 = vld [vmem:[%s793 + $0x60] sm:$0xff]
        %v807 = vld [vmem:[%s793 + $0x68] sm:$0xff]
        %v808 = vld [vmem:[%s793 + $0x70] sm:$0xff]
        %v809 = vld [vmem:[%s793 + $0x78] sm:$0xff]
        %810 = vmatprep.subr.mxu0 0.0
        %811 = vmatpush1.msra.mxu0 %v794
        %812 = vmatprep.subr.mxu0 0.0
        %813 = vmatpush1.msra.mxu0 %v795
        %814 = vmatprep.subr.mxu0 0.0
        %815 = vmatpush1.msra.mxu0 %v796
        %816 = vmatprep.subr.mxu0 0.0
        %817 = vmatpush1.msra.mxu0 %v797
        %818 = vmatprep.subr.mxu0 0.0
        %819 = vmatpush1.msra.mxu0 %v798
        %820 = vmatprep.subr.mxu0 0.0
        %821 = vmatpush1.msra.mxu0 %v799
        %822 = vmatprep.subr.mxu0 0.0
        %823 = vmatpush1.msra.mxu0 %v800
        %824 = vmatprep.subr.mxu0 0.0
        %825 = vmatpush1.msra.mxu0 %v801
        %826 = vmatprep.subr.mxu0 0.0
        %827 = vmatpush1.msra.mxu0 %v802
        %828 = vmatprep.subr.mxu0 0.0
        %829 = vmatpush1.msra.mxu0 %v803
        %830 = vmatprep.subr.mxu0 0.0
        %831 = vmatpush1.msra.mxu0 %v804
        %832 = vmatprep.subr.mxu0 0.0
        %833 = vmatpush1.msra.mxu0 %v805
        %834 = vmatprep.subr.mxu0 0.0
        %835 = vmatpush1.msra.mxu0 %v806
        %836 = vmatprep.subr.mxu0 0.0
        %837 = vmatpush1.msra.mxu0 %v807
        %838 = vmatprep.subr.mxu0 0.0
        %839 = vmatpush1.msra.mxu0 %v808
        %840 = vmatprep.subr.mxu0 0.0
        %841 = vmatpush1.msra.mxu0 %v809
        %842 = vmatprep.subr.mxu0 0.0
        %843 = vmatpush1.msra.mxu0 0.0
        %844 = vmatprep.subr.mxu0 0.0
        %845 = vmatpush1.msra.mxu0 0.0
        %846 = vmatprep.subr.mxu0 0.0
        %847 = vmatpush1.msra.mxu0 0.0
        %848 = vmatprep.subr.mxu0 0.0
        %849 = vmatpush1.msra.mxu0 0.0
        %850 = vmatprep.subr.mxu0 0.0
        %851 = vmatpush1.msra.mxu0 0.0
        %852 = vmatprep.subr.mxu0 0.0
        %853 = vmatpush1.msra.mxu0 0.0
        %854 = vmatprep.subr.mxu0 0.0
        %855 = vmatpush1.msra.mxu0 0.0
        %856 = vmatprep.subr.mxu0 0.0
        %857 = vmatpush1.msra.mxu0 0.0
        %858 = vmatprep.subr.mxu0 0.0
        %859 = vmatpush1.msra.mxu0 0.0
        %860 = vmatprep.subr.mxu0 0.0
        %861 = vmatpush1.msra.mxu0 0.0
        %862 = vmatprep.subr.mxu0 0.0
        %863 = vmatpush1.msra.mxu0 0.0
        %864 = vmatprep.subr.mxu0 0.0
        %865 = vmatpush1.msra.mxu0 0.0
        %866 = vmatprep.subr.mxu0 0.0
        %867 = vmatpush1.msra.mxu0 0.0
        %868 = vmatprep.subr.mxu0 0.0
        %869 = vmatpush1.msra.mxu0 0.0
        %870 = vmatprep.subr.mxu0 0.0
        %871 = vmatpush1.msra.mxu0 0.0
        %872 = vmatprep.subr.mxu0 0.0
        %873 = vmatpush1.msra.mxu0 0.0
        %874 = vmatprep.mubr.f32.mxu0 0.0
        %875 = vmatmul.mubr.f32.gmra.mrb[0].mxu0 %v773
        %v876 = vpop.f32.mrb[0].mxu0
        %v877 = vadd.f32 0.0, %v876
        %v878 = vpop.f32.mrb[0].mxu0
        %879 = vmatprep.mubr.f32.mxu0 0.0
        %880 = vmatmul.mubr.f32.gmra.mrb[0].mxu0 %v774
        %v881 = vpop.f32.mrb[0].mxu0
        %v882 = vadd.f32 0.0, %v881
        %v883 = vpop.f32.mrb[0].mxu0
        %884 = vmatprep.mubr.f32.mxu0 0.0
        %885 = vmatmul.mubr.f32.gmra.mrb[0].mxu0 %v775
        %v886 = vpop.f32.mrb[0].mxu0
        %v887 = vadd.f32 0.0, %v886
        %v888 = vpop.f32.mrb[0].mxu0
        %889 = vmatprep.mubr.f32.mxu0 0.0
        %890 = vmatmul.mubr.f32.gmra.mrb[0].mxu0 %v776
        %v891 = vpop.f32.mrb[0].mxu0
        %v892 = vadd.f32 0.0, %v891
        %v893 = vpop.f32.mrb[0].mxu0
        %894 = vmatprep.mubr.f32.mxu0 0.0
        %895 = vmatmul.mubr.f32.gmra.mrb[0].mxu0 %v777
        %v896 = vpop.f32.mrb[0].mxu0
        %v897 = vadd.f32 0.0, %v896
        %v898 = vpop.f32.mrb[0].mxu0
        %899 = vmatprep.mubr.f32.mxu0 0.0
        %900 = vmatmul.mubr.f32.gmra.mrb[0].mxu0 %v778
        %v901 = vpop.f32.mrb[0].mxu0
        %v902 = vadd.f32 0.0, %v901
        %v903 = vpop.f32.mrb[0].mxu0
        %904 = vmatprep.mubr.f32.mxu0 0.0
        %905 = vmatmul.mubr.f32.gmra.mrb[0].mxu0 %v779
        %v906 = vpop.f32.mrb[0].mxu0
        %v907 = vadd.f32 0.0, %v906
        %v908 = vpop.f32.mrb[0].mxu0
        %909 = vmatprep.mubr.f32.mxu0 0.0
        %910 = vmatmul.mubr.f32.gmra.mrb[0].mxu0 %v780
        %v911 = vpop.f32.mrb[0].mxu0
        %v912 = vadd.f32 0.0, %v911
        %v913 = vpop.f32.mrb[0].mxu0
        %914 = vmatprep.mubr.f32.mxu0 0.0
        %915 = vmatmul.mubr.f32.gmra.mrb[0].mxu0 %v781
        %v916 = vpop.f32.mrb[0].mxu0
        %v917 = vadd.f32 0.0, %v916
        %v918 = vpop.f32.mrb[0].mxu0
        %919 = vmatprep.mubr.f32.mxu0 0.0
        %920 = vmatmul.mubr.f32.gmra.mrb[0].mxu0 %v782
        %v921 = vpop.f32.mrb[0].mxu0
        %v922 = vadd.f32 0.0, %v921
        %v923 = vpop.f32.mrb[0].mxu0
        %924 = vmatprep.mubr.f32.mxu0 0.0
        %925 = vmatmul.mubr.f32.gmra.mrb[0].mxu0 %v783
        %v926 = vpop.f32.mrb[0].mxu0
        %v927 = vadd.f32 0.0, %v926
        %v928 = vpop.f32.mrb[0].mxu0
        %929 = vmatprep.mubr.f32.mxu0 0.0
        %930 = vmatmul.mubr.f32.gmra.mrb[0].mxu0 %v784
        %v931 = vpop.f32.mrb[0].mxu0
        %v932 = vadd.f32 0.0, %v931
        %v933 = vpop.f32.mrb[0].mxu0
        %934 = vmatprep.mubr.f32.mxu0 0.0
        %935 = vmatmul.mubr.f32.gmra.mrb[0].mxu0 %v785
        %v936 = vpop.f32.mrb[0].mxu0
        %v937 = vadd.f32 0.0, %v936
        %v938 = vpop.f32.mrb[0].mxu0
        %939 = vmatprep.mubr.f32.mxu0 0.0
        %940 = vmatmul.mubr.f32.gmra.mrb[0].mxu0 %v786
        %v941 = vpop.f32.mrb[0].mxu0
        %v942 = vadd.f32 0.0, %v941
        %v943 = vpop.f32.mrb[0].mxu0
        %944 = vmatprep.mubr.f32.mxu0 0.0
        %945 = vmatmul.mubr.f32.gmra.mrb[0].mxu0 %v787
        %v946 = vpop.f32.mrb[0].mxu0
        %v947 = vadd.f32 0.0, %v946
        %v948 = vpop.f32.mrb[0].mxu0
        %949 = vmatprep.mubr.f32.mxu0 0.0
        %950 = vmatmul.mubr.f32.gmra.mrb[0].mxu0 %v788
        %v951 = vpop.f32.mrb[0].mxu0
        %v952 = vadd.f32 0.0, %v951
        %v953 = vpop.f32.mrb[0].mxu0
        %954 = vmatprep.mubr.f32.mxu0 0.0
        %955 = vmatmul.mubr.f32.gmra.mrb[0].mxu0 %v789
        %v956 = vpop.f32.mrb[0].mxu0
        %v957 = vadd.f32 0.0, %v956
        %v958 = vpop.f32.mrb[0].mxu0
        %959 = vmatprep.mubr.f32.mxu0 0.0
        %960 = vmatmul.mubr.f32.gmra.mrb[0].mxu0 %v790
        %v961 = vpop.f32.mrb[0].mxu0
        %v962 = vadd.f32 0.0, %v961
        %v963 = vpop.f32.mrb[0].mxu0
        %964 = vmatprep.mubr.f32.mxu0 0.0
        %965 = vmatmul.mubr.f32.gmra.mrb[0].mxu0 %v791
        %v966 = vpop.f32.mrb[0].mxu0
        %v967 = vadd.f32 0.0, %v966
        %v968 = vpop.f32.mrb[0].mxu0
        %969 = vmatprep.mubr.f32.mxu0 0.0
        %970 = vmatmul.mubr.f32.gmra.mrb[0].mxu0 %v792
        %v971 = vpop.f32.mrb[0].mxu0
        %v972 = vadd.f32 0.0, %v971
        %v973 = vpop.f32.mrb[0].mxu0
        %974 = vdwg.mxu0
        %v975 = vld [vmem:[#allocation2] sm:$0xff]
        %v976 = vld [vmem:[#allocation2 + $0x8] sm:$0xff]
        %v977 = vld [vmem:[#allocation2 + $0x10] sm:$0xff]
        %v978 = vld [vmem:[#allocation2 + $0x18] sm:$0xff]
        %v979 = vld [vmem:[#allocation2 + $0x20] sm:$0xff]
        %v980 = vld [vmem:[#allocation2 + $0x28] sm:$0xff]
        %v981 = vld [vmem:[#allocation2 + $0x30] sm:$0xff]
        %v982 = vld [vmem:[#allocation2 + $0x38] sm:$0xff]
        %v983 = vld [vmem:[#allocation2 + $0x40] sm:$0xff]
        %v984 = vld [vmem:[#allocation2 + $0x48] sm:$0xff]
        %v985 = vld [vmem:[#allocation2 + $0x50] sm:$0xff]
        %v986 = vld [vmem:[#allocation2 + $0x58] sm:$0xff]
        %v987 = vld [vmem:[#allocation2 + $0x60] sm:$0xff]
        %v988 = vld [vmem:[#allocation2 + $0x68] sm:$0xff]
        %v989 = vld [vmem:[#allocation2 + $0x70] sm:$0xff]
        %v990 = vld [vmem:[#allocation2 + $0x78] sm:$0xff]
        %v991 = vld [vmem:[#allocation2 + $0x80] sm:$0xff]
        %v992 = vld [vmem:[#allocation2 + $0x88] sm:$0xff]
        %v993 = vld [vmem:[#allocation2 + $0x90] sm:$0xff]
        %v994 = vld [vmem:[#allocation2 + $0x98] sm:$0xff]
        %v995 = vadd.f32 %v975, %v877
        %v996 = vadd.f32 %v976, %v882
        %v997 = vadd.f32 %v977, %v887
        %v998 = vadd.f32 %v978, %v892
        %v999 = vadd.f32 %v979, %v897
        %v1000 = vadd.f32 %v980, %v902
        %v1001 = vadd.f32 %v981, %v907
        %v1002 = vadd.f32 %v982, %v912
        %v1003 = vadd.f32 %v983, %v917
        %v1004 = vadd.f32 %v984, %v922
        %v1005 = vadd.f32 %v985, %v927
        %v1006 = vadd.f32 %v986, %v932
        %v1007 = vadd.f32 %v987, %v937
        %v1008 = vadd.f32 %v988, %v942
        %v1009 = vadd.f32 %v989, %v947
        %v1010 = vadd.f32 %v990, %v952
        %v1011 = vadd.f32 %v991, %v957
        %v1012 = vadd.f32 %v992, %v962
        %v1013 = vadd.f32 %v993, %v967
        %v1014 = vadd.f32 %v994, %v972
        %1015 = vst [vmem:[#allocation2] sm:$0xff] %v995
        %1016 = vst [vmem:[#allocation2 + $0x8] sm:$0xff] %v996
        %1017 = vst [vmem:[#allocation2 + $0x10] sm:$0xff] %v997
        %1018 = vst [vmem:[#allocation2 + $0x18] sm:$0xff] %v998
        %1019 = vst [vmem:[#allocation2 + $0x20] sm:$0xff] %v999
        %1020 = vst [vmem:[#allocation2 + $0x28] sm:$0xff] %v1000
        %1021 = vst [vmem:[#allocation2 + $0x30] sm:$0xff] %v1001
        %1022 = vst [vmem:[#allocation2 + $0x38] sm:$0xff] %v1002
        %1023 = vst [vmem:[#allocation2 + $0x40] sm:$0xff] %v1003
        %1024 = vst [vmem:[#allocation2 + $0x48] sm:$0xff] %v1004
        %1025 = vst [vmem:[#allocation2 + $0x50] sm:$0xff] %v1005
        %1026 = vst [vmem:[#allocation2 + $0x58] sm:$0xff] %v1006
        %1027 = vst [vmem:[#allocation2 + $0x60] sm:$0xff] %v1007
        %1028 = vst [vmem:[#allocation2 + $0x68] sm:$0xff] %v1008
        %1029 = vst [vmem:[#allocation2 + $0x70] sm:$0xff] %v1009
        %1030 = vst [vmem:[#allocation2 + $0x78] sm:$0xff] %v1010
        %1031 = vst [vmem:[#allocation2 + $0x80] sm:$0xff] %v1011
        %1032 = vst [vmem:[#allocation2 + $0x88] sm:$0xff] %v1012
        %1033 = vst [vmem:[#allocation2 + $0x90] sm:$0xff] %v1013
        %1034 = vst [vmem:[#allocation2 + $0x98] sm:$0xff] %v1014
        %s1035 = sadd.s32 %s287, 1
        %s1036 = smul.u32 %s1035, 32
        %s1037 = scalar_lea.vmem %s251, %s1036 [#allocation4]
        %v1038 = vld [vmem:[%s1037 + $0x7] sm:$0xff]
        %v1039 = vld [vmem:[%s1037 + $0xf] sm:$0xff]
        %v1040 = vld [vmem:[%s1037 + $0x27] sm:$0xff]
        %v1041 = vld [vmem:[%s1037 + $0x2f] sm:$0xff]
        %v1042 = vld [vmem:[%s1037 + $0x47] sm:$0xff]
        %v1043 = vld [vmem:[%s1037 + $0x4f] sm:$0xff]
        %v1044 = vld [vmem:[%s1037 + $0x67] sm:$0xff]
        %v1045 = vld [vmem:[%s1037 + $0x6f] sm:$0xff]
        %v1046 = vld [vmem:[%s1037 + $0x87] sm:$0xff]
        %v1047 = vld [vmem:[%s1037 + $0x8f] sm:$0xff]
        %v1048 = vld [vmem:[%s1037 + $0xa7] sm:$0xff]
        %v1049 = vld [vmem:[%s1037 + $0xaf] sm:$0xff]
        %v1050 = vld [vmem:[%s1037 + $0xc7] sm:$0xff]
        %v1051 = vld [vmem:[%s1037 + $0xcf] sm:$0xff]
        %v1052 = vld [vmem:[%s1037 + $0xe7] sm:$0xff]
        %v1053 = vld [vmem:[%s1037 + $0xef] sm:$0xff]
        %v1054 = vld [vmem:[%s1037 + $0x107] sm:$0xff]
        %v1055 = vld [vmem:[%s1037 + $0x10f] sm:$0xff]
        %v1056 = vld [vmem:[%s1037 + $0x127] sm:$0xff]
        %v1057 = vld [vmem:[%s1037 + $0x12f] sm:$0xff]
        %s1058 = scalar_lea.vmem [#allocation7], 384
        %v1059 = vld [vmem:[%s1058] sm:$0xff]
        %v1060 = vld [vmem:[%s1058 + $0x8] sm:$0xff]
        %v1061 = vld [vmem:[%s1058 + $0x10] sm:$0xff]
        %v1062 = vld [vmem:[%s1058 + $0x18] sm:$0xff]
        %v1063 = vld [vmem:[%s1058 + $0x20] sm:$0xff]
        %v1064 = vld [vmem:[%s1058 + $0x28] sm:$0xff]
        %v1065 = vld [vmem:[%s1058 + $0x30] sm:$0xff]
        %v1066 = vld [vmem:[%s1058 + $0x38] sm:$0xff]
        %v1067 = vld [vmem:[%s1058 + $0x40] sm:$0xff]
        %v1068 = vld [vmem:[%s1058 + $0x48] sm:$0xff]
        %v1069 = vld [vmem:[%s1058 + $0x50] sm:$0xff]
        %v1070 = vld [vmem:[%s1058 + $0x58] sm:$0xff]
        %v1071 = vld [vmem:[%s1058 + $0x60] sm:$0xff]
        %v1072 = vld [vmem:[%s1058 + $0x68] sm:$0xff]
        %v1073 = vld [vmem:[%s1058 + $0x70] sm:$0xff]
        %v1074 = vld [vmem:[%s1058 + $0x78] sm:$0xff]
        %1075 = vmatprep.subr.mxu0 0.0
        %1076 = vmatpush1.msra.mxu0 %v1059
        %1077 = vmatprep.subr.mxu0 0.0
        %1078 = vmatpush1.msra.mxu0 %v1060
        %1079 = vmatprep.subr.mxu0 0.0
        %1080 = vmatpush1.msra.mxu0 %v1061
        %1081 = vmatprep.subr.mxu0 0.0
        %1082 = vmatpush1.msra.mxu0 %v1062
        %1083 = vmatprep.subr.mxu0 0.0
        %1084 = vmatpush1.msra.mxu0 %v1063
        %1085 = vmatprep.subr.mxu0 0.0
        %1086 = vmatpush1.msra.mxu0 %v1064
        %1087 = vmatprep.subr.mxu0 0.0
        %1088 = vmatpush1.msra.mxu0 %v1065
        %1089 = vmatprep.subr.mxu0 0.0
        %1090 = vmatpush1.msra.mxu0 %v1066
        %1091 = vmatprep.subr.mxu0 0.0
        %1092 = vmatpush1.msra.mxu0 %v1067
        %1093 = vmatprep.subr.mxu0 0.0
        %1094 = vmatpush1.msra.mxu0 %v1068
        %1095 = vmatprep.subr.mxu0 0.0
        %1096 = vmatpush1.msra.mxu0 %v1069
        %1097 = vmatprep.subr.mxu0 0.0
        %1098 = vmatpush1.msra.mxu0 %v1070
        %1099 = vmatprep.subr.mxu0 0.0
        %1100 = vmatpush1.msra.mxu0 %v1071
        %1101 = vmatprep.subr.mxu0 0.0
        %1102 = vmatpush1.msra.mxu0 %v1072
        %1103 = vmatprep.subr.mxu0 0.0
        %1104 = vmatpush1.msra.mxu0 %v1073
        %1105 = vmatprep.subr.mxu0 0.0
        %1106 = vmatpush1.msra.mxu0 %v1074
        %1107 = vmatprep.subr.mxu0 0.0
        %1108 = vmatpush1.msra.mxu0 0.0
        %1109 = vmatprep.subr.mxu0 0.0
        %1110 = vmatpush1.msra.mxu0 0.0
        %1111 = vmatprep.subr.mxu0 0.0
        %1112 = vmatpush1.msra.mxu0 0.0
        %1113 = vmatprep.subr.mxu0 0.0
        %1114 = vmatpush1.msra.mxu0 0.0
        %1115 = vmatprep.subr.mxu0 0.0
        %1116 = vmatpush1.msra.mxu0 0.0
        %1117 = vmatprep.subr.mxu0 0.0
        %1118 = vmatpush1.msra.mxu0 0.0
        %1119 = vmatprep.subr.mxu0 0.0
        %1120 = vmatpush1.msra.mxu0 0.0
        %1121 = vmatprep.subr.mxu0 0.0
        %1122 = vmatpush1.msra.mxu0 0.0
        %1123 = vmatprep.subr.mxu0 0.0
        %1124 = vmatpush1.msra.mxu0 0.0
        %1125 = vmatprep.subr.mxu0 0.0
        %1126 = vmatpush1.msra.mxu0 0.0
        %1127 = vmatprep.subr.mxu0 0.0
        %1128 = vmatpush1.msra.mxu0 0.0
        %1129 = vmatprep.subr.mxu0 0.0
        %1130 = vmatpush1.msra.mxu0 0.0
        %1131 = vmatprep.subr.mxu0 0.0
        %1132 = vmatpush1.msra.mxu0 0.0
        %1133 = vmatprep.subr.mxu0 0.0
        %1134 = vmatpush1.msra.mxu0 0.0
        %1135 = vmatprep.subr.mxu0 0.0
        %1136 = vmatpush1.msra.mxu0 0.0
        %1137 = vmatprep.subr.mxu0 0.0
        %1138 = vmatpush1.msra.mxu0 0.0
        %1139 = vmatprep.mubr.f32.mxu0 0.0
        %1140 = vmatmul.mubr.f32.gmra.mrb[0].mxu0 %v1038
        %v1141 = vpop.f32.mrb[0].mxu0
        %v1142 = vadd.f32 0.0, %v1141
        %v1143 = vpop.f32.mrb[0].mxu0
        %1144 = vmatprep.mubr.f32.mxu0 0.0
        %1145 = vmatmul.mubr.f32.gmra.mrb[0].mxu0 %v1039
        %v1146 = vpop.f32.mrb[0].mxu0
        %v1147 = vadd.f32 0.0, %v1146
        %v1148 = vpop.f32.mrb[0].mxu0
        %1149 = vmatprep.mubr.f32.mxu0 0.0
        %1150 = vmatmul.mubr.f32.gmra.mrb[0].mxu0 %v1040
        %v1151 = vpop.f32.mrb[0].mxu0
        %v1152 = vadd.f32 0.0, %v1151
        %v1153 = vpop.f32.mrb[0].mxu0
        %1154 = vmatprep.mubr.f32.mxu0 0.0
        %1155 = vmatmul.mubr.f32.gmra.mrb[0].mxu0 %v1041
        %v1156 = vpop.f32.mrb[0].mxu0
        %v1157 = vadd.f32 0.0, %v1156
        %v1158 = vpop.f32.mrb[0].mxu0
        %1159 = vmatprep.mubr.f32.mxu0 0.0
        %1160 = vmatmul.mubr.f32.gmra.mrb[0].mxu0 %v1042
        %v1161 = vpop.f32.mrb[0].mxu0
        %v1162 = vadd.f32 0.0, %v1161
        %v1163 = vpop.f32.mrb[0].mxu0
        %1164 = vmatprep.mubr.f32.mxu0 0.0
        %1165 = vmatmul.mubr.f32.gmra.mrb[0].mxu0 %v1043
        %v1166 = vpop.f32.mrb[0].mxu0
        %v1167 = vadd.f32 0.0, %v1166
        %v1168 = vpop.f32.mrb[0].mxu0
        %1169 = vmatprep.mubr.f32.mxu0 0.0
        %1170 = vmatmul.mubr.f32.gmra.mrb[0].mxu0 %v1044
        %v1171 = vpop.f32.mrb[0].mxu0
        %v1172 = vadd.f32 0.0, %v1171
        %v1173 = vpop.f32.mrb[0].mxu0
        %1174 = vmatprep.mubr.f32.mxu0 0.0
        %1175 = vmatmul.mubr.f32.gmra.mrb[0].mxu0 %v1045
        %v1176 = vpop.f32.mrb[0].mxu0
        %v1177 = vadd.f32 0.0, %v1176
        %v1178 = vpop.f32.mrb[0].mxu0
        %1179 = vmatprep.mubr.f32.mxu0 0.0
        %1180 = vmatmul.mubr.f32.gmra.mrb[0].mxu0 %v1046
        %v1181 = vpop.f32.mrb[0].mxu0
        %v1182 = vadd.f32 0.0, %v1181
        %v1183 = vpop.f32.mrb[0].mxu0
        %1184 = vmatprep.mubr.f32.mxu0 0.0
        %1185 = vmatmul.mubr.f32.gmra.mrb[0].mxu0 %v1047
        %v1186 = vpop.f32.mrb[0].mxu0
        %v1187 = vadd.f32 0.0, %v1186
        %v1188 = vpop.f32.mrb[0].mxu0
        %1189 = vmatprep.mubr.f32.mxu0 0.0
        %1190 = vmatmul.mubr.f32.gmra.mrb[0].mxu0 %v1048
        %v1191 = vpop.f32.mrb[0].mxu0
        %v1192 = vadd.f32 0.0, %v1191
        %v1193 = vpop.f32.mrb[0].mxu0
        %1194 = vmatprep.mubr.f32.mxu0 0.0
        %1195 = vmatmul.mubr.f32.gmra.mrb[0].mxu0 %v1049
        %v1196 = vpop.f32.mrb[0].mxu0
        %v1197 = vadd.f32 0.0, %v1196
        %v1198 = vpop.f32.mrb[0].mxu0
        %1199 = vmatprep.mubr.f32.mxu0 0.0
        %1200 = vmatmul.mubr.f32.gmra.mrb[0].mxu0 %v1050
        %v1201 = vpop.f32.mrb[0].mxu0
        %v1202 = vadd.f32 0.0, %v1201
        %v1203 = vpop.f32.mrb[0].mxu0
        %1204 = vmatprep.mubr.f32.mxu0 0.0
        %1205 = vmatmul.mubr.f32.gmra.mrb[0].mxu0 %v1051
        %v1206 = vpop.f32.mrb[0].mxu0
        %v1207 = vadd.f32 0.0, %v1206
        %v1208 = vpop.f32.mrb[0].mxu0
        %1209 = vmatprep.mubr.f32.mxu0 0.0
        %1210 = vmatmul.mubr.f32.gmra.mrb[0].mxu0 %v1052
        %v1211 = vpop.f32.mrb[0].mxu0
        %v1212 = vadd.f32 0.0, %v1211
        %v1213 = vpop.f32.mrb[0].mxu0
        %1214 = vmatprep.mubr.f32.mxu0 0.0
        %1215 = vmatmul.mubr.f32.gmra.mrb[0].mxu0 %v1053
        %v1216 = vpop.f32.mrb[0].mxu0
        %v1217 = vadd.f32 0.0, %v1216
        %v1218 = vpop.f32.mrb[0].mxu0
        %1219 = vmatprep.mubr.f32.mxu0 0.0
        %1220 = vmatmul.mubr.f32.gmra.mrb[0].mxu0 %v1054
        %v1221 = vpop.f32.mrb[0].mxu0
        %v1222 = vadd.f32 0.0, %v1221
        %v1223 = vpop.f32.mrb[0].mxu0
        %1224 = vmatprep.mubr.f32.mxu0 0.0
        %1225 = vmatmul.mubr.f32.gmra.mrb[0].mxu0 %v1055
        %v1226 = vpop.f32.mrb[0].mxu0
        %v1227 = vadd.f32 0.0, %v1226
        %v1228 = vpop.f32.mrb[0].mxu0
        %1229 = vmatprep.mubr.f32.mxu0 0.0
        %1230 = vmatmul.mubr.f32.gmra.mrb[0].mxu0 %v1056
        %v1231 = vpop.f32.mrb[0].mxu0
        %v1232 = vadd.f32 0.0, %v1231
        %v1233 = vpop.f32.mrb[0].mxu0
        %1234 = vmatprep.mubr.f32.mxu0 0.0
        %1235 = vmatmul.mubr.f32.gmra.mrb[0].mxu0 %v1057
        %v1236 = vpop.f32.mrb[0].mxu0
        %v1237 = vadd.f32 0.0, %v1236
        %v1238 = vpop.f32.mrb[0].mxu0
        %1239 = vdwg.mxu0
        %v1240 = vld [vmem:[#allocation2] sm:$0xff]
        %v1241 = vld [vmem:[#allocation2 + $0x8] sm:$0xff]
        %v1242 = vld [vmem:[#allocation2 + $0x10] sm:$0xff]
        %v1243 = vld [vmem:[#allocation2 + $0x18] sm:$0xff]
        %v1244 = vld [vmem:[#allocation2 + $0x20] sm:$0xff]
        %v1245 = vld [vmem:[#allocation2 + $0x28] sm:$0xff]
        %v1246 = vld [vmem:[#allocation2 + $0x30] sm:$0xff]
        %v1247 = vld [vmem:[#allocation2 + $0x38] sm:$0xff]
        %v1248 = vld [vmem:[#allocation2 + $0x40] sm:$0xff]
        %v1249 = vld [vmem:[#allocation2 + $0x48] sm:$0xff]
        %v1250 = vld [vmem:[#allocation2 + $0x50] sm:$0xff]
        %v1251 = vld [vmem:[#allocation2 + $0x58] sm:$0xff]
        %v1252 = vld [vmem:[#allocation2 + $0x60] sm:$0xff]
        %v1253 = vld [vmem:[#allocation2 + $0x68] sm:$0xff]
        %v1254 = vld [vmem:[#allocation2 + $0x70] sm:$0xff]
        %v1255 = vld [vmem:[#allocation2 + $0x78] sm:$0xff]
        %v1256 = vld [vmem:[#allocation2 + $0x80] sm:$0xff]
        %v1257 = vld [vmem:[#allocation2 + $0x88] sm:$0xff]
        %v1258 = vld [vmem:[#allocation2 + $0x90] sm:$0xff]
        %v1259 = vld [vmem:[#allocation2 + $0x98] sm:$0xff]
        %v1260 = vadd.f32 %v1240, %v1142
        %v1261 = vadd.f32 %v1241, %v1147
        %v1262 = vadd.f32 %v1242, %v1152
        %v1263 = vadd.f32 %v1243, %v1157
        %v1264 = vadd.f32 %v1244, %v1162
        %v1265 = vadd.f32 %v1245, %v1167
        %v1266 = vadd.f32 %v1246, %v1172
        %v1267 = vadd.f32 %v1247, %v1177
        %v1268 = vadd.f32 %v1248, %v1182
        %v1269 = vadd.f32 %v1249, %v1187
        %v1270 = vadd.f32 %v1250, %v1192
        %v1271 = vadd.f32 %v1251, %v1197
        %v1272 = vadd.f32 %v1252, %v1202
        %v1273 = vadd.f32 %v1253, %v1207
        %v1274 = vadd.f32 %v1254, %v1212
        %v1275 = vadd.f32 %v1255, %v1217
        %v1276 = vadd.f32 %v1256, %v1222
        %v1277 = vadd.f32 %v1257, %v1227
        %v1278 = vadd.f32 %v1258, %v1232
        %v1279 = vadd.f32 %v1259, %v1237
        %1280 = vst [vmem:[#allocation2] sm:$0xff] %v1260
        %1281 = vst [vmem:[#allocation2 + $0x8] sm:$0xff] %v1261
        %1282 = vst [vmem:[#allocation2 + $0x10] sm:$0xff] %v1262
        %1283 = vst [vmem:[#allocation2 + $0x18] sm:$0xff] %v1263
        %1284 = vst [vmem:[#allocation2 + $0x20] sm:$0xff] %v1264
        %1285 = vst [vmem:[#allocation2 + $0x28] sm:$0xff] %v1265
        %1286 = vst [vmem:[#allocation2 + $0x30] sm:$0xff] %v1266
        %1287 = vst [vmem:[#allocation2 + $0x38] sm:$0xff] %v1267
        %1288 = vst [vmem:[#allocation2 + $0x40] sm:$0xff] %v1268
        %1289 = vst [vmem:[#allocation2 + $0x48] sm:$0xff] %v1269
        %1290 = vst [vmem:[#allocation2 + $0x50] sm:$0xff] %v1270
        %1291 = vst [vmem:[#allocation2 + $0x58] sm:$0xff] %v1271
        %1292 = vst [vmem:[#allocation2 + $0x60] sm:$0xff] %v1272
        %1293 = vst [vmem:[#allocation2 + $0x68] sm:$0xff] %v1273
        %1294 = vst [vmem:[#allocation2 + $0x70] sm:$0xff] %v1274
        %1295 = vst [vmem:[#allocation2 + $0x78] sm:$0xff] %v1275
        %1296 = vst [vmem:[#allocation2 + $0x80] sm:$0xff] %v1276
        %1297 = vst [vmem:[#allocation2 + $0x88] sm:$0xff] %v1277
        %1298 = vst [vmem:[#allocation2 + $0x90] sm:$0xff] %v1278
        %1299 = vst [vmem:[#allocation2 + $0x98] sm:$0xff] %v1279
        %v1300 = vld [vmem:[%s1037 + $0x8] sm:$0xff]
        %v1301 = vld [vmem:[%s1037 + $0x10] sm:$0xff]
        %v1302 = vld [vmem:[%s1037 + $0x28] sm:$0xff]
        %v1303 = vld [vmem:[%s1037 + $0x30] sm:$0xff]
        %v1304 = vld [vmem:[%s1037 + $0x48] sm:$0xff]
        %v1305 = vld [vmem:[%s1037 + $0x50] sm:$0xff]
        %v1306 = vld [vmem:[%s1037 + $0x68] sm:$0xff]
        %v1307 = vld [vmem:[%s1037 + $0x70] sm:$0xff]
        %v1308 = vld [vmem:[%s1037 + $0x88] sm:$0xff]
        %v1309 = vld [vmem:[%s1037 + $0x90] sm:$0xff]
        %v1310 = vld [vmem:[%s1037 + $0xa8] sm:$0xff]
        %v1311 = vld [vmem:[%s1037 + $0xb0] sm:$0xff]
        %v1312 = vld [vmem:[%s1037 + $0xc8] sm:$0xff]
        %v1313 = vld [vmem:[%s1037 + $0xd0] sm:$0xff]
        %v1314 = vld [vmem:[%s1037 + $0xe8] sm:$0xff]
        %v1315 = vld [vmem:[%s1037 + $0xf0] sm:$0xff]
        %v1316 = vld [vmem:[%s1037 + $0x108] sm:$0xff]
        %v1317 = vld [vmem:[%s1037 + $0x110] sm:$0xff]
        %v1318 = vld [vmem:[%s1037 + $0x128] sm:$0xff]
        %v1319 = vld [vmem:[%s1037 + $0x130] sm:$0xff]
        %s1320 = scalar_lea.vmem [#allocation7], 512
        %v1321 = vld [vmem:[%s1320] sm:$0xff]
        %v1322 = vld [vmem:[%s1320 + $0x8] sm:$0xff]
        %v1323 = vld [vmem:[%s1320 + $0x10] sm:$0xff]
        %v1324 = vld [vmem:[%s1320 + $0x18] sm:$0xff]
        %v1325 = vld [vmem:[%s1320 + $0x20] sm:$0xff]
        %v1326 = vld [vmem:[%s1320 + $0x28] sm:$0xff]
        %v1327 = vld [vmem:[%s1320 + $0x30] sm:$0xff]
        %v1328 = vld [vmem:[%s1320 + $0x38] sm:$0xff]
        %v1329 = vld [vmem:[%s1320 + $0x40] sm:$0xff]
        %v1330 = vld [vmem:[%s1320 + $0x48] sm:$0xff]
        %v1331 = vld [vmem:[%s1320 + $0x50] sm:$0xff]
        %v1332 = vld [vmem:[%s1320 + $0x58] sm:$0xff]
        %v1333 = vld [vmem:[%s1320 + $0x60] sm:$0xff]
        %v1334 = vld [vmem:[%s1320 + $0x68] sm:$0xff]
        %v1335 = vld [vmem:[%s1320 + $0x70] sm:$0xff]
        %v1336 = vld [vmem:[%s1320 + $0x78] sm:$0xff]
        %1337 = vmatprep.subr.mxu0 0.0
        %1338 = vmatpush1.msra.mxu0 %v1321
        %1339 = vmatprep.subr.mxu0 0.0
        %1340 = vmatpush1.msra.mxu0 %v1322
        %1341 = vmatprep.subr.mxu0 0.0
        %1342 = vmatpush1.msra.mxu0 %v1323
        %1343 = vmatprep.subr.mxu0 0.0
        %1344 = vmatpush1.msra.mxu0 %v1324
        %1345 = vmatprep.subr.mxu0 0.0
        %1346 = vmatpush1.msra.mxu0 %v1325
        %1347 = vmatprep.subr.mxu0 0.0
        %1348 = vmatpush1.msra.mxu0 %v1326
        %1349 = vmatprep.subr.mxu0 0.0
        %1350 = vmatpush1.msra.mxu0 %v1327
        %1351 = vmatprep.subr.mxu0 0.0
        %1352 = vmatpush1.msra.mxu0 %v1328
        %1353 = vmatprep.subr.mxu0 0.0
        %1354 = vmatpush1.msra.mxu0 %v1329
        %1355 = vmatprep.subr.mxu0 0.0
        %1356 = vmatpush1.msra.mxu0 %v1330
        %1357 = vmatprep.subr.mxu0 0.0
        %1358 = vmatpush1.msra.mxu0 %v1331
        %1359 = vmatprep.subr.mxu0 0.0
        %1360 = vmatpush1.msra.mxu0 %v1332
        %1361 = vmatprep.subr.mxu0 0.0
        %1362 = vmatpush1.msra.mxu0 %v1333
        %1363 = vmatprep.subr.mxu0 0.0
        %1364 = vmatpush1.msra.mxu0 %v1334
        %1365 = vmatprep.subr.mxu0 0.0
        %1366 = vmatpush1.msra.mxu0 %v1335
        %1367 = vmatprep.subr.mxu0 0.0
        %1368 = vmatpush1.msra.mxu0 %v1336
        %1369 = vmatprep.subr.mxu0 0.0
        %1370 = vmatpush1.msra.mxu0 0.0
        %1371 = vmatprep.subr.mxu0 0.0
        %1372 = vmatpush1.msra.mxu0 0.0
        %1373 = vmatprep.subr.mxu0 0.0
        %1374 = vmatpush1.msra.mxu0 0.0
        %1375 = vmatprep.subr.mxu0 0.0
        %1376 = vmatpush1.msra.mxu0 0.0
        %1377 = vmatprep.subr.mxu0 0.0
        %1378 = vmatpush1.msra.mxu0 0.0
        %1379 = vmatprep.subr.mxu0 0.0
        %1380 = vmatpush1.msra.mxu0 0.0
        %1381 = vmatprep.subr.mxu0 0.0
        %1382 = vmatpush1.msra.mxu0 0.0
        %1383 = vmatprep.subr.mxu0 0.0
        %1384 = vmatpush1.msra.mxu0 0.0
        %1385 = vmatprep.subr.mxu0 0.0
        %1386 = vmatpush1.msra.mxu0 0.0
        %1387 = vmatprep.subr.mxu0 0.0
        %1388 = vmatpush1.msra.mxu0 0.0
        %1389 = vmatprep.subr.mxu0 0.0
        %1390 = vmatpush1.msra.mxu0 0.0
        %1391 = vmatprep.subr.mxu0 0.0
        %1392 = vmatpush1.msra.mxu0 0.0
        %1393 = vmatprep.subr.mxu0 0.0
        %1394 = vmatpush1.msra.mxu0 0.0
        %1395 = vmatprep.subr.mxu0 0.0
        %1396 = vmatpush1.msra.mxu0 0.0
        %1397 = vmatprep.subr.mxu0 0.0
        %1398 = vmatpush1.msra.mxu0 0.0
        %1399 = vmatprep.subr.mxu0 0.0
        %1400 = vmatpush1.msra.mxu0 0.0
        %1401 = vmatprep.mubr.f32.mxu0 0.0
        %1402 = vmatmul.mubr.f32.gmra.mrb[0].mxu0 %v1300
        %v1403 = vpop.f32.mrb[0].mxu0
        %v1404 = vadd.f32 0.0, %v1403
        %v1405 = vpop.f32.mrb[0].mxu0
        %1406 = vmatprep.mubr.f32.mxu0 0.0
        %1407 = vmatmul.mubr.f32.gmra.mrb[0].mxu0 %v1301
        %v1408 = vpop.f32.mrb[0].mxu0
        %v1409 = vadd.f32 0.0, %v1408
        %v1410 = vpop.f32.mrb[0].mxu0
        %1411 = vmatprep.mubr.f32.mxu0 0.0
        %1412 = vmatmul.mubr.f32.gmra.mrb[0].mxu0 %v1302
        %v1413 = vpop.f32.mrb[0].mxu0
        %v1414 = vadd.f32 0.0, %v1413
        %v1415 = vpop.f32.mrb[0].mxu0
        %1416 = vmatprep.mubr.f32.mxu0 0.0
        %1417 = vmatmul.mubr.f32.gmra.mrb[0].mxu0 %v1303
        %v1418 = vpop.f32.mrb[0].mxu0
        %v1419 = vadd.f32 0.0, %v1418
        %v1420 = vpop.f32.mrb[0].mxu0
        %1421 = vmatprep.mubr.f32.mxu0 0.0
        %1422 = vmatmul.mubr.f32.gmra.mrb[0].mxu0 %v1304
        %v1423 = vpop.f32.mrb[0].mxu0
        %v1424 = vadd.f32 0.0, %v1423
        %v1425 = vpop.f32.mrb[0].mxu0
        %1426 = vmatprep.mubr.f32.mxu0 0.0
        %1427 = vmatmul.mubr.f32.gmra.mrb[0].mxu0 %v1305
        %v1428 = vpop.f32.mrb[0].mxu0
        %v1429 = vadd.f32 0.0, %v1428
        %v1430 = vpop.f32.mrb[0].mxu0
        %1431 = vmatprep.mubr.f32.mxu0 0.0
        %1432 = vmatmul.mubr.f32.gmra.mrb[0].mxu0 %v1306
        %v1433 = vpop.f32.mrb[0].mxu0
        %v1434 = vadd.f32 0.0, %v1433
        %v1435 = vpop.f32.mrb[0].mxu0
        %1436 = vmatprep.mubr.f32.mxu0 0.0
        %1437 = vmatmul.mubr.f32.gmra.mrb[0].mxu0 %v1307
        %v1438 = vpop.f32.mrb[0].mxu0
        %v1439 = vadd.f32 0.0, %v1438
        %v1440 = vpop.f32.mrb[0].mxu0
        %1441 = vmatprep.mubr.f32.mxu0 0.0
        %1442 = vmatmul.mubr.f32.gmra.mrb[0].mxu0 %v1308
        %v1443 = vpop.f32.mrb[0].mxu0
        %v1444 = vadd.f32 0.0, %v1443
        %v1445 = vpop.f32.mrb[0].mxu0
        %1446 = vmatprep.mubr.f32.mxu0 0.0
        %1447 = vmatmul.mubr.f32.gmra.mrb[0].mxu0 %v1309
        %v1448 = vpop.f32.mrb[0].mxu0
        %v1449 = vadd.f32 0.0, %v1448
        %v1450 = vpop.f32.mrb[0].mxu0
        %1451 = vmatprep.mubr.f32.mxu0 0.0
        %1452 = vmatmul.mubr.f32.gmra.mrb[0].mxu0 %v1310
        %v1453 = vpop.f32.mrb[0].mxu0
        %v1454 = vadd.f32 0.0, %v1453
        %v1455 = vpop.f32.mrb[0].mxu0
        %1456 = vmatprep.mubr.f32.mxu0 0.0
        %1457 = vmatmul.mubr.f32.gmra.mrb[0].mxu0 %v1311
        %v1458 = vpop.f32.mrb[0].mxu0
        %v1459 = vadd.f32 0.0, %v1458
        %v1460 = vpop.f32.mrb[0].mxu0
        %1461 = vmatprep.mubr.f32.mxu0 0.0
        %1462 = vmatmul.mubr.f32.gmra.mrb[0].mxu0 %v1312
        %v1463 = vpop.f32.mrb[0].mxu0
        %v1464 = vadd.f32 0.0, %v1463
        %v1465 = vpop.f32.mrb[0].mxu0
        %1466 = vmatprep.mubr.f32.mxu0 0.0
        %1467 = vmatmul.mubr.f32.gmra.mrb[0].mxu0 %v1313
        %v1468 = vpop.f32.mrb[0].mxu0
        %v1469 = vadd.f32 0.0, %v1468
        %v1470 = vpop.f32.mrb[0].mxu0
        %1471 = vmatprep.mubr.f32.mxu0 0.0
        %1472 = vmatmul.mubr.f32.gmra.mrb[0].mxu0 %v1314
        %v1473 = vpop.f32.mrb[0].mxu0
        %v1474 = vadd.f32 0.0, %v1473
        %v1475 = vpop.f32.mrb[0].mxu0
        %1476 = vmatprep.mubr.f32.mxu0 0.0
        %1477 = vmatmul.mubr.f32.gmra.mrb[0].mxu0 %v1315
        %v1478 = vpop.f32.mrb[0].mxu0
        %v1479 = vadd.f32 0.0, %v1478
        %v1480 = vpop.f32.mrb[0].mxu0
        %1481 = vmatprep.mubr.f32.mxu0 0.0
        %1482 = vmatmul.mubr.f32.gmra.mrb[0].mxu0 %v1316
        %v1483 = vpop.f32.mrb[0].mxu0
        %v1484 = vadd.f32 0.0, %v1483
        %v1485 = vpop.f32.mrb[0].mxu0
        %1486 = vmatprep.mubr.f32.mxu0 0.0
        %1487 = vmatmul.mubr.f32.gmra.mrb[0].mxu0 %v1317
        %v1488 = vpop.f32.mrb[0].mxu0
        %v1489 = vadd.f32 0.0, %v1488
        %v1490 = vpop.f32.mrb[0].mxu0
        %1491 = vmatprep.mubr.f32.mxu0 0.0
        %1492 = vmatmul.mubr.f32.gmra.mrb[0].mxu0 %v1318
        %v1493 = vpop.f32.mrb[0].mxu0
        %v1494 = vadd.f32 0.0, %v1493
        %v1495 = vpop.f32.mrb[0].mxu0
        %1496 = vmatprep.mubr.f32.mxu0 0.0
        %1497 = vmatmul.mubr.f32.gmra.mrb[0].mxu0 %v1319
        %v1498 = vpop.f32.mrb[0].mxu0
        %v1499 = vadd.f32 0.0, %v1498
        %v1500 = vpop.f32.mrb[0].mxu0
        %1501 = vdwg.mxu0
        %v1502 = vld [vmem:[#allocation2] sm:$0xff]
        %v1503 = vld [vmem:[#allocation2 + $0x8] sm:$0xff]
        %v1504 = vld [vmem:[#allocation2 + $0x10] sm:$0xff]
        %v1505 = vld [vmem:[#allocation2 + $0x18] sm:$0xff]
        %v1506 = vld [vmem:[#allocation2 + $0x20] sm:$0xff]
        %v1507 = vld [vmem:[#allocation2 + $0x28] sm:$0xff]
        %v1508 = vld [vmem:[#allocation2 + $0x30] sm:$0xff]
        %v1509 = vld [vmem:[#allocation2 + $0x38] sm:$0xff]
        %v1510 = vld [vmem:[#allocation2 + $0x40] sm:$0xff]
        %v1511 = vld [vmem:[#allocation2 + $0x48] sm:$0xff]
        %v1512 = vld [vmem:[#allocation2 + $0x50] sm:$0xff]
        %v1513 = vld [vmem:[#allocation2 + $0x58] sm:$0xff]
        %v1514 = vld [vmem:[#allocation2 + $0x60] sm:$0xff]
        %v1515 = vld [vmem:[#allocation2 + $0x68] sm:$0xff]
        %v1516 = vld [vmem:[#allocation2 + $0x70] sm:$0xff]
        %v1517 = vld [vmem:[#allocation2 + $0x78] sm:$0xff]
        %v1518 = vld [vmem:[#allocation2 + $0x80] sm:$0xff]
        %v1519 = vld [vmem:[#allocation2 + $0x88] sm:$0xff]
        %v1520 = vld [vmem:[#allocation2 + $0x90] sm:$0xff]
        %v1521 = vld [vmem:[#allocation2 + $0x98] sm:$0xff]
        %v1522 = vadd.f32 %v1502, %v1404
        %v1523 = vadd.f32 %v1503, %v1409
        %v1524 = vadd.f32 %v1504, %v1414
        %v1525 = vadd.f32 %v1505, %v1419
        %v1526 = vadd.f32 %v1506, %v1424
        %v1527 = vadd.f32 %v1507, %v1429
        %v1528 = vadd.f32 %v1508, %v1434
        %v1529 = vadd.f32 %v1509, %v1439
        %v1530 = vadd.f32 %v1510, %v1444
        %v1531 = vadd.f32 %v1511, %v1449
        %v1532 = vadd.f32 %v1512, %v1454
        %v1533 = vadd.f32 %v1513, %v1459
        %v1534 = vadd.f32 %v1514, %v1464
        %v1535 = vadd.f32 %v1515, %v1469
        %v1536 = vadd.f32 %v1516, %v1474
        %v1537 = vadd.f32 %v1517, %v1479
        %v1538 = vadd.f32 %v1518, %v1484
        %v1539 = vadd.f32 %v1519, %v1489
        %v1540 = vadd.f32 %v1520, %v1494
        %v1541 = vadd.f32 %v1521, %v1499
        %1542 = vst [vmem:[#allocation2] sm:$0xff] %v1522
        %1543 = vst [vmem:[#allocation2 + $0x8] sm:$0xff] %v1523
        %1544 = vst [vmem:[#allocation2 + $0x10] sm:$0xff] %v1524
        %1545 = vst [vmem:[#allocation2 + $0x18] sm:$0xff] %v1525
        %1546 = vst [vmem:[#allocation2 + $0x20] sm:$0xff] %v1526
        %1547 = vst [vmem:[#allocation2 + $0x28] sm:$0xff] %v1527
        %1548 = vst [vmem:[#allocation2 + $0x30] sm:$0xff] %v1528
        %1549 = vst [vmem:[#allocation2 + $0x38] sm:$0xff] %v1529
        %1550 = vst [vmem:[#allocation2 + $0x40] sm:$0xff] %v1530
        %1551 = vst [vmem:[#allocation2 + $0x48] sm:$0xff] %v1531
        %1552 = vst [vmem:[#allocation2 + $0x50] sm:$0xff] %v1532
        %1553 = vst [vmem:[#allocation2 + $0x58] sm:$0xff] %v1533
        %1554 = vst [vmem:[#allocation2 + $0x60] sm:$0xff] %v1534
        %1555 = vst [vmem:[#allocation2 + $0x68] sm:$0xff] %v1535
        %1556 = vst [vmem:[#allocation2 + $0x70] sm:$0xff] %v1536
        %1557 = vst [vmem:[#allocation2 + $0x78] sm:$0xff] %v1537
        %1558 = vst [vmem:[#allocation2 + $0x80] sm:$0xff] %v1538
        %1559 = vst [vmem:[#allocation2 + $0x88] sm:$0xff] %v1539
        %1560 = vst [vmem:[#allocation2 + $0x90] sm:$0xff] %v1540
        %1561 = vst [vmem:[#allocation2 + $0x98] sm:$0xff] %v1541
        %v1562 = vld [vmem:[%s1037 + $0x9] sm:$0xff]
        %v1563 = vld [vmem:[%s1037 + $0x11] sm:$0xff]
        %v1564 = vld [vmem:[%s1037 + $0x29] sm:$0xff]
        %v1565 = vld [vmem:[%s1037 + $0x31] sm:$0xff]
        %v1566 = vld [vmem:[%s1037 + $0x49] sm:$0xff]
        %v1567 = vld [vmem:[%s1037 + $0x51] sm:$0xff]
        %v1568 = vld [vmem:[%s1037 + $0x69] sm:$0xff]
        %v1569 = vld [vmem:[%s1037 + $0x71] sm:$0xff]
        %v1570 = vld [vmem:[%s1037 + $0x89] sm:$0xff]
        %v1571 = vld [vmem:[%s1037 + $0x91] sm:$0xff]
        %v1572 = vld [vmem:[%s1037 + $0xa9] sm:$0xff]
        %v1573 = vld [vmem:[%s1037 + $0xb1] sm:$0xff]
        %v1574 = vld [vmem:[%s1037 + $0xc9] sm:$0xff]
        %v1575 = vld [vmem:[%s1037 + $0xd1] sm:$0xff]
        %v1576 = vld [vmem:[%s1037 + $0xe9] sm:$0xff]
        %v1577 = vld [vmem:[%s1037 + $0xf1] sm:$0xff]
        %v1578 = vld [vmem:[%s1037 + $0x109] sm:$0xff]
        %v1579 = vld [vmem:[%s1037 + $0x111] sm:$0xff]
        %v1580 = vld [vmem:[%s1037 + $0x129] sm:$0xff]
        %v1581 = vld [vmem:[%s1037 + $0x131] sm:$0xff]
        %s1582 = scalar_lea.vmem [#allocation7], 640
        %v1583 = vld [vmem:[%s1582] sm:$0xff]
        %v1584 = vld [vmem:[%s1582 + $0x8] sm:$0xff]
        %v1585 = vld [vmem:[%s1582 + $0x10] sm:$0xff]
        %v1586 = vld [vmem:[%s1582 + $0x18] sm:$0xff]
        %v1587 = vld [vmem:[%s1582 + $0x20] sm:$0xff]
        %v1588 = vld [vmem:[%s1582 + $0x28] sm:$0xff]
        %v1589 = vld [vmem:[%s1582 + $0x30] sm:$0xff]
        %v1590 = vld [vmem:[%s1582 + $0x38] sm:$0xff]
        %v1591 = vld [vmem:[%s1582 + $0x40] sm:$0xff]
        %v1592 = vld [vmem:[%s1582 + $0x48] sm:$0xff]
        %v1593 = vld [vmem:[%s1582 + $0x50] sm:$0xff]
        %v1594 = vld [vmem:[%s1582 + $0x58] sm:$0xff]
        %v1595 = vld [vmem:[%s1582 + $0x60] sm:$0xff]
        %v1596 = vld [vmem:[%s1582 + $0x68] sm:$0xff]
        %v1597 = vld [vmem:[%s1582 + $0x70] sm:$0xff]
        %v1598 = vld [vmem:[%s1582 + $0x78] sm:$0xff]
        %1599 = vmatprep.subr.mxu0 0.0
        %1600 = vmatpush1.msra.mxu0 %v1583
        %1601 = vmatprep.subr.mxu0 0.0
        %1602 = vmatpush1.msra.mxu0 %v1584
        %1603 = vmatprep.subr.mxu0 0.0
        %1604 = vmatpush1.msra.mxu0 %v1585
        %1605 = vmatprep.subr.mxu0 0.0
        %1606 = vmatpush1.msra.mxu0 %v1586
        %1607 = vmatprep.subr.mxu0 0.0
        %1608 = vmatpush1.msra.mxu0 %v1587
        %1609 = vmatprep.subr.mxu0 0.0
        %1610 = vmatpush1.msra.mxu0 %v1588
        %1611 = vmatprep.subr.mxu0 0.0
        %1612 = vmatpush1.msra.mxu0 %v1589
        %1613 = vmatprep.subr.mxu0 0.0
        %1614 = vmatpush1.msra.mxu0 %v1590
        %1615 = vmatprep.subr.mxu0 0.0
        %1616 = vmatpush1.msra.mxu0 %v1591
        %1617 = vmatprep.subr.mxu0 0.0
        %1618 = vmatpush1.msra.mxu0 %v1592
        %1619 = vmatprep.subr.mxu0 0.0
        %1620 = vmatpush1.msra.mxu0 %v1593
        %1621 = vmatprep.subr.mxu0 0.0
        %1622 = vmatpush1.msra.mxu0 %v1594
        %1623 = vmatprep.subr.mxu0 0.0
        %1624 = vmatpush1.msra.mxu0 %v1595
        %1625 = vmatprep.subr.mxu0 0.0
        %1626 = vmatpush1.msra.mxu0 %v1596
        %1627 = vmatprep.subr.mxu0 0.0
        %1628 = vmatpush1.msra.mxu0 %v1597
        %1629 = vmatprep.subr.mxu0 0.0
        %1630 = vmatpush1.msra.mxu0 %v1598
        %1631 = vmatprep.subr.mxu0 0.0
        %1632 = vmatpush1.msra.mxu0 0.0
        %1633 = vmatprep.subr.mxu0 0.0
        %1634 = vmatpush1.msra.mxu0 0.0
        %1635 = vmatprep.subr.mxu0 0.0
        %1636 = vmatpush1.msra.mxu0 0.0
        %1637 = vmatprep.subr.mxu0 0.0
        %1638 = vmatpush1.msra.mxu0 0.0
        %1639 = vmatprep.subr.mxu0 0.0
        %1640 = vmatpush1.msra.mxu0 0.0
        %1641 = vmatprep.subr.mxu0 0.0
        %1642 = vmatpush1.msra.mxu0 0.0
        %1643 = vmatprep.subr.mxu0 0.0
        %1644 = vmatpush1.msra.mxu0 0.0
        %1645 = vmatprep.subr.mxu0 0.0
        %1646 = vmatpush1.msra.mxu0 0.0
        %1647 = vmatprep.subr.mxu0 0.0
        %1648 = vmatpush1.msra.mxu0 0.0
        %1649 = vmatprep.subr.mxu0 0.0
        %1650 = vmatpush1.msra.mxu0 0.0
        %1651 = vmatprep.subr.mxu0 0.0
        %1652 = vmatpush1.msra.mxu0 0.0
        %1653 = vmatprep.subr.mxu0 0.0
        %1654 = vmatpush1.msra.mxu0 0.0
        %1655 = vmatprep.subr.mxu0 0.0
        %1656 = vmatpush1.msra.mxu0 0.0
        %1657 = vmatprep.subr.mxu0 0.0
        %1658 = vmatpush1.msra.mxu0 0.0
        %1659 = vmatprep.subr.mxu0 0.0
        %1660 = vmatpush1.msra.mxu0 0.0
        %1661 = vmatprep.subr.mxu0 0.0
        %1662 = vmatpush1.msra.mxu0 0.0
        %1663 = vmatprep.mubr.f32.mxu0 0.0
        %1664 = vmatmul.mubr.f32.gmra.mrb[0].mxu0 %v1562
        %v1665 = vpop.f32.mrb[0].mxu0
        %v1666 = vadd.f32 0.0, %v1665
        %v1667 = vpop.f32.mrb[0].mxu0
        %1668 = vmatprep.mubr.f32.mxu0 0.0
        %1669 = vmatmul.mubr.f32.gmra.mrb[0].mxu0 %v1563
        %v1670 = vpop.f32.mrb[0].mxu0
        %v1671 = vadd.f32 0.0, %v1670
        %v1672 = vpop.f32.mrb[0].mxu0
        %1673 = vmatprep.mubr.f32.mxu0 0.0
        %1674 = vmatmul.mubr.f32.gmra.mrb[0].mxu0 %v1564
        %v1675 = vpop.f32.mrb[0].mxu0
        %v1676 = vadd.f32 0.0, %v1675
        %v1677 = vpop.f32.mrb[0].mxu0
        %1678 = vmatprep.mubr.f32.mxu0 0.0
        %1679 = vmatmul.mubr.f32.gmra.mrb[0].mxu0 %v1565
        %v1680 = vpop.f32.mrb[0].mxu0
        %v1681 = vadd.f32 0.0, %v1680
        %v1682 = vpop.f32.mrb[0].mxu0
        %1683 = vmatprep.mubr.f32.mxu0 0.0
        %1684 = vmatmul.mubr.f32.gmra.mrb[0].mxu0 %v1566
        %v1685 = vpop.f32.mrb[0].mxu0
        %v1686 = vadd.f32 0.0, %v1685
        %v1687 = vpop.f32.mrb[0].mxu0
        %1688 = vmatprep.mubr.f32.mxu0 0.0
        %1689 = vmatmul.mubr.f32.gmra.mrb[0].mxu0 %v1567
        %v1690 = vpop.f32.mrb[0].mxu0
        %v1691 = vadd.f32 0.0, %v1690
        %v1692 = vpop.f32.mrb[0].mxu0
        %1693 = vmatprep.mubr.f32.mxu0 0.0
        %1694 = vmatmul.mubr.f32.gmra.mrb[0].mxu0 %v1568
        %v1695 = vpop.f32.mrb[0].mxu0
        %v1696 = vadd.f32 0.0, %v1695
        %v1697 = vpop.f32.mrb[0].mxu0
        %1698 = vmatprep.mubr.f32.mxu0 0.0
        %1699 = vmatmul.mubr.f32.gmra.mrb[0].mxu0 %v1569
        %v1700 = vpop.f32.mrb[0].mxu0
        %v1701 = vadd.f32 0.0, %v1700
        %v1702 = vpop.f32.mrb[0].mxu0
        %1703 = vmatprep.mubr.f32.mxu0 0.0
        %1704 = vmatmul.mubr.f32.gmra.mrb[0].mxu0 %v1570
        %v1705 = vpop.f32.mrb[0].mxu0
        %v1706 = vadd.f32 0.0, %v1705
        %v1707 = vpop.f32.mrb[0].mxu0
        %1708 = vmatprep.mubr.f32.mxu0 0.0
        %1709 = vmatmul.mubr.f32.gmra.mrb[0].mxu0 %v1571
        %v1710 = vpop.f32.mrb[0].mxu0
        %v1711 = vadd.f32 0.0, %v1710
        %v1712 = vpop.f32.mrb[0].mxu0
        %1713 = vmatprep.mubr.f32.mxu0 0.0
        %1714 = vmatmul.mubr.f32.gmra.mrb[0].mxu0 %v1572
        %v1715 = vpop.f32.mrb[0].mxu0
        %v1716 = vadd.f32 0.0, %v1715
        %v1717 = vpop.f32.mrb[0].mxu0
        %1718 = vmatprep.mubr.f32.mxu0 0.0
        %1719 = vmatmul.mubr.f32.gmra.mrb[0].mxu0 %v1573
        %v1720 = vpop.f32.mrb[0].mxu0
        %v1721 = vadd.f32 0.0, %v1720
        %v1722 = vpop.f32.mrb[0].mxu0
        %1723 = vmatprep.mubr.f32.mxu0 0.0
        %1724 = vmatmul.mubr.f32.gmra.mrb[0].mxu0 %v1574
        %v1725 = vpop.f32.mrb[0].mxu0
        %v1726 = vadd.f32 0.0, %v1725
        %v1727 = vpop.f32.mrb[0].mxu0
        %1728 = vmatprep.mubr.f32.mxu0 0.0
        %1729 = vmatmul.mubr.f32.gmra.mrb[0].mxu0 %v1575
        %v1730 = vpop.f32.mrb[0].mxu0
        %v1731 = vadd.f32 0.0, %v1730
        %v1732 = vpop.f32.mrb[0].mxu0
        %1733 = vmatprep.mubr.f32.mxu0 0.0
        %1734 = vmatmul.mubr.f32.gmra.mrb[0].mxu0 %v1576
        %v1735 = vpop.f32.mrb[0].mxu0
        %v1736 = vadd.f32 0.0, %v1735
        %v1737 = vpop.f32.mrb[0].mxu0
        %1738 = vmatprep.mubr.f32.mxu0 0.0
        %1739 = vmatmul.mubr.f32.gmra.mrb[0].mxu0 %v1577
        %v1740 = vpop.f32.mrb[0].mxu0
        %v1741 = vadd.f32 0.0, %v1740
        %v1742 = vpop.f32.mrb[0].mxu0
        %1743 = vmatprep.mubr.f32.mxu0 0.0
        %1744 = vmatmul.mubr.f32.gmra.mrb[0].mxu0 %v1578
        %v1745 = vpop.f32.mrb[0].mxu0
        %v1746 = vadd.f32 0.0, %v1745
        %v1747 = vpop.f32.mrb[0].mxu0
        %1748 = vmatprep.mubr.f32.mxu0 0.0
        %1749 = vmatmul.mubr.f32.gmra.mrb[0].mxu0 %v1579
        %v1750 = vpop.f32.mrb[0].mxu0
        %v1751 = vadd.f32 0.0, %v1750
        %v1752 = vpop.f32.mrb[0].mxu0
        %1753 = vmatprep.mubr.f32.mxu0 0.0
        %1754 = vmatmul.mubr.f32.gmra.mrb[0].mxu0 %v1580
        %v1755 = vpop.f32.mrb[0].mxu0
        %v1756 = vadd.f32 0.0, %v1755
        %v1757 = vpop.f32.mrb[0].mxu0
        %1758 = vmatprep.mubr.f32.mxu0 0.0
        %1759 = vmatmul.mubr.f32.gmra.mrb[0].mxu0 %v1581
        %v1760 = vpop.f32.mrb[0].mxu0
        %v1761 = vadd.f32 0.0, %v1760
        %v1762 = vpop.f32.mrb[0].mxu0
        %1763 = vdwg.mxu0
        %v1764 = vld [vmem:[#allocation2] sm:$0xff]
        %v1765 = vld [vmem:[#allocation2 + $0x8] sm:$0xff]
        %v1766 = vld [vmem:[#allocation2 + $0x10] sm:$0xff]
        %v1767 = vld [vmem:[#allocation2 + $0x18] sm:$0xff]
        %v1768 = vld [vmem:[#allocation2 + $0x20] sm:$0xff]
        %v1769 = vld [vmem:[#allocation2 + $0x28] sm:$0xff]
        %v1770 = vld [vmem:[#allocation2 + $0x30] sm:$0xff]
        %v1771 = vld [vmem:[#allocation2 + $0x38] sm:$0xff]
        %v1772 = vld [vmem:[#allocation2 + $0x40] sm:$0xff]
        %v1773 = vld [vmem:[#allocation2 + $0x48] sm:$0xff]
        %v1774 = vld [vmem:[#allocation2 + $0x50] sm:$0xff]
        %v1775 = vld [vmem:[#allocation2 + $0x58] sm:$0xff]
        %v1776 = vld [vmem:[#allocation2 + $0x60] sm:$0xff]
        %v1777 = vld [vmem:[#allocation2 + $0x68] sm:$0xff]
        %v1778 = vld [vmem:[#allocation2 + $0x70] sm:$0xff]
        %v1779 = vld [vmem:[#allocation2 + $0x78] sm:$0xff]
        %v1780 = vld [vmem:[#allocation2 + $0x80] sm:$0xff]
        %v1781 = vld [vmem:[#allocation2 + $0x88] sm:$0xff]
        %v1782 = vld [vmem:[#allocation2 + $0x90] sm:$0xff]
        %v1783 = vld [vmem:[#allocation2 + $0x98] sm:$0xff]
        %v1784 = vadd.f32 %v1764, %v1666
        %v1785 = vadd.f32 %v1765, %v1671
        %v1786 = vadd.f32 %v1766, %v1676
        %v1787 = vadd.f32 %v1767, %v1681
        %v1788 = vadd.f32 %v1768, %v1686
        %v1789 = vadd.f32 %v1769, %v1691
        %v1790 = vadd.f32 %v1770, %v1696
        %v1791 = vadd.f32 %v1771, %v1701
        %v1792 = vadd.f32 %v1772, %v1706
        %v1793 = vadd.f32 %v1773, %v1711
        %v1794 = vadd.f32 %v1774, %v1716
        %v1795 = vadd.f32 %v1775, %v1721
        %v1796 = vadd.f32 %v1776, %v1726
        %v1797 = vadd.f32 %v1777, %v1731
        %v1798 = vadd.f32 %v1778, %v1736
        %v1799 = vadd.f32 %v1779, %v1741
        %v1800 = vadd.f32 %v1780, %v1746
        %v1801 = vadd.f32 %v1781, %v1751
        %v1802 = vadd.f32 %v1782, %v1756
        %v1803 = vadd.f32 %v1783, %v1761
        %1804 = vst [vmem:[#allocation2] sm:$0xff] %v1784
        %1805 = vst [vmem:[#allocation2 + $0x8] sm:$0xff] %v1785
        %1806 = vst [vmem:[#allocation2 + $0x10] sm:$0xff] %v1786
        %1807 = vst [vmem:[#allocation2 + $0x18] sm:$0xff] %v1787
        %1808 = vst [vmem:[#allocation2 + $0x20] sm:$0xff] %v1788
        %1809 = vst [vmem:[#allocation2 + $0x28] sm:$0xff] %v1789
        %1810 = vst [vmem:[#allocation2 + $0x30] sm:$0xff] %v1790
        %1811 = vst [vmem:[#allocation2 + $0x38] sm:$0xff] %v1791
        %1812 = vst [vmem:[#allocation2 + $0x40] sm:$0xff] %v1792
        %1813 = vst [vmem:[#allocation2 + $0x48] sm:$0xff] %v1793
        %1814 = vst [vmem:[#allocation2 + $0x50] sm:$0xff] %v1794
        %1815 = vst [vmem:[#allocation2 + $0x58] sm:$0xff] %v1795
        %1816 = vst [vmem:[#allocation2 + $0x60] sm:$0xff] %v1796
        %1817 = vst [vmem:[#allocation2 + $0x68] sm:$0xff] %v1797
        %1818 = vst [vmem:[#allocation2 + $0x70] sm:$0xff] %v1798
        %1819 = vst [vmem:[#allocation2 + $0x78] sm:$0xff] %v1799
        %1820 = vst [vmem:[#allocation2 + $0x80] sm:$0xff] %v1800
        %1821 = vst [vmem:[#allocation2 + $0x88] sm:$0xff] %v1801
        %1822 = vst [vmem:[#allocation2 + $0x90] sm:$0xff] %v1802
        %1823 = vst [vmem:[#allocation2 + $0x98] sm:$0xff] %v1803
        %s1824 = sadd.s32 %s287, 2
        %s1825 = smul.u32 %s1824, 32
        %s1826 = scalar_lea.vmem %s251, %s1825 [#allocation4]
        %v1827 = vld [vmem:[%s1826 + $0x7] sm:$0xff]
        %v1828 = vld [vmem:[%s1826 + $0xf] sm:$0xff]
        %v1829 = vld [vmem:[%s1826 + $0x27] sm:$0xff]
        %v1830 = vld [vmem:[%s1826 + $0x2f] sm:$0xff]
        %v1831 = vld [vmem:[%s1826 + $0x47] sm:$0xff]
        %v1832 = vld [vmem:[%s1826 + $0x4f] sm:$0xff]
        %v1833 = vld [vmem:[%s1826 + $0x67] sm:$0xff]
        %v1834 = vld [vmem:[%s1826 + $0x6f] sm:$0xff]
        %v1835 = vld [vmem:[%s1826 + $0x87] sm:$0xff]
        %v1836 = vld [vmem:[%s1826 + $0x8f] sm:$0xff]
        %v1837 = vld [vmem:[%s1826 + $0xa7] sm:$0xff]
        %v1838 = vld [vmem:[%s1826 + $0xaf] sm:$0xff]
        %v1839 = vld [vmem:[%s1826 + $0xc7] sm:$0xff]
        %v1840 = vld [vmem:[%s1826 + $0xcf] sm:$0xff]
        %v1841 = vld [vmem:[%s1826 + $0xe7] sm:$0xff]
        %v1842 = vld [vmem:[%s1826 + $0xef] sm:$0xff]
        %v1843 = vld [vmem:[%s1826 + $0x107] sm:$0xff]
        %v1844 = vld [vmem:[%s1826 + $0x10f] sm:$0xff]
        %v1845 = vld [vmem:[%s1826 + $0x127] sm:$0xff]
        %v1846 = vld [vmem:[%s1826 + $0x12f] sm:$0xff]
        %s1847 = scalar_lea.vmem [#allocation7], 768
        %v1848 = vld [vmem:[%s1847] sm:$0xff]
        %v1849 = vld [vmem:[%s1847 + $0x8] sm:$0xff]
        %v1850 = vld [vmem:[%s1847 + $0x10] sm:$0xff]
        %v1851 = vld [vmem:[%s1847 + $0x18] sm:$0xff]
        %v1852 = vld [vmem:[%s1847 + $0x20] sm:$0xff]
        %v1853 = vld [vmem:[%s1847 + $0x28] sm:$0xff]
        %v1854 = vld [vmem:[%s1847 + $0x30] sm:$0xff]
        %v1855 = vld [vmem:[%s1847 + $0x38] sm:$0xff]
        %v1856 = vld [vmem:[%s1847 + $0x40] sm:$0xff]
        %v1857 = vld [vmem:[%s1847 + $0x48] sm:$0xff]
        %v1858 = vld [vmem:[%s1847 + $0x50] sm:$0xff]
        %v1859 = vld [vmem:[%s1847 + $0x58] sm:$0xff]
        %v1860 = vld [vmem:[%s1847 + $0x60] sm:$0xff]
        %v1861 = vld [vmem:[%s1847 + $0x68] sm:$0xff]
        %v1862 = vld [vmem:[%s1847 + $0x70] sm:$0xff]
        %v1863 = vld [vmem:[%s1847 + $0x78] sm:$0xff]
        %1864 = vmatprep.subr.mxu0 0.0
        %1865 = vmatpush1.msra.mxu0 %v1848
        %1866 = vmatprep.subr.mxu0 0.0
        %1867 = vmatpush1.msra.mxu0 %v1849
        %1868 = vmatprep.subr.mxu0 0.0
        %1869 = vmatpush1.msra.mxu0 %v1850
        %1870 = vmatprep.subr.mxu0 0.0
        %1871 = vmatpush1.msra.mxu0 %v1851
        %1872 = vmatprep.subr.mxu0 0.0
        %1873 = vmatpush1.msra.mxu0 %v1852
        %1874 = vmatprep.subr.mxu0 0.0
        %1875 = vmatpush1.msra.mxu0 %v1853
        %1876 = vmatprep.subr.mxu0 0.0
        %1877 = vmatpush1.msra.mxu0 %v1854
        %1878 = vmatprep.subr.mxu0 0.0
        %1879 = vmatpush1.msra.mxu0 %v1855
        %1880 = vmatprep.subr.mxu0 0.0
        %1881 = vmatpush1.msra.mxu0 %v1856
        %1882 = vmatprep.subr.mxu0 0.0
        %1883 = vmatpush1.msra.mxu0 %v1857
        %1884 = vmatprep.subr.mxu0 0.0
        %1885 = vmatpush1.msra.mxu0 %v1858
        %1886 = vmatprep.subr.mxu0 0.0
        %1887 = vmatpush1.msra.mxu0 %v1859
        %1888 = vmatprep.subr.mxu0 0.0
        %1889 = vmatpush1.msra.mxu0 %v1860
        %1890 = vmatprep.subr.mxu0 0.0
        %1891 = vmatpush1.msra.mxu0 %v1861
        %1892 = vmatprep.subr.mxu0 0.0
        %1893 = vmatpush1.msra.mxu0 %v1862
        %1894 = vmatprep.subr.mxu0 0.0
        %1895 = vmatpush1.msra.mxu0 %v1863
        %1896 = vmatprep.subr.mxu0 0.0
        %1897 = vmatpush1.msra.mxu0 0.0
        %1898 = vmatprep.subr.mxu0 0.0
        %1899 = vmatpush1.msra.mxu0 0.0
        %1900 = vmatprep.subr.mxu0 0.0
        %1901 = vmatpush1.msra.mxu0 0.0
        %1902 = vmatprep.subr.mxu0 0.0
        %1903 = vmatpush1.msra.mxu0 0.0
        %1904 = vmatprep.subr.mxu0 0.0
        %1905 = vmatpush1.msra.mxu0 0.0
        %1906 = vmatprep.subr.mxu0 0.0
        %1907 = vmatpush1.msra.mxu0 0.0
        %1908 = vmatprep.subr.mxu0 0.0
        %1909 = vmatpush1.msra.mxu0 0.0
        %1910 = vmatprep.subr.mxu0 0.0
        %1911 = vmatpush1.msra.mxu0 0.0
        %1912 = vmatprep.subr.mxu0 0.0
        %1913 = vmatpush1.msra.mxu0 0.0
        %1914 = vmatprep.subr.mxu0 0.0
        %1915 = vmatpush1.msra.mxu0 0.0
        %1916 = vmatprep.subr.mxu0 0.0
        %1917 = vmatpush1.msra.mxu0 0.0
        %1918 = vmatprep.subr.mxu0 0.0
        %1919 = vmatpush1.msra.mxu0 0.0
        %1920 = vmatprep.subr.mxu0 0.0
        %1921 = vmatpush1.msra.mxu0 0.0
        %1922 = vmatprep.subr.mxu0 0.0
        %1923 = vmatpush1.msra.mxu0 0.0
        %1924 = vmatprep.subr.mxu0 0.0
        %1925 = vmatpush1.msra.mxu0 0.0
        %1926 = vmatprep.subr.mxu0 0.0
        %1927 = vmatpush1.msra.mxu0 0.0
        %1928 = vmatprep.mubr.f32.mxu0 0.0
        %1929 = vmatmul.mubr.f32.gmra.mrb[0].mxu0 %v1827
        %v1930 = vpop.f32.mrb[0].mxu0
        %v1931 = vadd.f32 0.0, %v1930
        %v1932 = vpop.f32.mrb[0].mxu0
        %1933 = vmatprep.mubr.f32.mxu0 0.0
        %1934 = vmatmul.mubr.f32.gmra.mrb[0].mxu0 %v1828
        %v1935 = vpop.f32.mrb[0].mxu0
        %v1936 = vadd.f32 0.0, %v1935
        %v1937 = vpop.f32.mrb[0].mxu0
        %1938 = vmatprep.mubr.f32.mxu0 0.0
        %1939 = vmatmul.mubr.f32.gmra.mrb[0].mxu0 %v1829
        %v1940 = vpop.f32.mrb[0].mxu0
        %v1941 = vadd.f32 0.0, %v1940
        %v1942 = vpop.f32.mrb[0].mxu0
        %1943 = vmatprep.mubr.f32.mxu0 0.0
        %1944 = vmatmul.mubr.f32.gmra.mrb[0].mxu0 %v1830
        %v1945 = vpop.f32.mrb[0].mxu0
        %v1946 = vadd.f32 0.0, %v1945
        %v1947 = vpop.f32.mrb[0].mxu0
        %1948 = vmatprep.mubr.f32.mxu0 0.0
        %1949 = vmatmul.mubr.f32.gmra.mrb[0].mxu0 %v1831
        %v1950 = vpop.f32.mrb[0].mxu0
        %v1951 = vadd.f32 0.0, %v1950
        %v1952 = vpop.f32.mrb[0].mxu0
        %1953 = vmatprep.mubr.f32.mxu0 0.0
        %1954 = vmatmul.mubr.f32.gmra.mrb[0].mxu0 %v1832
        %v1955 = vpop.f32.mrb[0].mxu0
        %v1956 = vadd.f32 0.0, %v1955
        %v1957 = vpop.f32.mrb[0].mxu0
        %1958 = vmatprep.mubr.f32.mxu0 0.0
        %1959 = vmatmul.mubr.f32.gmra.mrb[0].mxu0 %v1833
        %v1960 = vpop.f32.mrb[0].mxu0
        %v1961 = vadd.f32 0.0, %v1960
        %v1962 = vpop.f32.mrb[0].mxu0
        %1963 = vmatprep.mubr.f32.mxu0 0.0
        %1964 = vmatmul.mubr.f32.gmra.mrb[0].mxu0 %v1834
        %v1965 = vpop.f32.mrb[0].mxu0
        %v1966 = vadd.f32 0.0, %v1965
        %v1967 = vpop.f32.mrb[0].mxu0
        %1968 = vmatprep.mubr.f32.mxu0 0.0
        %1969 = vmatmul.mubr.f32.gmra.mrb[0].mxu0 %v1835
        %v1970 = vpop.f32.mrb[0].mxu0
        %v1971 = vadd.f32 0.0, %v1970
        %v1972 = vpop.f32.mrb[0].mxu0
        %1973 = vmatprep.mubr.f32.mxu0 0.0
        %1974 = vmatmul.mubr.f32.gmra.mrb[0].mxu0 %v1836
        %v1975 = vpop.f32.mrb[0].mxu0
        %v1976 = vadd.f32 0.0, %v1975
        %v1977 = vpop.f32.mrb[0].mxu0
        %1978 = vmatprep.mubr.f32.mxu0 0.0
        %1979 = vmatmul.mubr.f32.gmra.mrb[0].mxu0 %v1837
        %v1980 = vpop.f32.mrb[0].mxu0
        %v1981 = vadd.f32 0.0, %v1980
        %v1982 = vpop.f32.mrb[0].mxu0
        %1983 = vmatprep.mubr.f32.mxu0 0.0
        %1984 = vmatmul.mubr.f32.gmra.mrb[0].mxu0 %v1838
        %v1985 = vpop.f32.mrb[0].mxu0
        %v1986 = vadd.f32 0.0, %v1985
        %v1987 = vpop.f32.mrb[0].mxu0
        %1988 = vmatprep.mubr.f32.mxu0 0.0
        %1989 = vmatmul.mubr.f32.gmra.mrb[0].mxu0 %v1839
        %v1990 = vpop.f32.mrb[0].mxu0
        %v1991 = vadd.f32 0.0, %v1990
        %v1992 = vpop.f32.mrb[0].mxu0
        %1993 = vmatprep.mubr.f32.mxu0 0.0
        %1994 = vmatmul.mubr.f32.gmra.mrb[0].mxu0 %v1840
        %v1995 = vpop.f32.mrb[0].mxu0
        %v1996 = vadd.f32 0.0, %v1995
        %v1997 = vpop.f32.mrb[0].mxu0
        %1998 = vmatprep.mubr.f32.mxu0 0.0
        %1999 = vmatmul.mubr.f32.gmra.mrb[0].mxu0 %v1841
        %v2000 = vpop.f32.mrb[0].mxu0
        %v2001 = vadd.f32 0.0, %v2000
        %v2002 = vpop.f32.mrb[0].mxu0
        %2003 = vmatprep.mubr.f32.mxu0 0.0
        %2004 = vmatmul.mubr.f32.gmra.mrb[0].mxu0 %v1842
        %v2005 = vpop.f32.mrb[0].mxu0
        %v2006 = vadd.f32 0.0, %v2005
        %v2007 = vpop.f32.mrb[0].mxu0
        %2008 = vmatprep.mubr.f32.mxu0 0.0
        %2009 = vmatmul.mubr.f32.gmra.mrb[0].mxu0 %v1843
        %v2010 = vpop.f32.mrb[0].mxu0
        %v2011 = vadd.f32 0.0, %v2010
        %v2012 = vpop.f32.mrb[0].mxu0
        %2013 = vmatprep.mubr.f32.mxu0 0.0
        %2014 = vmatmul.mubr.f32.gmra.mrb[0].mxu0 %v1844
        %v2015 = vpop.f32.mrb[0].mxu0
        %v2016 = vadd.f32 0.0, %v2015
        %v2017 = vpop.f32.mrb[0].mxu0
        %2018 = vmatprep.mubr.f32.mxu0 0.0
        %2019 = vmatmul.mubr.f32.gmra.mrb[0].mxu0 %v1845
        %v2020 = vpop.f32.mrb[0].mxu0
        %v2021 = vadd.f32 0.0, %v2020
        %v2022 = vpop.f32.mrb[0].mxu0
        %2023 = vmatprep.mubr.f32.mxu0 0.0
        %2024 = vmatmul.mubr.f32.gmra.mrb[0].mxu0 %v1846
        %v2025 = vpop.f32.mrb[0].mxu0
        %v2026 = vadd.f32 0.0, %v2025
        %v2027 = vpop.f32.mrb[0].mxu0
        %2028 = vdwg.mxu0
        %v2029 = vld [vmem:[#allocation2] sm:$0xff]
        %v2030 = vld [vmem:[#allocation2 + $0x8] sm:$0xff]
        %v2031 = vld [vmem:[#allocation2 + $0x10] sm:$0xff]
        %v2032 = vld [vmem:[#allocation2 + $0x18] sm:$0xff]
        %v2033 = vld [vmem:[#allocation2 + $0x20] sm:$0xff]
        %v2034 = vld [vmem:[#allocation2 + $0x28] sm:$0xff]
        %v2035 = vld [vmem:[#allocation2 + $0x30] sm:$0xff]
        %v2036 = vld [vmem:[#allocation2 + $0x38] sm:$0xff]
        %v2037 = vld [vmem:[#allocation2 + $0x40] sm:$0xff]
        %v2038 = vld [vmem:[#allocation2 + $0x48] sm:$0xff]
        %v2039 = vld [vmem:[#allocation2 + $0x50] sm:$0xff]
        %v2040 = vld [vmem:[#allocation2 + $0x58] sm:$0xff]
        %v2041 = vld [vmem:[#allocation2 + $0x60] sm:$0xff]
        %v2042 = vld [vmem:[#allocation2 + $0x68] sm:$0xff]
        %v2043 = vld [vmem:[#allocation2 + $0x70] sm:$0xff]
        %v2044 = vld [vmem:[#allocation2 + $0x78] sm:$0xff]
        %v2045 = vld [vmem:[#allocation2 + $0x80] sm:$0xff]
        %v2046 = vld [vmem:[#allocation2 + $0x88] sm:$0xff]
        %v2047 = vld [vmem:[#allocation2 + $0x90] sm:$0xff]
        %v2048 = vld [vmem:[#allocation2 + $0x98] sm:$0xff]
        %v2049 = vadd.f32 %v2029, %v1931
        %v2050 = vadd.f32 %v2030, %v1936
        %v2051 = vadd.f32 %v2031, %v1941
        %v2052 = vadd.f32 %v2032, %v1946
        %v2053 = vadd.f32 %v2033, %v1951
        %v2054 = vadd.f32 %v2034, %v1956
        %v2055 = vadd.f32 %v2035, %v1961
        %v2056 = vadd.f32 %v2036, %v1966
        %v2057 = vadd.f32 %v2037, %v1971
        %v2058 = vadd.f32 %v2038, %v1976
        %v2059 = vadd.f32 %v2039, %v1981
        %v2060 = vadd.f32 %v2040, %v1986
        %v2061 = vadd.f32 %v2041, %v1991
        %v2062 = vadd.f32 %v2042, %v1996
        %v2063 = vadd.f32 %v2043, %v2001
        %v2064 = vadd.f32 %v2044, %v2006
        %v2065 = vadd.f32 %v2045, %v2011
        %v2066 = vadd.f32 %v2046, %v2016
        %v2067 = vadd.f32 %v2047, %v2021
        %v2068 = vadd.f32 %v2048, %v2026
        %2069 = vst [vmem:[#allocation2] sm:$0xff] %v2049
        %2070 = vst [vmem:[#allocation2 + $0x8] sm:$0xff] %v2050
        %2071 = vst [vmem:[#allocation2 + $0x10] sm:$0xff] %v2051
        %2072 = vst [vmem:[#allocation2 + $0x18] sm:$0xff] %v2052
        %2073 = vst [vmem:[#allocation2 + $0x20] sm:$0xff] %v2053
        %2074 = vst [vmem:[#allocation2 + $0x28] sm:$0xff] %v2054
        %2075 = vst [vmem:[#allocation2 + $0x30] sm:$0xff] %v2055
        %2076 = vst [vmem:[#allocation2 + $0x38] sm:$0xff] %v2056
        %2077 = vst [vmem:[#allocation2 + $0x40] sm:$0xff] %v2057
        %2078 = vst [vmem:[#allocation2 + $0x48] sm:$0xff] %v2058
        %2079 = vst [vmem:[#allocation2 + $0x50] sm:$0xff] %v2059
        %2080 = vst [vmem:[#allocation2 + $0x58] sm:$0xff] %v2060
        %2081 = vst [vmem:[#allocation2 + $0x60] sm:$0xff] %v2061
        %2082 = vst [vmem:[#allocation2 + $0x68] sm:$0xff] %v2062
        %2083 = vst [vmem:[#allocation2 + $0x70] sm:$0xff] %v2063
        %2084 = vst [vmem:[#allocation2 + $0x78] sm:$0xff] %v2064
        %2085 = vst [vmem:[#allocation2 + $0x80] sm:$0xff] %v2065
        %2086 = vst [vmem:[#allocation2 + $0x88] sm:$0xff] %v2066
        %2087 = vst [vmem:[#allocation2 + $0x90] sm:$0xff] %v2067
        %2088 = vst [vmem:[#allocation2 + $0x98] sm:$0xff] %v2068
        %v2089 = vld [vmem:[%s1826 + $0x8] sm:$0xff]
        %v2090 = vld [vmem:[%s1826 + $0x10] sm:$0xff]
        %v2091 = vld [vmem:[%s1826 + $0x28] sm:$0xff]
        %v2092 = vld [vmem:[%s1826 + $0x30] sm:$0xff]
        %v2093 = vld [vmem:[%s1826 + $0x48] sm:$0xff]
        %v2094 = vld [vmem:[%s1826 + $0x50] sm:$0xff]
        %v2095 = vld [vmem:[%s1826 + $0x68] sm:$0xff]
        %v2096 = vld [vmem:[%s1826 + $0x70] sm:$0xff]
        %v2097 = vld [vmem:[%s1826 + $0x88] sm:$0xff]
        %v2098 = vld [vmem:[%s1826 + $0x90] sm:$0xff]
        %v2099 = vld [vmem:[%s1826 + $0xa8] sm:$0xff]
        %v2100 = vld [vmem:[%s1826 + $0xb0] sm:$0xff]
        %v2101 = vld [vmem:[%s1826 + $0xc8] sm:$0xff]
        %v2102 = vld [vmem:[%s1826 + $0xd0] sm:$0xff]
        %v2103 = vld [vmem:[%s1826 + $0xe8] sm:$0xff]
        %v2104 = vld [vmem:[%s1826 + $0xf0] sm:$0xff]
        %v2105 = vld [vmem:[%s1826 + $0x108] sm:$0xff]
        %v2106 = vld [vmem:[%s1826 + $0x110] sm:$0xff]
        %v2107 = vld [vmem:[%s1826 + $0x128] sm:$0xff]
        %v2108 = vld [vmem:[%s1826 + $0x130] sm:$0xff]
        %s2109 = scalar_lea.vmem [#allocation7], 896
        %v2110 = vld [vmem:[%s2109] sm:$0xff]
        %v2111 = vld [vmem:[%s2109 + $0x8] sm:$0xff]
        %v2112 = vld [vmem:[%s2109 + $0x10] sm:$0xff]
        %v2113 = vld [vmem:[%s2109 + $0x18] sm:$0xff]
        %v2114 = vld [vmem:[%s2109 + $0x20] sm:$0xff]
        %v2115 = vld [vmem:[%s2109 + $0x28] sm:$0xff]
        %v2116 = vld [vmem:[%s2109 + $0x30] sm:$0xff]
        %v2117 = vld [vmem:[%s2109 + $0x38] sm:$0xff]
        %v2118 = vld [vmem:[%s2109 + $0x40] sm:$0xff]
        %v2119 = vld [vmem:[%s2109 + $0x48] sm:$0xff]
        %v2120 = vld [vmem:[%s2109 + $0x50] sm:$0xff]
        %v2121 = vld [vmem:[%s2109 + $0x58] sm:$0xff]
        %v2122 = vld [vmem:[%s2109 + $0x60] sm:$0xff]
        %v2123 = vld [vmem:[%s2109 + $0x68] sm:$0xff]
        %v2124 = vld [vmem:[%s2109 + $0x70] sm:$0xff]
        %v2125 = vld [vmem:[%s2109 + $0x78] sm:$0xff]
        %2126 = vmatprep.subr.mxu0 0.0
        %2127 = vmatpush1.msra.mxu0 %v2110
        %2128 = vmatprep.subr.mxu0 0.0
        %2129 = vmatpush1.msra.mxu0 %v2111
        %2130 = vmatprep.subr.mxu0 0.0
        %2131 = vmatpush1.msra.mxu0 %v2112
        %2132 = vmatprep.subr.mxu0 0.0
        %2133 = vmatpush1.msra.mxu0 %v2113
        %2134 = vmatprep.subr.mxu0 0.0
        %2135 = vmatpush1.msra.mxu0 %v2114
        %2136 = vmatprep.subr.mxu0 0.0
        %2137 = vmatpush1.msra.mxu0 %v2115
        %2138 = vmatprep.subr.mxu0 0.0
        %2139 = vmatpush1.msra.mxu0 %v2116
        %2140 = vmatprep.subr.mxu0 0.0
        %2141 = vmatpush1.msra.mxu0 %v2117
        %2142 = vmatprep.subr.mxu0 0.0
        %2143 = vmatpush1.msra.mxu0 %v2118
        %2144 = vmatprep.subr.mxu0 0.0
        %2145 = vmatpush1.msra.mxu0 %v2119
        %2146 = vmatprep.subr.mxu0 0.0
        %2147 = vmatpush1.msra.mxu0 %v2120
        %2148 = vmatprep.subr.mxu0 0.0
        %2149 = vmatpush1.msra.mxu0 %v2121
        %2150 = vmatprep.subr.mxu0 0.0
        %2151 = vmatpush1.msra.mxu0 %v2122
        %2152 = vmatprep.subr.mxu0 0.0
        %2153 = vmatpush1.msra.mxu0 %v2123
        %2154 = vmatprep.subr.mxu0 0.0
        %2155 = vmatpush1.msra.mxu0 %v2124
        %2156 = vmatprep.subr.mxu0 0.0
        %2157 = vmatpush1.msra.mxu0 %v2125
        %2158 = vmatprep.subr.mxu0 0.0
        %2159 = vmatpush1.msra.mxu0 0.0
        %2160 = vmatprep.subr.mxu0 0.0
        %2161 = vmatpush1.msra.mxu0 0.0
        %2162 = vmatprep.subr.mxu0 0.0
        %2163 = vmatpush1.msra.mxu0 0.0
        %2164 = vmatprep.subr.mxu0 0.0
        %2165 = vmatpush1.msra.mxu0 0.0
        %2166 = vmatprep.subr.mxu0 0.0
        %2167 = vmatpush1.msra.mxu0 0.0
        %2168 = vmatprep.subr.mxu0 0.0
        %2169 = vmatpush1.msra.mxu0 0.0
        %2170 = vmatprep.subr.mxu0 0.0
        %2171 = vmatpush1.msra.mxu0 0.0
        %2172 = vmatprep.subr.mxu0 0.0
        %2173 = vmatpush1.msra.mxu0 0.0
        %2174 = vmatprep.subr.mxu0 0.0
        %2175 = vmatpush1.msra.mxu0 0.0
        %2176 = vmatprep.subr.mxu0 0.0
        %2177 = vmatpush1.msra.mxu0 0.0
        %2178 = vmatprep.subr.mxu0 0.0
        %2179 = vmatpush1.msra.mxu0 0.0
        %2180 = vmatprep.subr.mxu0 0.0
        %2181 = vmatpush1.msra.mxu0 0.0
        %2182 = vmatprep.subr.mxu0 0.0
        %2183 = vmatpush1.msra.mxu0 0.0
        %2184 = vmatprep.subr.mxu0 0.0
        %2185 = vmatpush1.msra.mxu0 0.0
        %2186 = vmatprep.subr.mxu0 0.0
        %2187 = vmatpush1.msra.mxu0 0.0
        %2188 = vmatprep.subr.mxu0 0.0
        %2189 = vmatpush1.msra.mxu0 0.0
        %2190 = vmatprep.mubr.f32.mxu0 0.0
        %2191 = vmatmul.mubr.f32.gmra.mrb[0].mxu0 %v2089
        %v2192 = vpop.f32.mrb[0].mxu0
        %v2193 = vadd.f32 0.0, %v2192
        %v2194 = vpop.f32.mrb[0].mxu0
        %2195 = vmatprep.mubr.f32.mxu0 0.0
        %2196 = vmatmul.mubr.f32.gmra.mrb[0].mxu0 %v2090
        %v2197 = vpop.f32.mrb[0].mxu0
        %v2198 = vadd.f32 0.0, %v2197
        %v2199 = vpop.f32.mrb[0].mxu0
        %2200 = vmatprep.mubr.f32.mxu0 0.0
        %2201 = vmatmul.mubr.f32.gmra.mrb[0].mxu0 %v2091
        %v2202 = vpop.f32.mrb[0].mxu0
        %v2203 = vadd.f32 0.0, %v2202
        %v2204 = vpop.f32.mrb[0].mxu0
        %2205 = vmatprep.mubr.f32.mxu0 0.0
        %2206 = vmatmul.mubr.f32.gmra.mrb[0].mxu0 %v2092
        %v2207 = vpop.f32.mrb[0].mxu0
        %v2208 = vadd.f32 0.0, %v2207
        %v2209 = vpop.f32.mrb[0].mxu0
        %2210 = vmatprep.mubr.f32.mxu0 0.0
        %2211 = vmatmul.mubr.f32.gmra.mrb[0].mxu0 %v2093
        %v2212 = vpop.f32.mrb[0].mxu0
        %v2213 = vadd.f32 0.0, %v2212
        %v2214 = vpop.f32.mrb[0].mxu0
        %2215 = vmatprep.mubr.f32.mxu0 0.0
        %2216 = vmatmul.mubr.f32.gmra.mrb[0].mxu0 %v2094
        %v2217 = vpop.f32.mrb[0].mxu0
        %v2218 = vadd.f32 0.0, %v2217
        %v2219 = vpop.f32.mrb[0].mxu0
        %2220 = vmatprep.mubr.f32.mxu0 0.0
        %2221 = vmatmul.mubr.f32.gmra.mrb[0].mxu0 %v2095
        %v2222 = vpop.f32.mrb[0].mxu0
        %v2223 = vadd.f32 0.0, %v2222
        %v2224 = vpop.f32.mrb[0].mxu0
        %2225 = vmatprep.mubr.f32.mxu0 0.0
        %2226 = vmatmul.mubr.f32.gmra.mrb[0].mxu0 %v2096
        %v2227 = vpop.f32.mrb[0].mxu0
        %v2228 = vadd.f32 0.0, %v2227
        %v2229 = vpop.f32.mrb[0].mxu0
        %2230 = vmatprep.mubr.f32.mxu0 0.0
        %2231 = vmatmul.mubr.f32.gmra.mrb[0].mxu0 %v2097
        %v2232 = vpop.f32.mrb[0].mxu0
        %v2233 = vadd.f32 0.0, %v2232
        %v2234 = vpop.f32.mrb[0].mxu0
        %2235 = vmatprep.mubr.f32.mxu0 0.0
        %2236 = vmatmul.mubr.f32.gmra.mrb[0].mxu0 %v2098
        %v2237 = vpop.f32.mrb[0].mxu0
        %v2238 = vadd.f32 0.0, %v2237
        %v2239 = vpop.f32.mrb[0].mxu0
        %2240 = vmatprep.mubr.f32.mxu0 0.0
        %2241 = vmatmul.mubr.f32.gmra.mrb[0].mxu0 %v2099
        %v2242 = vpop.f32.mrb[0].mxu0
        %v2243 = vadd.f32 0.0, %v2242
        %v2244 = vpop.f32.mrb[0].mxu0
        %2245 = vmatprep.mubr.f32.mxu0 0.0
        %2246 = vmatmul.mubr.f32.gmra.mrb[0].mxu0 %v2100
        %v2247 = vpop.f32.mrb[0].mxu0
        %v2248 = vadd.f32 0.0, %v2247
        %v2249 = vpop.f32.mrb[0].mxu0
        %2250 = vmatprep.mubr.f32.mxu0 0.0
        %2251 = vmatmul.mubr.f32.gmra.mrb[0].mxu0 %v2101
        %v2252 = vpop.f32.mrb[0].mxu0
        %v2253 = vadd.f32 0.0, %v2252
        %v2254 = vpop.f32.mrb[0].mxu0
        %2255 = vmatprep.mubr.f32.mxu0 0.0
        %2256 = vmatmul.mubr.f32.gmra.mrb[0].mxu0 %v2102
        %v2257 = vpop.f32.mrb[0].mxu0
        %v2258 = vadd.f32 0.0, %v2257
        %v2259 = vpop.f32.mrb[0].mxu0
        %2260 = vmatprep.mubr.f32.mxu0 0.0
        %2261 = vmatmul.mubr.f32.gmra.mrb[0].mxu0 %v2103
        %v2262 = vpop.f32.mrb[0].mxu0
        %v2263 = vadd.f32 0.0, %v2262
        %v2264 = vpop.f32.mrb[0].mxu0
        %2265 = vmatprep.mubr.f32.mxu0 0.0
        %2266 = vmatmul.mubr.f32.gmra.mrb[0].mxu0 %v2104
        %v2267 = vpop.f32.mrb[0].mxu0
        %v2268 = vadd.f32 0.0, %v2267
        %v2269 = vpop.f32.mrb[0].mxu0
        %2270 = vmatprep.mubr.f32.mxu0 0.0
        %2271 = vmatmul.mubr.f32.gmra.mrb[0].mxu0 %v2105
        %v2272 = vpop.f32.mrb[0].mxu0
        %v2273 = vadd.f32 0.0, %v2272
        %v2274 = vpop.f32.mrb[0].mxu0
        %2275 = vmatprep.mubr.f32.mxu0 0.0
        %2276 = vmatmul.mubr.f32.gmra.mrb[0].mxu0 %v2106
        %v2277 = vpop.f32.mrb[0].mxu0
        %v2278 = vadd.f32 0.0, %v2277
        %v2279 = vpop.f32.mrb[0].mxu0
        %2280 = vmatprep.mubr.f32.mxu0 0.0
        %2281 = vmatmul.mubr.f32.gmra.mrb[0].mxu0 %v2107
        %v2282 = vpop.f32.mrb[0].mxu0
        %v2283 = vadd.f32 0.0, %v2282
        %v2284 = vpop.f32.mrb[0].mxu0
        %2285 = vmatprep.mubr.f32.mxu0 0.0
        %2286 = vmatmul.mubr.f32.gmra.mrb[0].mxu0 %v2108
        %v2287 = vpop.f32.mrb[0].mxu0
        %v2288 = vadd.f32 0.0, %v2287
        %v2289 = vpop.f32.mrb[0].mxu0
        %2290 = vdwg.mxu0
        %v2291 = vld [vmem:[#allocation2] sm:$0xff]
        %v2292 = vld [vmem:[#allocation2 + $0x8] sm:$0xff]
        %v2293 = vld [vmem:[#allocation2 + $0x10] sm:$0xff]
        %v2294 = vld [vmem:[#allocation2 + $0x18] sm:$0xff]
        %v2295 = vld [vmem:[#allocation2 + $0x20] sm:$0xff]
        %v2296 = vld [vmem:[#allocation2 + $0x28] sm:$0xff]
        %v2297 = vld [vmem:[#allocation2 + $0x30] sm:$0xff]
        %v2298 = vld [vmem:[#allocation2 + $0x38] sm:$0xff]
        %v2299 = vld [vmem:[#allocation2 + $0x40] sm:$0xff]
        %v2300 = vld [vmem:[#allocation2 + $0x48] sm:$0xff]
        %v2301 = vld [vmem:[#allocation2 + $0x50] sm:$0xff]
        %v2302 = vld [vmem:[#allocation2 + $0x58] sm:$0xff]
        %v2303 = vld [vmem:[#allocation2 + $0x60] sm:$0xff]
        %v2304 = vld [vmem:[#allocation2 + $0x68] sm:$0xff]
        %v2305 = vld [vmem:[#allocation2 + $0x70] sm:$0xff]
        %v2306 = vld [vmem:[#allocation2 + $0x78] sm:$0xff]
        %v2307 = vld [vmem:[#allocation2 + $0x80] sm:$0xff]
        %v2308 = vld [vmem:[#allocation2 + $0x88] sm:$0xff]
        %v2309 = vld [vmem:[#allocation2 + $0x90] sm:$0xff]
        %v2310 = vld [vmem:[#allocation2 + $0x98] sm:$0xff]
        %v2311 = vadd.f32 %v2291, %v2193
        %v2312 = vadd.f32 %v2292, %v2198
        %v2313 = vadd.f32 %v2293, %v2203
        %v2314 = vadd.f32 %v2294, %v2208
        %v2315 = vadd.f32 %v2295, %v2213
        %v2316 = vadd.f32 %v2296, %v2218
        %v2317 = vadd.f32 %v2297, %v2223
        %v2318 = vadd.f32 %v2298, %v2228
        %v2319 = vadd.f32 %v2299, %v2233
        %v2320 = vadd.f32 %v2300, %v2238
        %v2321 = vadd.f32 %v2301, %v2243
        %v2322 = vadd.f32 %v2302, %v2248
        %v2323 = vadd.f32 %v2303, %v2253
        %v2324 = vadd.f32 %v2304, %v2258
        %v2325 = vadd.f32 %v2305, %v2263
        %v2326 = vadd.f32 %v2306, %v2268
        %v2327 = vadd.f32 %v2307, %v2273
        %v2328 = vadd.f32 %v2308, %v2278
        %v2329 = vadd.f32 %v2309, %v2283
        %v2330 = vadd.f32 %v2310, %v2288
        %2331 = vst [vmem:[#allocation2] sm:$0xff] %v2311
        %2332 = vst [vmem:[#allocation2 + $0x8] sm:$0xff] %v2312
        %2333 = vst [vmem:[#allocation2 + $0x10] sm:$0xff] %v2313
        %2334 = vst [vmem:[#allocation2 + $0x18] sm:$0xff] %v2314
        %2335 = vst [vmem:[#allocation2 + $0x20] sm:$0xff] %v2315
        %2336 = vst [vmem:[#allocation2 + $0x28] sm:$0xff] %v2316
        %2337 = vst [vmem:[#allocation2 + $0x30] sm:$0xff] %v2317
        %2338 = vst [vmem:[#allocation2 + $0x38] sm:$0xff] %v2318
        %2339 = vst [vmem:[#allocation2 + $0x40] sm:$0xff] %v2319
        %2340 = vst [vmem:[#allocation2 + $0x48] sm:$0xff] %v2320
        %2341 = vst [vmem:[#allocation2 + $0x50] sm:$0xff] %v2321
        %2342 = vst [vmem:[#allocation2 + $0x58] sm:$0xff] %v2322
        %2343 = vst [vmem:[#allocation2 + $0x60] sm:$0xff] %v2323
        %2344 = vst [vmem:[#allocation2 + $0x68] sm:$0xff] %v2324
        %2345 = vst [vmem:[#allocation2 + $0x70] sm:$0xff] %v2325
        %2346 = vst [vmem:[#allocation2 + $0x78] sm:$0xff] %v2326
        %2347 = vst [vmem:[#allocation2 + $0x80] sm:$0xff] %v2327
        %2348 = vst [vmem:[#allocation2 + $0x88] sm:$0xff] %v2328
        %2349 = vst [vmem:[#allocation2 + $0x90] sm:$0xff] %v2329
        %2350 = vst [vmem:[#allocation2 + $0x98] sm:$0xff] %v2330
        %v2351 = vld [vmem:[%s1826 + $0x9] sm:$0xff]
        %v2352 = vld [vmem:[%s1826 + $0x11] sm:$0xff]
        %v2353 = vld [vmem:[%s1826 + $0x29] sm:$0xff]
        %v2354 = vld [vmem:[%s1826 + $0x31] sm:$0xff]
        %v2355 = vld [vmem:[%s1826 + $0x49] sm:$0xff]
        %v2356 = vld [vmem:[%s1826 + $0x51] sm:$0xff]
        %v2357 = vld [vmem:[%s1826 + $0x69] sm:$0xff]
        %v2358 = vld [vmem:[%s1826 + $0x71] sm:$0xff]
        %v2359 = vld [vmem:[%s1826 + $0x89] sm:$0xff]
        %v2360 = vld [vmem:[%s1826 + $0x91] sm:$0xff]
        %v2361 = vld [vmem:[%s1826 + $0xa9] sm:$0xff]
        %v2362 = vld [vmem:[%s1826 + $0xb1] sm:$0xff]
        %v2363 = vld [vmem:[%s1826 + $0xc9] sm:$0xff]
        %v2364 = vld [vmem:[%s1826 + $0xd1] sm:$0xff]
        %v2365 = vld [vmem:[%s1826 + $0xe9] sm:$0xff]
        %v2366 = vld [vmem:[%s1826 + $0xf1] sm:$0xff]
        %v2367 = vld [vmem:[%s1826 + $0x109] sm:$0xff]
        %v2368 = vld [vmem:[%s1826 + $0x111] sm:$0xff]
        %v2369 = vld [vmem:[%s1826 + $0x129] sm:$0xff]
        %v2370 = vld [vmem:[%s1826 + $0x131] sm:$0xff]
        %s2371 = scalar_lea.vmem [#allocation7], 1024
        %v2372 = vld [vmem:[%s2371] sm:$0xff]
        %v2373 = vld [vmem:[%s2371 + $0x8] sm:$0xff]
        %v2374 = vld [vmem:[%s2371 + $0x10] sm:$0xff]
        %v2375 = vld [vmem:[%s2371 + $0x18] sm:$0xff]
        %v2376 = vld [vmem:[%s2371 + $0x20] sm:$0xff]
        %v2377 = vld [vmem:[%s2371 + $0x28] sm:$0xff]
        %v2378 = vld [vmem:[%s2371 + $0x30] sm:$0xff]
        %v2379 = vld [vmem:[%s2371 + $0x38] sm:$0xff]
        %v2380 = vld [vmem:[%s2371 + $0x40] sm:$0xff]
        %v2381 = vld [vmem:[%s2371 + $0x48] sm:$0xff]
        %v2382 = vld [vmem:[%s2371 + $0x50] sm:$0xff]
        %v2383 = vld [vmem:[%s2371 + $0x58] sm:$0xff]
        %v2384 = vld [vmem:[%s2371 + $0x60] sm:$0xff]
        %v2385 = vld [vmem:[%s2371 + $0x68] sm:$0xff]
        %v2386 = vld [vmem:[%s2371 + $0x70] sm:$0xff]
        %v2387 = vld [vmem:[%s2371 + $0x78] sm:$0xff]
        %2388 = vmatprep.subr.mxu0 0.0
        %2389 = vmatpush1.msra.mxu0 %v2372
        %2390 = vmatprep.subr.mxu0 0.0
        %2391 = vmatpush1.msra.mxu0 %v2373
        %2392 = vmatprep.subr.mxu0 0.0
        %2393 = vmatpush1.msra.mxu0 %v2374
        %2394 = vmatprep.subr.mxu0 0.0
        %2395 = vmatpush1.msra.mxu0 %v2375
        %2396 = vmatprep.subr.mxu0 0.0
        %2397 = vmatpush1.msra.mxu0 %v2376
        %2398 = vmatprep.subr.mxu0 0.0
        %2399 = vmatpush1.msra.mxu0 %v2377
        %2400 = vmatprep.subr.mxu0 0.0
        %2401 = vmatpush1.msra.mxu0 %v2378
        %2402 = vmatprep.subr.mxu0 0.0
        %2403 = vmatpush1.msra.mxu0 %v2379
        %2404 = vmatprep.subr.mxu0 0.0
        %2405 = vmatpush1.msra.mxu0 %v2380
        %2406 = vmatprep.subr.mxu0 0.0
        %2407 = vmatpush1.msra.mxu0 %v2381
        %2408 = vmatprep.subr.mxu0 0.0
        %2409 = vmatpush1.msra.mxu0 %v2382
        %2410 = vmatprep.subr.mxu0 0.0
        %2411 = vmatpush1.msra.mxu0 %v2383
        %2412 = vmatprep.subr.mxu0 0.0
        %2413 = vmatpush1.msra.mxu0 %v2384
        %2414 = vmatprep.subr.mxu0 0.0
        %2415 = vmatpush1.msra.mxu0 %v2385
        %2416 = vmatprep.subr.mxu0 0.0
        %2417 = vmatpush1.msra.mxu0 %v2386
        %2418 = vmatprep.subr.mxu0 0.0
        %2419 = vmatpush1.msra.mxu0 %v2387
        %2420 = vmatprep.subr.mxu0 0.0
        %2421 = vmatpush1.msra.mxu0 0.0
        %2422 = vmatprep.subr.mxu0 0.0
        %2423 = vmatpush1.msra.mxu0 0.0
        %2424 = vmatprep.subr.mxu0 0.0
        %2425 = vmatpush1.msra.mxu0 0.0
        %2426 = vmatprep.subr.mxu0 0.0
        %2427 = vmatpush1.msra.mxu0 0.0
        %2428 = vmatprep.subr.mxu0 0.0
        %2429 = vmatpush1.msra.mxu0 0.0
        %2430 = vmatprep.subr.mxu0 0.0
        %2431 = vmatpush1.msra.mxu0 0.0
        %2432 = vmatprep.subr.mxu0 0.0
        %2433 = vmatpush1.msra.mxu0 0.0
        %2434 = vmatprep.subr.mxu0 0.0
        %2435 = vmatpush1.msra.mxu0 0.0
        %2436 = vmatprep.subr.mxu0 0.0
        %2437 = vmatpush1.msra.mxu0 0.0
        %2438 = vmatprep.subr.mxu0 0.0
        %2439 = vmatpush1.msra.mxu0 0.0
        %2440 = vmatprep.subr.mxu0 0.0
        %2441 = vmatpush1.msra.mxu0 0.0
        %2442 = vmatprep.subr.mxu0 0.0
        %2443 = vmatpush1.msra.mxu0 0.0
        %2444 = vmatprep.subr.mxu0 0.0
        %2445 = vmatpush1.msra.mxu0 0.0
        %2446 = vmatprep.subr.mxu0 0.0
        %2447 = vmatpush1.msra.mxu0 0.0
        %2448 = vmatprep.subr.mxu0 0.0
        %2449 = vmatpush1.msra.mxu0 0.0
        %2450 = vmatprep.subr.mxu0 0.0
        %2451 = vmatpush1.msra.mxu0 0.0
        %2452 = vmatprep.mubr.f32.mxu0 0.0
        %2453 = vmatmul.mubr.f32.gmra.mrb[0].mxu0 %v2351
        %v2454 = vpop.f32.mrb[0].mxu0
        %v2455 = vadd.f32 0.0, %v2454
        %v2456 = vpop.f32.mrb[0].mxu0
        %2457 = vmatprep.mubr.f32.mxu0 0.0
        %2458 = vmatmul.mubr.f32.gmra.mrb[0].mxu0 %v2352
        %v2459 = vpop.f32.mrb[0].mxu0
        %v2460 = vadd.f32 0.0, %v2459
        %v2461 = vpop.f32.mrb[0].mxu0
        %2462 = vmatprep.mubr.f32.mxu0 0.0
        %2463 = vmatmul.mubr.f32.gmra.mrb[0].mxu0 %v2353
        %v2464 = vpop.f32.mrb[0].mxu0
        %v2465 = vadd.f32 0.0, %v2464
        %v2466 = vpop.f32.mrb[0].mxu0
        %2467 = vmatprep.mubr.f32.mxu0 0.0
        %2468 = vmatmul.mubr.f32.gmra.mrb[0].mxu0 %v2354
        %v2469 = vpop.f32.mrb[0].mxu0
        %v2470 = vadd.f32 0.0, %v2469
        %v2471 = vpop.f32.mrb[0].mxu0
        %2472 = vmatprep.mubr.f32.mxu0 0.0
        %2473 = vmatmul.mubr.f32.gmra.mrb[0].mxu0 %v2355
        %v2474 = vpop.f32.mrb[0].mxu0
        %v2475 = vadd.f32 0.0, %v2474
        %v2476 = vpop.f32.mrb[0].mxu0
        %2477 = vmatprep.mubr.f32.mxu0 0.0
        %2478 = vmatmul.mubr.f32.gmra.mrb[0].mxu0 %v2356
        %v2479 = vpop.f32.mrb[0].mxu0
        %v2480 = vadd.f32 0.0, %v2479
        %v2481 = vpop.f32.mrb[0].mxu0
        %2482 = vmatprep.mubr.f32.mxu0 0.0
        %2483 = vmatmul.mubr.f32.gmra.mrb[0].mxu0 %v2357
        %v2484 = vpop.f32.mrb[0].mxu0
        %v2485 = vadd.f32 0.0, %v2484
        %v2486 = vpop.f32.mrb[0].mxu0
        %2487 = vmatprep.mubr.f32.mxu0 0.0
        %2488 = vmatmul.mubr.f32.gmra.mrb[0].mxu0 %v2358
        %v2489 = vpop.f32.mrb[0].mxu0
        %v2490 = vadd.f32 0.0, %v2489
        %v2491 = vpop.f32.mrb[0].mxu0
        %2492 = vmatprep.mubr.f32.mxu0 0.0
        %2493 = vmatmul.mubr.f32.gmra.mrb[0].mxu0 %v2359
        %v2494 = vpop.f32.mrb[0].mxu0
        %v2495 = vadd.f32 0.0, %v2494
        %v2496 = vpop.f32.mrb[0].mxu0
        %2497 = vmatprep.mubr.f32.mxu0 0.0
        %2498 = vmatmul.mubr.f32.gmra.mrb[0].mxu0 %v2360
        %v2499 = vpop.f32.mrb[0].mxu0
        %v2500 = vadd.f32 0.0, %v2499
        %v2501 = vpop.f32.mrb[0].mxu0
        %2502 = vmatprep.mubr.f32.mxu0 0.0
        %2503 = vmatmul.mubr.f32.gmra.mrb[0].mxu0 %v2361
        %v2504 = vpop.f32.mrb[0].mxu0
        %v2505 = vadd.f32 0.0, %v2504
        %v2506 = vpop.f32.mrb[0].mxu0
        %2507 = vmatprep.mubr.f32.mxu0 0.0
        %2508 = vmatmul.mubr.f32.gmra.mrb[0].mxu0 %v2362
        %v2509 = vpop.f32.mrb[0].mxu0
        %v2510 = vadd.f32 0.0, %v2509
        %v2511 = vpop.f32.mrb[0].mxu0
        %2512 = vmatprep.mubr.f32.mxu0 0.0
        %2513 = vmatmul.mubr.f32.gmra.mrb[0].mxu0 %v2363
        %v2514 = vpop.f32.mrb[0].mxu0
        %v2515 = vadd.f32 0.0, %v2514
        %v2516 = vpop.f32.mrb[0].mxu0
        %2517 = vmatprep.mubr.f32.mxu0 0.0
        %2518 = vmatmul.mubr.f32.gmra.mrb[0].mxu0 %v2364
        %v2519 = vpop.f32.mrb[0].mxu0
        %v2520 = vadd.f32 0.0, %v2519
        %v2521 = vpop.f32.mrb[0].mxu0
        %2522 = vmatprep.mubr.f32.mxu0 0.0
        %2523 = vmatmul.mubr.f32.gmra.mrb[0].mxu0 %v2365
        %v2524 = vpop.f32.mrb[0].mxu0
        %v2525 = vadd.f32 0.0, %v2524
        %v2526 = vpop.f32.mrb[0].mxu0
        %2527 = vmatprep.mubr.f32.mxu0 0.0
        %2528 = vmatmul.mubr.f32.gmra.mrb[0].mxu0 %v2366
        %v2529 = vpop.f32.mrb[0].mxu0
        %v2530 = vadd.f32 0.0, %v2529
        %v2531 = vpop.f32.mrb[0].mxu0
        %2532 = vmatprep.mubr.f32.mxu0 0.0
        %2533 = vmatmul.mubr.f32.gmra.mrb[0].mxu0 %v2367
        %v2534 = vpop.f32.mrb[0].mxu0
        %v2535 = vadd.f32 0.0, %v2534
        %v2536 = vpop.f32.mrb[0].mxu0
        %2537 = vmatprep.mubr.f32.mxu0 0.0
        %2538 = vmatmul.mubr.f32.gmra.mrb[0].mxu0 %v2368
        %v2539 = vpop.f32.mrb[0].mxu0
        %v2540 = vadd.f32 0.0, %v2539
        %v2541 = vpop.f32.mrb[0].mxu0
        %2542 = vmatprep.mubr.f32.mxu0 0.0
        %2543 = vmatmul.mubr.f32.gmra.mrb[0].mxu0 %v2369
        %v2544 = vpop.f32.mrb[0].mxu0
        %v2545 = vadd.f32 0.0, %v2544
        %v2546 = vpop.f32.mrb[0].mxu0
        %2547 = vmatprep.mubr.f32.mxu0 0.0
        %2548 = vmatmul.mubr.f32.gmra.mrb[0].mxu0 %v2370
        %v2549 = vpop.f32.mrb[0].mxu0
        %v2550 = vadd.f32 0.0, %v2549
        %v2551 = vpop.f32.mrb[0].mxu0
        %2552 = vdwg.mxu0
        %v2553 = vld [vmem:[#allocation2] sm:$0xff]
        %v2554 = vld [vmem:[#allocation2 + $0x8] sm:$0xff]
        %v2555 = vld [vmem:[#allocation2 + $0x10] sm:$0xff]
        %v2556 = vld [vmem:[#allocation2 + $0x18] sm:$0xff]
        %v2557 = vld [vmem:[#allocation2 + $0x20] sm:$0xff]
        %v2558 = vld [vmem:[#allocation2 + $0x28] sm:$0xff]
        %v2559 = vld [vmem:[#allocation2 + $0x30] sm:$0xff]
        %v2560 = vld [vmem:[#allocation2 + $0x38] sm:$0xff]
        %v2561 = vld [vmem:[#allocation2 + $0x40] sm:$0xff]
        %v2562 = vld [vmem:[#allocation2 + $0x48] sm:$0xff]
        %v2563 = vld [vmem:[#allocation2 + $0x50] sm:$0xff]
        %v2564 = vld [vmem:[#allocation2 + $0x58] sm:$0xff]
        %v2565 = vld [vmem:[#allocation2 + $0x60] sm:$0xff]
        %v2566 = vld [vmem:[#allocation2 + $0x68] sm:$0xff]
        %v2567 = vld [vmem:[#allocation2 + $0x70] sm:$0xff]
        %v2568 = vld [vmem:[#allocation2 + $0x78] sm:$0xff]
        %v2569 = vld [vmem:[#allocation2 + $0x80] sm:$0xff]
        %v2570 = vld [vmem:[#allocation2 + $0x88] sm:$0xff]
        %v2571 = vld [vmem:[#allocation2 + $0x90] sm:$0xff]
        %v2572 = vld [vmem:[#allocation2 + $0x98] sm:$0xff]
        %v2573 = vadd.f32 %v2553, %v2455
        %v2574 = vadd.f32 %v2554, %v2460
        %v2575 = vadd.f32 %v2555, %v2465
        %v2576 = vadd.f32 %v2556, %v2470
        %v2577 = vadd.f32 %v2557, %v2475
        %v2578 = vadd.f32 %v2558, %v2480
        %v2579 = vadd.f32 %v2559, %v2485
        %v2580 = vadd.f32 %v2560, %v2490
        %v2581 = vadd.f32 %v2561, %v2495
        %v2582 = vadd.f32 %v2562, %v2500
        %v2583 = vadd.f32 %v2563, %v2505
        %v2584 = vadd.f32 %v2564, %v2510
        %v2585 = vadd.f32 %v2565, %v2515
        %v2586 = vadd.f32 %v2566, %v2520
        %v2587 = vadd.f32 %v2567, %v2525
        %v2588 = vadd.f32 %v2568, %v2530
        %v2589 = vadd.f32 %v2569, %v2535
        %v2590 = vadd.f32 %v2570, %v2540
        %v2591 = vadd.f32 %v2571, %v2545
        %v2592 = vadd.f32 %v2572, %v2550
        %2593 = vst [vmem:[#allocation2] sm:$0xff] %v2573
        %2594 = vst [vmem:[#allocation2 + $0x8] sm:$0xff] %v2574
        %2595 = vst [vmem:[#allocation2 + $0x10] sm:$0xff] %v2575
        %2596 = vst [vmem:[#allocation2 + $0x18] sm:$0xff] %v2576
        %2597 = vst [vmem:[#allocation2 + $0x20] sm:$0xff] %v2577
        %2598 = vst [vmem:[#allocation2 + $0x28] sm:$0xff] %v2578
        %2599 = vst [vmem:[#allocation2 + $0x30] sm:$0xff] %v2579
        %2600 = vst [vmem:[#allocation2 + $0x38] sm:$0xff] %v2580
        %2601 = vst [vmem:[#allocation2 + $0x40] sm:$0xff] %v2581
        %2602 = vst [vmem:[#allocation2 + $0x48] sm:$0xff] %v2582
        %2603 = vst [vmem:[#allocation2 + $0x50] sm:$0xff] %v2583
        %2604 = vst [vmem:[#allocation2 + $0x58] sm:$0xff] %v2584
        %2605 = vst [vmem:[#allocation2 + $0x60] sm:$0xff] %v2585
        %2606 = vst [vmem:[#allocation2 + $0x68] sm:$0xff] %v2586
        %2607 = vst [vmem:[#allocation2 + $0x70] sm:$0xff] %v2587
        %2608 = vst [vmem:[#allocation2 + $0x78] sm:$0xff] %v2588
        %2609 = vst [vmem:[#allocation2 + $0x80] sm:$0xff] %v2589
        %2610 = vst [vmem:[#allocation2 + $0x88] sm:$0xff] %v2590
        %2611 = vst [vmem:[#allocation2 + $0x90] sm:$0xff] %v2591
        %2612 = vst [vmem:[#allocation2 + $0x98] sm:$0xff] %v2592
        %v2613 = vld [vmem:[#allocation2] sm:$0xff]
        %v2614 = vld [vmem:[#allocation2 + $0x8] sm:$0xff]
        %v2615 = vld [vmem:[#allocation2 + $0x10] sm:$0xff]
        %v2616 = vld [vmem:[#allocation2 + $0x18] sm:$0xff]
        %v2617 = vld [vmem:[#allocation2 + $0x20] sm:$0xff]
        %v2618 = vld [vmem:[#allocation2 + $0x28] sm:$0xff]
        %v2619 = vld [vmem:[#allocation2 + $0x30] sm:$0xff]
        %v2620 = vld [vmem:[#allocation2 + $0x38] sm:$0xff]
        %v2621 = vld [vmem:[#allocation2 + $0x40] sm:$0xff]
        %v2622 = vld [vmem:[#allocation2 + $0x48] sm:$0xff]
        %v2623 = vld [vmem:[#allocation2 + $0x50] sm:$0xff]
        %v2624 = vld [vmem:[#allocation2 + $0x58] sm:$0xff]
        %v2625 = vld [vmem:[#allocation2 + $0x60] sm:$0xff]
        %v2626 = vld [vmem:[#allocation2 + $0x68] sm:$0xff]
        %v2627 = vld [vmem:[#allocation2 + $0x70] sm:$0xff]
        %v2628 = vld [vmem:[#allocation2 + $0x78] sm:$0xff]
        %v2629 = vld [vmem:[#allocation2 + $0x80] sm:$0xff]
        %v2630 = vld [vmem:[#allocation2 + $0x88] sm:$0xff]
        %v2631 = vld [vmem:[#allocation2 + $0x90] sm:$0xff]
        %v2632 = vld [vmem:[#allocation2 + $0x98] sm:$0xff]
        %v2633 = vld [vmem:[%s2] sm:$0x1]
        %v2635 = vlaneseq
        %v2636 = vshrl.u32 %v2635, 7
        %v2637 = vsub.s32 0, %v2636
        %v2638 = vrot.slane %v2633, %v2637
        %v2640 = vadd.f32 %v2613, %v2638
        %v2641 = vadd.f32 %v2614, %v2638
        %v2642 = vadd.f32 %v2615, %v2638
        %v2643 = vadd.f32 %v2616, %v2638
        %v2644 = vadd.f32 %v2617, %v2638
        %v2645 = vadd.f32 %v2618, %v2638
        %v2646 = vadd.f32 %v2619, %v2638
        %v2647 = vadd.f32 %v2620, %v2638
        %v2648 = vadd.f32 %v2621, %v2638
        %v2649 = vadd.f32 %v2622, %v2638
        %v2650 = vadd.f32 %v2623, %v2638
        %v2651 = vadd.f32 %v2624, %v2638
        %v2652 = vadd.f32 %v2625, %v2638
        %v2653 = vadd.f32 %v2626, %v2638
        %v2654 = vadd.f32 %v2627, %v2638
        %v2655 = vadd.f32 %v2628, %v2638
        %v2656 = vadd.f32 %v2629, %v2638
        %v2657 = vadd.f32 %v2630, %v2638
        %v2658 = vadd.f32 %v2631, %v2638
        %v2659 = vadd.f32 %v2632, %v2638
        %v2660 = vmax.f32 %v2640, 0.0
        %v2661 = vmax.f32 %v2641, 0.0
        %v2662 = vmax.f32 %v2642, 0.0
        %v2663 = vmax.f32 %v2643, 0.0
        %v2664 = vmax.f32 %v2644, 0.0
        %v2665 = vmax.f32 %v2645, 0.0
        %v2666 = vmax.f32 %v2646, 0.0
        %v2667 = vmax.f32 %v2647, 0.0
        %v2668 = vmax.f32 %v2648, 0.0
        %v2669 = vmax.f32 %v2649, 0.0
        %v2670 = vmax.f32 %v2650, 0.0
        %v2671 = vmax.f32 %v2651, 0.0
        %v2672 = vmax.f32 %v2652, 0.0
        %v2673 = vmax.f32 %v2653, 0.0
        %v2674 = vmax.f32 %v2654, 0.0
        %v2675 = vmax.f32 %v2655, 0.0
        %v2676 = vmax.f32 %v2656, 0.0
        %v2677 = vmax.f32 %v2657, 0.0
        %v2678 = vmax.f32 %v2658, 0.0
        %v2679 = vmax.f32 %v2659, 0.0
        %2680 = vst [vmem:[#allocation3] sm:$0xff] 0.0
        %2681 = vst [vmem:[#allocation3 + $0x20] sm:$0xff] 0.0
        %2682 = vst [vmem:[#allocation3 + $0x40] sm:$0xff] 0.0
        %2683 = vst [vmem:[#allocation3 + $0x60] sm:$0xff] 0.0
        %2684 = vst [vmem:[#allocation3 + $0x80] sm:$0xff] 0.0
        %2685 = vst [vmem:[#allocation3 + $0xa0] sm:$0xff] 0.0
        %2686 = vst [vmem:[#allocation3 + $0xc0] sm:$0xff] 0.0
        %2687 = vst [vmem:[#allocation3 + $0xe0] sm:$0xff] 0.0
        %2688 = vst [vmem:[#allocation3 + $0x100] sm:$0xff] 0.0
        %2689 = vst [vmem:[#allocation3 + $0x120] sm:$0xff] 0.0
        %2690 = vst [vmem:[#allocation3 + $0x18] sm:$0xff] 0.0
        %2691 = vst [vmem:[#allocation3 + $0x38] sm:$0xff] 0.0
        %2692 = vst [vmem:[#allocation3 + $0x58] sm:$0xff] 0.0
        %2693 = vst [vmem:[#allocation3 + $0x78] sm:$0xff] 0.0
        %2694 = vst [vmem:[#allocation3 + $0x98] sm:$0xff] 0.0
        %2695 = vst [vmem:[#allocation3 + $0xb8] sm:$0xff] 0.0
        %2696 = vst [vmem:[#allocation3 + $0xd8] sm:$0xff] 0.0
        %2697 = vst [vmem:[#allocation3 + $0xf8] sm:$0xff] 0.0
        %2698 = vst [vmem:[#allocation3 + $0x118] sm:$0xff] 0.0
        %2699 = vst [vmem:[#allocation3 + $0x138] sm:$0xff] 0.0
        %2700 = vst [vmem:[#allocation3 + $0x8] sm:$0xff] %v2660
        %2701 = vst [vmem:[#allocation3 + $0x10] sm:$0xff] %v2661
        %2702 = vst [vmem:[#allocation3 + $0x28] sm:$0xff] %v2662
        %2703 = vst [vmem:[#allocation3 + $0x30] sm:$0xff] %v2663
        %2704 = vst [vmem:[#allocation3 + $0x48] sm:$0xff] %v2664
        %2705 = vst [vmem:[#allocation3 + $0x50] sm:$0xff] %v2665
        %2706 = vst [vmem:[#allocation3 + $0x68] sm:$0xff] %v2666
        %2707 = vst [vmem:[#allocation3 + $0x70] sm:$0xff] %v2667
        %2708 = vst [vmem:[#allocation3 + $0x88] sm:$0xff] %v2668
        %2709 = vst [vmem:[#allocation3 + $0x90] sm:$0xff] %v2669
        %2710 = vst [vmem:[#allocation3 + $0xa8] sm:$0xff] %v2670
        %2711 = vst [vmem:[#allocation3 + $0xb0] sm:$0xff] %v2671
        %2712 = vst [vmem:[#allocation3 + $0xc8] sm:$0xff] %v2672
        %2713 = vst [vmem:[#allocation3 + $0xd0] sm:$0xff] %v2673
        %2714 = vst [vmem:[#allocation3 + $0xe8] sm:$0xff] %v2674
        %2715 = vst [vmem:[#allocation3 + $0xf0] sm:$0xff] %v2675
        %2716 = vst [vmem:[#allocation3 + $0x108] sm:$0xff] %v2676
        %2717 = vst [vmem:[#allocation3 + $0x110] sm:$0xff] %v2677
        %2718 = vst [vmem:[#allocation3 + $0x128] sm:$0xff] %v2678
        %2719 = vst [vmem:[#allocation3 + $0x130] sm:$0xff] %v2679
        %p2720 = scmp.eq.s32.totalorder %s28, 0
        // Predicated region
        $region53: #{tpu_custom_call.1} parent=39 // pred_check
          %p2721 = pneg %p2720
        $region54: #{tpu_custom_call.1} parent=39 // pred_check_branch
          %2723 = sbr.rel (%p2721) target = $region56
        $region55: #{tpu_custom_call.1} parent=39 // pred_region
          %2724 = vst [vmem:[#allocation3] sm:$0xff] 0.0
          %2725 = vst [vmem:[#allocation3 + $0x8] sm:$0xff] 0.0
          %2726 = vst [vmem:[#allocation3 + $0x10] sm:$0xff] 0.0
          %2727 = vst [vmem:[#allocation3 + $0x18] sm:$0xff] 0.0
        $region56: #{tpu_custom_call.1} parent=39 // pred_fallthru
          _
        %p2728 = scmp.eq.s32.totalorder %s28, 1
        // Predicated region
        $region57: #{tpu_custom_call.1} parent=39 // pred_check
          %p2729 = pneg %p2728
        $region58: #{tpu_custom_call.1} parent=39 // pred_check_branch
          %2731 = sbr.rel (%p2729) target = $region60
        $region59: #{tpu_custom_call.1} parent=39 // pred_region
          %s2732 = scalar_lea.vmem [#allocation3], 288
          %2733 = vst [vmem:[%s2732] sm:$0xff] 0.0
          %2734 = vst [vmem:[%s2732 + $0x8] sm:$0xff] 0.0
          %2735 = vst [vmem:[%s2732 + $0x10] sm:$0xff] 0.0
          %2736 = vst [vmem:[%s2732 + $0x18] sm:$0xff] 0.0
        $region60: #{tpu_custom_call.1} parent=39 // pred_fallthru
          _
        %v2737 = vld [vmem:[#allocation3 + $0x7] sm:$0xff]
        %v2738 = vld [vmem:[#allocation3 + $0xf] sm:$0xff]
        %v2739 = vld [vmem:[#allocation3 + $0x27] sm:$0xff]
        %v2740 = vld [vmem:[#allocation3 + $0x2f] sm:$0xff]
        %v2741 = vld [vmem:[#allocation3 + $0x47] sm:$0xff]
        %v2742 = vld [vmem:[#allocation3 + $0x4f] sm:$0xff]
        %v2743 = vld [vmem:[#allocation3 + $0x67] sm:$0xff]
        %v2744 = vld [vmem:[#allocation3 + $0x6f] sm:$0xff]
        %v2745 = vld [vmem:[#allocation3 + $0x87] sm:$0xff]
        %v2746 = vld [vmem:[#allocation3 + $0x8f] sm:$0xff]
        %v2747 = vld [vmem:[#allocation3 + $0xa7] sm:$0xff]
        %v2748 = vld [vmem:[#allocation3 + $0xaf] sm:$0xff]
        %v2749 = vld [vmem:[#allocation3 + $0xc7] sm:$0xff]
        %v2750 = vld [vmem:[#allocation3 + $0xcf] sm:$0xff]
        %v2751 = vld [vmem:[#allocation3 + $0xe7] sm:$0xff]
        %v2752 = vld [vmem:[#allocation3 + $0xef] sm:$0xff]
        %v2753 = vld [vmem:[#allocation9] sm:$0xff]
        %v2754 = vld [vmem:[#allocation9 + $0x8] sm:$0xff]
        %v2755 = vld [vmem:[#allocation9 + $0x10] sm:$0xff]
        %v2756 = vld [vmem:[#allocation9 + $0x18] sm:$0xff]
        %v2757 = vld [vmem:[#allocation9 + $0x20] sm:$0xff]
        %v2758 = vld [vmem:[#allocation9 + $0x28] sm:$0xff]
        %v2759 = vld [vmem:[#allocation9 + $0x30] sm:$0xff]
        %v2760 = vld [vmem:[#allocation9 + $0x38] sm:$0xff]
        %v2761 = vld [vmem:[#allocation9 + $0x40] sm:$0xff]
        %v2762 = vld [vmem:[#allocation9 + $0x48] sm:$0xff]
        %v2763 = vld [vmem:[#allocation9 + $0x50] sm:$0xff]
        %v2764 = vld [vmem:[#allocation9 + $0x58] sm:$0xff]
        %v2765 = vld [vmem:[#allocation9 + $0x60] sm:$0xff]
        %v2766 = vld [vmem:[#allocation9 + $0x68] sm:$0xff]
        %v2767 = vld [vmem:[#allocation9 + $0x70] sm:$0xff]
        %v2768 = vld [vmem:[#allocation9 + $0x78] sm:$0xff]
        %2769 = vmatprep.subr.mxu0 0.0
        %2770 = vmatpush1.msra.mxu0 %v2753
        %2771 = vmatprep.subr.mxu0 0.0
        %2772 = vmatpush1.msra.mxu0 %v2754
        %2773 = vmatprep.subr.mxu0 0.0
        %2774 = vmatpush1.msra.mxu0 %v2755
        %2775 = vmatprep.subr.mxu0 0.0
        %2776 = vmatpush1.msra.mxu0 %v2756
        %2777 = vmatprep.subr.mxu0 0.0
        %2778 = vmatpush1.msra.mxu0 %v2757
        %2779 = vmatprep.subr.mxu0 0.0
        %2780 = vmatpush1.msra.mxu0 %v2758
        %2781 = vmatprep.subr.mxu0 0.0
        %2782 = vmatpush1.msra.mxu0 %v2759
        %2783 = vmatprep.subr.mxu0 0.0
        %2784 = vmatpush1.msra.mxu0 %v2760
        %2785 = vmatprep.subr.mxu0 0.0
        %2786 = vmatpush1.msra.mxu0 %v2761
        %2787 = vmatprep.subr.mxu0 0.0
        %2788 = vmatpush1.msra.mxu0 %v2762
        %2789 = vmatprep.subr.mxu0 0.0
        %2790 = vmatpush1.msra.mxu0 %v2763
        %2791 = vmatprep.subr.mxu0 0.0
        %2792 = vmatpush1.msra.mxu0 %v2764
        %2793 = vmatprep.subr.mxu0 0.0
        %2794 = vmatpush1.msra.mxu0 %v2765
        %2795 = vmatprep.subr.mxu0 0.0
        %2796 = vmatpush1.msra.mxu0 %v2766
        %2797 = vmatprep.subr.mxu0 0.0
        %2798 = vmatpush1.msra.mxu0 %v2767
        %2799 = vmatprep.subr.mxu0 0.0
        %2800 = vmatpush1.msra.mxu0 %v2768
        %2801 = vmatprep.subr.mxu0 0.0
        %2802 = vmatpush1.msra.mxu0 0.0
        %2803 = vmatprep.subr.mxu0 0.0
        %2804 = vmatpush1.msra.mxu0 0.0
        %2805 = vmatprep.subr.mxu0 0.0
        %2806 = vmatpush1.msra.mxu0 0.0
        %2807 = vmatprep.subr.mxu0 0.0
        %2808 = vmatpush1.msra.mxu0 0.0
        %2809 = vmatprep.subr.mxu0 0.0
        %2810 = vmatpush1.msra.mxu0 0.0
        %2811 = vmatprep.subr.mxu0 0.0
        %2812 = vmatpush1.msra.mxu0 0.0
        %2813 = vmatprep.subr.mxu0 0.0
        %2814 = vmatpush1.msra.mxu0 0.0
        %2815 = vmatprep.subr.mxu0 0.0
        %2816 = vmatpush1.msra.mxu0 0.0
        %2817 = vmatprep.subr.mxu0 0.0
        %2818 = vmatpush1.msra.mxu0 0.0
        %2819 = vmatprep.subr.mxu0 0.0
        %2820 = vmatpush1.msra.mxu0 0.0
        %2821 = vmatprep.subr.mxu0 0.0
        %2822 = vmatpush1.msra.mxu0 0.0
        %2823 = vmatprep.subr.mxu0 0.0
        %2824 = vmatpush1.msra.mxu0 0.0
        %2825 = vmatprep.subr.mxu0 0.0
        %2826 = vmatpush1.msra.mxu0 0.0
        %2827 = vmatprep.subr.mxu0 0.0
        %2828 = vmatpush1.msra.mxu0 0.0
        %2829 = vmatprep.subr.mxu0 0.0
        %2830 = vmatpush1.msra.mxu0 0.0
        %2831 = vmatprep.subr.mxu0 0.0
        %2832 = vmatpush1.msra.mxu0 0.0
        %2833 = vmatprep.mubr.f32.mxu0 0.0
        %2834 = vmatmul.mubr.f32.gmra.mrb[0].mxu0 %v2737
        %v2835 = vpop.f32.mrb[0].mxu0
        %v2836 = vadd.f32 0.0, %v2835
        %v2837 = vpop.f32.mrb[0].mxu0
        %2838 = vmatprep.mubr.f32.mxu0 0.0
        %2839 = vmatmul.mubr.f32.gmra.mrb[0].mxu0 %v2738
        %v2840 = vpop.f32.mrb[0].mxu0
        %v2841 = vadd.f32 0.0, %v2840
        %v2842 = vpop.f32.mrb[0].mxu0
        %2843 = vmatprep.mubr.f32.mxu0 0.0
        %2844 = vmatmul.mubr.f32.gmra.mrb[0].mxu0 %v2739
        %v2845 = vpop.f32.mrb[0].mxu0
        %v2846 = vadd.f32 0.0, %v2845
        %v2847 = vpop.f32.mrb[0].mxu0
        %2848 = vmatprep.mubr.f32.mxu0 0.0
        %2849 = vmatmul.mubr.f32.gmra.mrb[0].mxu0 %v2740
        %v2850 = vpop.f32.mrb[0].mxu0
        %v2851 = vadd.f32 0.0, %v2850
        %v2852 = vpop.f32.mrb[0].mxu0
        %2853 = vmatprep.mubr.f32.mxu0 0.0
        %2854 = vmatmul.mubr.f32.gmra.mrb[0].mxu0 %v2741
        %v2855 = vpop.f32.mrb[0].mxu0
        %v2856 = vadd.f32 0.0, %v2855
        %v2857 = vpop.f32.mrb[0].mxu0
        %2858 = vmatprep.mubr.f32.mxu0 0.0
        %2859 = vmatmul.mubr.f32.gmra.mrb[0].mxu0 %v2742
        %v2860 = vpop.f32.mrb[0].mxu0
        %v2861 = vadd.f32 0.0, %v2860
        %v2862 = vpop.f32.mrb[0].mxu0
        %2863 = vmatprep.mubr.f32.mxu0 0.0
        %2864 = vmatmul.mubr.f32.gmra.mrb[0].mxu0 %v2743
        %v2865 = vpop.f32.mrb[0].mxu0
        %v2866 = vadd.f32 0.0, %v2865
        %v2867 = vpop.f32.mrb[0].mxu0
        %2868 = vmatprep.mubr.f32.mxu0 0.0
        %2869 = vmatmul.mubr.f32.gmra.mrb[0].mxu0 %v2744
        %v2870 = vpop.f32.mrb[0].mxu0
        %v2871 = vadd.f32 0.0, %v2870
        %v2872 = vpop.f32.mrb[0].mxu0
        %2873 = vmatprep.mubr.f32.mxu0 0.0
        %2874 = vmatmul.mubr.f32.gmra.mrb[0].mxu0 %v2745
        %v2875 = vpop.f32.mrb[0].mxu0
        %v2876 = vadd.f32 0.0, %v2875
        %v2877 = vpop.f32.mrb[0].mxu0
        %2878 = vmatprep.mubr.f32.mxu0 0.0
        %2879 = vmatmul.mubr.f32.gmra.mrb[0].mxu0 %v2746
        %v2880 = vpop.f32.mrb[0].mxu0
        %v2881 = vadd.f32 0.0, %v2880
        %v2882 = vpop.f32.mrb[0].mxu0
        %2883 = vmatprep.mubr.f32.mxu0 0.0
        %2884 = vmatmul.mubr.f32.gmra.mrb[0].mxu0 %v2747
        %v2885 = vpop.f32.mrb[0].mxu0
        %v2886 = vadd.f32 0.0, %v2885
        %v2887 = vpop.f32.mrb[0].mxu0
        %2888 = vmatprep.mubr.f32.mxu0 0.0
        %2889 = vmatmul.mubr.f32.gmra.mrb[0].mxu0 %v2748
        %v2890 = vpop.f32.mrb[0].mxu0
        %v2891 = vadd.f32 0.0, %v2890
        %v2892 = vpop.f32.mrb[0].mxu0
        %2893 = vmatprep.mubr.f32.mxu0 0.0
        %2894 = vmatmul.mubr.f32.gmra.mrb[0].mxu0 %v2749
        %v2895 = vpop.f32.mrb[0].mxu0
        %v2896 = vadd.f32 0.0, %v2895
        %v2897 = vpop.f32.mrb[0].mxu0
        %2898 = vmatprep.mubr.f32.mxu0 0.0
        %2899 = vmatmul.mubr.f32.gmra.mrb[0].mxu0 %v2750
        %v2900 = vpop.f32.mrb[0].mxu0
        %v2901 = vadd.f32 0.0, %v2900
        %v2902 = vpop.f32.mrb[0].mxu0
        %2903 = vmatprep.mubr.f32.mxu0 0.0
        %2904 = vmatmul.mubr.f32.gmra.mrb[0].mxu0 %v2751
        %v2905 = vpop.f32.mrb[0].mxu0
        %v2906 = vadd.f32 0.0, %v2905
        %v2907 = vpop.f32.mrb[0].mxu0
        %2908 = vmatprep.mubr.f32.mxu0 0.0
        %2909 = vmatmul.mubr.f32.gmra.mrb[0].mxu0 %v2752
        %v2910 = vpop.f32.mrb[0].mxu0
        %v2911 = vadd.f32 0.0, %v2910
        %v2912 = vpop.f32.mrb[0].mxu0
        %2913 = vdwg.mxu0
        %2914 = vst [vmem:[#allocation2] sm:$0xff] %v2836
        %2915 = vst [vmem:[#allocation2 + $0x8] sm:$0xff] %v2841
        %2916 = vst [vmem:[#allocation2 + $0x10] sm:$0xff] %v2846
        %2917 = vst [vmem:[#allocation2 + $0x18] sm:$0xff] %v2851
        %2918 = vst [vmem:[#allocation2 + $0x20] sm:$0xff] %v2856
        %2919 = vst [vmem:[#allocation2 + $0x28] sm:$0xff] %v2861
        %2920 = vst [vmem:[#allocation2 + $0x30] sm:$0xff] %v2866
        %2921 = vst [vmem:[#allocation2 + $0x38] sm:$0xff] %v2871
        %2922 = vst [vmem:[#allocation2 + $0x40] sm:$0xff] %v2876
        %2923 = vst [vmem:[#allocation2 + $0x48] sm:$0xff] %v2881
        %2924 = vst [vmem:[#allocation2 + $0x50] sm:$0xff] %v2886
        %2925 = vst [vmem:[#allocation2 + $0x58] sm:$0xff] %v2891
        %2926 = vst [vmem:[#allocation2 + $0x60] sm:$0xff] %v2896
        %2927 = vst [vmem:[#allocation2 + $0x68] sm:$0xff] %v2901
        %2928 = vst [vmem:[#allocation2 + $0x70] sm:$0xff] %v2906
        %2929 = vst [vmem:[#allocation2 + $0x78] sm:$0xff] %v2911
        %v2930 = vld [vmem:[#allocation3 + $0x8] sm:$0xff]
        %v2931 = vld [vmem:[#allocation3 + $0x10] sm:$0xff]
        %v2932 = vld [vmem:[#allocation3 + $0x28] sm:$0xff]
        %v2933 = vld [vmem:[#allocation3 + $0x30] sm:$0xff]
        %v2934 = vld [vmem:[#allocation3 + $0x48] sm:$0xff]
        %v2935 = vld [vmem:[#allocation3 + $0x50] sm:$0xff]
        %v2936 = vld [vmem:[#allocation3 + $0x68] sm:$0xff]
        %v2937 = vld [vmem:[#allocation3 + $0x70] sm:$0xff]
        %v2938 = vld [vmem:[#allocation3 + $0x88] sm:$0xff]
        %v2939 = vld [vmem:[#allocation3 + $0x90] sm:$0xff]
        %v2940 = vld [vmem:[#allocation3 + $0xa8] sm:$0xff]
        %v2941 = vld [vmem:[#allocation3 + $0xb0] sm:$0xff]
        %v2942 = vld [vmem:[#allocation3 + $0xc8] sm:$0xff]
        %v2943 = vld [vmem:[#allocation3 + $0xd0] sm:$0xff]
        %v2944 = vld [vmem:[#allocation3 + $0xe8] sm:$0xff]
        %v2945 = vld [vmem:[#allocation3 + $0xf0] sm:$0xff]
        %s2946 = scalar_lea.vmem [#allocation9], 128
        %v2947 = vld [vmem:[%s2946] sm:$0xff]
        %v2948 = vld [vmem:[%s2946 + $0x8] sm:$0xff]
        %v2949 = vld [vmem:[%s2946 + $0x10] sm:$0xff]
        %v2950 = vld [vmem:[%s2946 + $0x18] sm:$0xff]
        %v2951 = vld [vmem:[%s2946 + $0x20] sm:$0xff]
        %v2952 = vld [vmem:[%s2946 + $0x28] sm:$0xff]
        %v2953 = vld [vmem:[%s2946 + $0x30] sm:$0xff]
        %v2954 = vld [vmem:[%s2946 + $0x38] sm:$0xff]
        %v2955 = vld [vmem:[%s2946 + $0x40] sm:$0xff]
        %v2956 = vld [vmem:[%s2946 + $0x48] sm:$0xff]
        %v2957 = vld [vmem:[%s2946 + $0x50] sm:$0xff]
        %v2958 = vld [vmem:[%s2946 + $0x58] sm:$0xff]
        %v2959 = vld [vmem:[%s2946 + $0x60] sm:$0xff]
        %v2960 = vld [vmem:[%s2946 + $0x68] sm:$0xff]
        %v2961 = vld [vmem:[%s2946 + $0x70] sm:$0xff]
        %v2962 = vld [vmem:[%s2946 + $0x78] sm:$0xff]
        %2963 = vmatprep.subr.mxu0 0.0
        %2964 = vmatpush1.msra.mxu0 %v2947
        %2965 = vmatprep.subr.mxu0 0.0
        %2966 = vmatpush1.msra.mxu0 %v2948
        %2967 = vmatprep.subr.mxu0 0.0
        %2968 = vmatpush1.msra.mxu0 %v2949
        %2969 = vmatprep.subr.mxu0 0.0
        %2970 = vmatpush1.msra.mxu0 %v2950
        %2971 = vmatprep.subr.mxu0 0.0
        %2972 = vmatpush1.msra.mxu0 %v2951
        %2973 = vmatprep.subr.mxu0 0.0
        %2974 = vmatpush1.msra.mxu0 %v2952
        %2975 = vmatprep.subr.mxu0 0.0
        %2976 = vmatpush1.msra.mxu0 %v2953
        %2977 = vmatprep.subr.mxu0 0.0
        %2978 = vmatpush1.msra.mxu0 %v2954
        %2979 = vmatprep.subr.mxu0 0.0
        %2980 = vmatpush1.msra.mxu0 %v2955
        %2981 = vmatprep.subr.mxu0 0.0
        %2982 = vmatpush1.msra.mxu0 %v2956
        %2983 = vmatprep.subr.mxu0 0.0
        %2984 = vmatpush1.msra.mxu0 %v2957
        %2985 = vmatprep.subr.mxu0 0.0
        %2986 = vmatpush1.msra.mxu0 %v2958
        %2987 = vmatprep.subr.mxu0 0.0
        %2988 = vmatpush1.msra.mxu0 %v2959
        %2989 = vmatprep.subr.mxu0 0.0
        %2990 = vmatpush1.msra.mxu0 %v2960
        %2991 = vmatprep.subr.mxu0 0.0
        %2992 = vmatpush1.msra.mxu0 %v2961
        %2993 = vmatprep.subr.mxu0 0.0
        %2994 = vmatpush1.msra.mxu0 %v2962
        %2995 = vmatprep.subr.mxu0 0.0
        %2996 = vmatpush1.msra.mxu0 0.0
        %2997 = vmatprep.subr.mxu0 0.0
        %2998 = vmatpush1.msra.mxu0 0.0
        %2999 = vmatprep.subr.mxu0 0.0
        %3000 = vmatpush1.msra.mxu0 0.0
        %3001 = vmatprep.subr.mxu0 0.0
        %3002 = vmatpush1.msra.mxu0 0.0
        %3003 = vmatprep.subr.mxu0 0.0
        %3004 = vmatpush1.msra.mxu0 0.0
        %3005 = vmatprep.subr.mxu0 0.0
        %3006 = vmatpush1.msra.mxu0 0.0
        %3007 = vmatprep.subr.mxu0 0.0
        %3008 = vmatpush1.msra.mxu0 0.0
        %3009 = vmatprep.subr.mxu0 0.0
        %3010 = vmatpush1.msra.mxu0 0.0
        %3011 = vmatprep.subr.mxu0 0.0
        %3012 = vmatpush1.msra.mxu0 0.0
        %3013 = vmatprep.subr.mxu0 0.0
        %3014 = vmatpush1.msra.mxu0 0.0
        %3015 = vmatprep.subr.mxu0 0.0
        %3016 = vmatpush1.msra.mxu0 0.0
        %3017 = vmatprep.subr.mxu0 0.0
        %3018 = vmatpush1.msra.mxu0 0.0
        %3019 = vmatprep.subr.mxu0 0.0
        %3020 = vmatpush1.msra.mxu0 0.0
        %3021 = vmatprep.subr.mxu0 0.0
        %3022 = vmatpush1.msra.mxu0 0.0
        %3023 = vmatprep.subr.mxu0 0.0
        %3024 = vmatpush1.msra.mxu0 0.0
        %3025 = vmatprep.subr.mxu0 0.0
        %3026 = vmatpush1.msra.mxu0 0.0
        %3027 = vmatprep.mubr.f32.mxu0 0.0
        %3028 = vmatmul.mubr.f32.gmra.mrb[0].mxu0 %v2930
        %v3029 = vpop.f32.mrb[0].mxu0
        %v3030 = vadd.f32 0.0, %v3029
        %v3031 = vpop.f32.mrb[0].mxu0
        %3032 = vmatprep.mubr.f32.mxu0 0.0
        %3033 = vmatmul.mubr.f32.gmra.mrb[0].mxu0 %v2931
        %v3034 = vpop.f32.mrb[0].mxu0
        %v3035 = vadd.f32 0.0, %v3034
        %v3036 = vpop.f32.mrb[0].mxu0
        %3037 = vmatprep.mubr.f32.mxu0 0.0
        %3038 = vmatmul.mubr.f32.gmra.mrb[0].mxu0 %v2932
        %v3039 = vpop.f32.mrb[0].mxu0
        %v3040 = vadd.f32 0.0, %v3039
        %v3041 = vpop.f32.mrb[0].mxu0
        %3042 = vmatprep.mubr.f32.mxu0 0.0
        %3043 = vmatmul.mubr.f32.gmra.mrb[0].mxu0 %v2933
        %v3044 = vpop.f32.mrb[0].mxu0
        %v3045 = vadd.f32 0.0, %v3044
        %v3046 = vpop.f32.mrb[0].mxu0
        %3047 = vmatprep.mubr.f32.mxu0 0.0
        %3048 = vmatmul.mubr.f32.gmra.mrb[0].mxu0 %v2934
        %v3049 = vpop.f32.mrb[0].mxu0
        %v3050 = vadd.f32 0.0, %v3049
        %v3051 = vpop.f32.mrb[0].mxu0
        %3052 = vmatprep.mubr.f32.mxu0 0.0
        %3053 = vmatmul.mubr.f32.gmra.mrb[0].mxu0 %v2935
        %v3054 = vpop.f32.mrb[0].mxu0
        %v3055 = vadd.f32 0.0, %v3054
        %v3056 = vpop.f32.mrb[0].mxu0
        %3057 = vmatprep.mubr.f32.mxu0 0.0
        %3058 = vmatmul.mubr.f32.gmra.mrb[0].mxu0 %v2936
        %v3059 = vpop.f32.mrb[0].mxu0
        %v3060 = vadd.f32 0.0, %v3059
        %v3061 = vpop.f32.mrb[0].mxu0
        %3062 = vmatprep.mubr.f32.mxu0 0.0
        %3063 = vmatmul.mubr.f32.gmra.mrb[0].mxu0 %v2937
        %v3064 = vpop.f32.mrb[0].mxu0
        %v3065 = vadd.f32 0.0, %v3064
        %v3066 = vpop.f32.mrb[0].mxu0
        %3067 = vmatprep.mubr.f32.mxu0 0.0
        %3068 = vmatmul.mubr.f32.gmra.mrb[0].mxu0 %v2938
        %v3069 = vpop.f32.mrb[0].mxu0
        %v3070 = vadd.f32 0.0, %v3069
        %v3071 = vpop.f32.mrb[0].mxu0
        %3072 = vmatprep.mubr.f32.mxu0 0.0
        %3073 = vmatmul.mubr.f32.gmra.mrb[0].mxu0 %v2939
        %v3074 = vpop.f32.mrb[0].mxu0
        %v3075 = vadd.f32 0.0, %v3074
        %v3076 = vpop.f32.mrb[0].mxu0
        %3077 = vmatprep.mubr.f32.mxu0 0.0
        %3078 = vmatmul.mubr.f32.gmra.mrb[0].mxu0 %v2940
        %v3079 = vpop.f32.mrb[0].mxu0
        %v3080 = vadd.f32 0.0, %v3079
        %v3081 = vpop.f32.mrb[0].mxu0
        %3082 = vmatprep.mubr.f32.mxu0 0.0
        %3083 = vmatmul.mubr.f32.gmra.mrb[0].mxu0 %v2941
        %v3084 = vpop.f32.mrb[0].mxu0
        %v3085 = vadd.f32 0.0, %v3084
        %v3086 = vpop.f32.mrb[0].mxu0
        %3087 = vmatprep.mubr.f32.mxu0 0.0
        %3088 = vmatmul.mubr.f32.gmra.mrb[0].mxu0 %v2942
        %v3089 = vpop.f32.mrb[0].mxu0
        %v3090 = vadd.f32 0.0, %v3089
        %v3091 = vpop.f32.mrb[0].mxu0
        %3092 = vmatprep.mubr.f32.mxu0 0.0
        %3093 = vmatmul.mubr.f32.gmra.mrb[0].mxu0 %v2943
        %v3094 = vpop.f32.mrb[0].mxu0
        %v3095 = vadd.f32 0.0, %v3094
        %v3096 = vpop.f32.mrb[0].mxu0
        %3097 = vmatprep.mubr.f32.mxu0 0.0
        %3098 = vmatmul.mubr.f32.gmra.mrb[0].mxu0 %v2944
        %v3099 = vpop.f32.mrb[0].mxu0
        %v3100 = vadd.f32 0.0, %v3099
        %v3101 = vpop.f32.mrb[0].mxu0
        %3102 = vmatprep.mubr.f32.mxu0 0.0
        %3103 = vmatmul.mubr.f32.gmra.mrb[0].mxu0 %v2945
        %v3104 = vpop.f32.mrb[0].mxu0
        %v3105 = vadd.f32 0.0, %v3104
        %v3106 = vpop.f32.mrb[0].mxu0
        %3107 = vdwg.mxu0
        %v3108 = vld [vmem:[#allocation2] sm:$0xff]
        %v3109 = vld [vmem:[#allocation2 + $0x8] sm:$0xff]
        %v3110 = vld [vmem:[#allocation2 + $0x10] sm:$0xff]
        %v3111 = vld [vmem:[#allocation2 + $0x18] sm:$0xff]
        %v3112 = vld [vmem:[#allocation2 + $0x20] sm:$0xff]
        %v3113 = vld [vmem:[#allocation2 + $0x28] sm:$0xff]
        %v3114 = vld [vmem:[#allocation2 + $0x30] sm:$0xff]
        %v3115 = vld [vmem:[#allocation2 + $0x38] sm:$0xff]
        %v3116 = vld [vmem:[#allocation2 + $0x40] sm:$0xff]
        %v3117 = vld [vmem:[#allocation2 + $0x48] sm:$0xff]
        %v3118 = vld [vmem:[#allocation2 + $0x50] sm:$0xff]
        %v3119 = vld [vmem:[#allocation2 + $0x58] sm:$0xff]
        %v3120 = vld [vmem:[#allocation2 + $0x60] sm:$0xff]
        %v3121 = vld [vmem:[#allocation2 + $0x68] sm:$0xff]
        %v3122 = vld [vmem:[#allocation2 + $0x70] sm:$0xff]
        %v3123 = vld [vmem:[#allocation2 + $0x78] sm:$0xff]
        %v3124 = vadd.f32 %v3108, %v3030
        %v3125 = vadd.f32 %v3109, %v3035
        %v3126 = vadd.f32 %v3110, %v3040
        %v3127 = vadd.f32 %v3111, %v3045
        %v3128 = vadd.f32 %v3112, %v3050
        %v3129 = vadd.f32 %v3113, %v3055
        %v3130 = vadd.f32 %v3114, %v3060
        %v3131 = vadd.f32 %v3115, %v3065
        %v3132 = vadd.f32 %v3116, %v3070
        %v3133 = vadd.f32 %v3117, %v3075
        %v3134 = vadd.f32 %v3118, %v3080
        %v3135 = vadd.f32 %v3119, %v3085
        %v3136 = vadd.f32 %v3120, %v3090
        %v3137 = vadd.f32 %v3121, %v3095
        %v3138 = vadd.f32 %v3122, %v3100
        %v3139 = vadd.f32 %v3123, %v3105
        %3140 = vst [vmem:[#allocation2] sm:$0xff] %v3124
        %3141 = vst [vmem:[#allocation2 + $0x8] sm:$0xff] %v3125
        %3142 = vst [vmem:[#allocation2 + $0x10] sm:$0xff] %v3126
        %3143 = vst [vmem:[#allocation2 + $0x18] sm:$0xff] %v3127
        %3144 = vst [vmem:[#allocation2 + $0x20] sm:$0xff] %v3128
        %3145 = vst [vmem:[#allocation2 + $0x28] sm:$0xff] %v3129
        %3146 = vst [vmem:[#allocation2 + $0x30] sm:$0xff] %v3130
        %3147 = vst [vmem:[#allocation2 + $0x38] sm:$0xff] %v3131
        %3148 = vst [vmem:[#allocation2 + $0x40] sm:$0xff] %v3132
        %3149 = vst [vmem:[#allocation2 + $0x48] sm:$0xff] %v3133
        %3150 = vst [vmem:[#allocation2 + $0x50] sm:$0xff] %v3134
        %3151 = vst [vmem:[#allocation2 + $0x58] sm:$0xff] %v3135
        %3152 = vst [vmem:[#allocation2 + $0x60] sm:$0xff] %v3136
        %3153 = vst [vmem:[#allocation2 + $0x68] sm:$0xff] %v3137
        %3154 = vst [vmem:[#allocation2 + $0x70] sm:$0xff] %v3138
        %3155 = vst [vmem:[#allocation2 + $0x78] sm:$0xff] %v3139
        %v3156 = vld [vmem:[#allocation3 + $0x9] sm:$0xff]
        %v3157 = vld [vmem:[#allocation3 + $0x11] sm:$0xff]
        %v3158 = vld [vmem:[#allocation3 + $0x29] sm:$0xff]
        %v3159 = vld [vmem:[#allocation3 + $0x31] sm:$0xff]
        %v3160 = vld [vmem:[#allocation3 + $0x49] sm:$0xff]
        %v3161 = vld [vmem:[#allocation3 + $0x51] sm:$0xff]
        %v3162 = vld [vmem:[#allocation3 + $0x69] sm:$0xff]
        %v3163 = vld [vmem:[#allocation3 + $0x71] sm:$0xff]
        %v3164 = vld [vmem:[#allocation3 + $0x89] sm:$0xff]
        %v3165 = vld [vmem:[#allocation3 + $0x91] sm:$0xff]
        %v3166 = vld [vmem:[#allocation3 + $0xa9] sm:$0xff]
        %v3167 = vld [vmem:[#allocation3 + $0xb1] sm:$0xff]
        %v3168 = vld [vmem:[#allocation3 + $0xc9] sm:$0xff]
        %v3169 = vld [vmem:[#allocation3 + $0xd1] sm:$0xff]
        %v3170 = vld [vmem:[#allocation3 + $0xe9] sm:$0xff]
        %v3171 = vld [vmem:[#allocation3 + $0xf1] sm:$0xff]
        %s3172 = scalar_lea.vmem [#allocation9], 256
        %v3173 = vld [vmem:[%s3172] sm:$0xff]
        %v3174 = vld [vmem:[%s3172 + $0x8] sm:$0xff]
        %v3175 = vld [vmem:[%s3172 + $0x10] sm:$0xff]
        %v3176 = vld [vmem:[%s3172 + $0x18] sm:$0xff]
        %v3177 = vld [vmem:[%s3172 + $0x20] sm:$0xff]
        %v3178 = vld [vmem:[%s3172 + $0x28] sm:$0xff]
        %v3179 = vld [vmem:[%s3172 + $0x30] sm:$0xff]
        %v3180 = vld [vmem:[%s3172 + $0x38] sm:$0xff]
        %v3181 = vld [vmem:[%s3172 + $0x40] sm:$0xff]
        %v3182 = vld [vmem:[%s3172 + $0x48] sm:$0xff]
        %v3183 = vld [vmem:[%s3172 + $0x50] sm:$0xff]
        %v3184 = vld [vmem:[%s3172 + $0x58] sm:$0xff]
        %v3185 = vld [vmem:[%s3172 + $0x60] sm:$0xff]
        %v3186 = vld [vmem:[%s3172 + $0x68] sm:$0xff]
        %v3187 = vld [vmem:[%s3172 + $0x70] sm:$0xff]
        %v3188 = vld [vmem:[%s3172 + $0x78] sm:$0xff]
        %3189 = vmatprep.subr.mxu0 0.0
        %3190 = vmatpush1.msra.mxu0 %v3173
        %3191 = vmatprep.subr.mxu0 0.0
        %3192 = vmatpush1.msra.mxu0 %v3174
        %3193 = vmatprep.subr.mxu0 0.0
        %3194 = vmatpush1.msra.mxu0 %v3175
        %3195 = vmatprep.subr.mxu0 0.0
        %3196 = vmatpush1.msra.mxu0 %v3176
        %3197 = vmatprep.subr.mxu0 0.0
        %3198 = vmatpush1.msra.mxu0 %v3177
        %3199 = vmatprep.subr.mxu0 0.0
        %3200 = vmatpush1.msra.mxu0 %v3178
        %3201 = vmatprep.subr.mxu0 0.0
        %3202 = vmatpush1.msra.mxu0 %v3179
        %3203 = vmatprep.subr.mxu0 0.0
        %3204 = vmatpush1.msra.mxu0 %v3180
        %3205 = vmatprep.subr.mxu0 0.0
        %3206 = vmatpush1.msra.mxu0 %v3181
        %3207 = vmatprep.subr.mxu0 0.0
        %3208 = vmatpush1.msra.mxu0 %v3182
        %3209 = vmatprep.subr.mxu0 0.0
        %3210 = vmatpush1.msra.mxu0 %v3183
        %3211 = vmatprep.subr.mxu0 0.0
        %3212 = vmatpush1.msra.mxu0 %v3184
        %3213 = vmatprep.subr.mxu0 0.0
        %3214 = vmatpush1.msra.mxu0 %v3185
        %3215 = vmatprep.subr.mxu0 0.0
        %3216 = vmatpush1.msra.mxu0 %v3186
        %3217 = vmatprep.subr.mxu0 0.0
        %3218 = vmatpush1.msra.mxu0 %v3187
        %3219 = vmatprep.subr.mxu0 0.0
        %3220 = vmatpush1.msra.mxu0 %v3188
        %3221 = vmatprep.subr.mxu0 0.0
        %3222 = vmatpush1.msra.mxu0 0.0
        %3223 = vmatprep.subr.mxu0 0.0
        %3224 = vmatpush1.msra.mxu0 0.0
        %3225 = vmatprep.subr.mxu0 0.0
        %3226 = vmatpush1.msra.mxu0 0.0
        %3227 = vmatprep.subr.mxu0 0.0
        %3228 = vmatpush1.msra.mxu0 0.0
        %3229 = vmatprep.subr.mxu0 0.0
        %3230 = vmatpush1.msra.mxu0 0.0
        %3231 = vmatprep.subr.mxu0 0.0
        %3232 = vmatpush1.msra.mxu0 0.0
        %3233 = vmatprep.subr.mxu0 0.0
        %3234 = vmatpush1.msra.mxu0 0.0
        %3235 = vmatprep.subr.mxu0 0.0
        %3236 = vmatpush1.msra.mxu0 0.0
        %3237 = vmatprep.subr.mxu0 0.0
        %3238 = vmatpush1.msra.mxu0 0.0
        %3239 = vmatprep.subr.mxu0 0.0
        %3240 = vmatpush1.msra.mxu0 0.0
        %3241 = vmatprep.subr.mxu0 0.0
        %3242 = vmatpush1.msra.mxu0 0.0
        %3243 = vmatprep.subr.mxu0 0.0
        %3244 = vmatpush1.msra.mxu0 0.0
        %3245 = vmatprep.subr.mxu0 0.0
        %3246 = vmatpush1.msra.mxu0 0.0
        %3247 = vmatprep.subr.mxu0 0.0
        %3248 = vmatpush1.msra.mxu0 0.0
        %3249 = vmatprep.subr.mxu0 0.0
        %3250 = vmatpush1.msra.mxu0 0.0
        %3251 = vmatprep.subr.mxu0 0.0
        %3252 = vmatpush1.msra.mxu0 0.0
        %3253 = vmatprep.mubr.f32.mxu0 0.0
        %3254 = vmatmul.mubr.f32.gmra.mrb[0].mxu0 %v3156
        %v3255 = vpop.f32.mrb[0].mxu0
        %v3256 = vadd.f32 0.0, %v3255
        %v3257 = vpop.f32.mrb[0].mxu0
        %3258 = vmatprep.mubr.f32.mxu0 0.0
        %3259 = vmatmul.mubr.f32.gmra.mrb[0].mxu0 %v3157
        %v3260 = vpop.f32.mrb[0].mxu0
        %v3261 = vadd.f32 0.0, %v3260
        %v3262 = vpop.f32.mrb[0].mxu0
        %3263 = vmatprep.mubr.f32.mxu0 0.0
        %3264 = vmatmul.mubr.f32.gmra.mrb[0].mxu0 %v3158
        %v3265 = vpop.f32.mrb[0].mxu0
        %v3266 = vadd.f32 0.0, %v3265
        %v3267 = vpop.f32.mrb[0].mxu0
        %3268 = vmatprep.mubr.f32.mxu0 0.0
        %3269 = vmatmul.mubr.f32.gmra.mrb[0].mxu0 %v3159
        %v3270 = vpop.f32.mrb[0].mxu0
        %v3271 = vadd.f32 0.0, %v3270
        %v3272 = vpop.f32.mrb[0].mxu0
        %3273 = vmatprep.mubr.f32.mxu0 0.0
        %3274 = vmatmul.mubr.f32.gmra.mrb[0].mxu0 %v3160
        %v3275 = vpop.f32.mrb[0].mxu0
        %v3276 = vadd.f32 0.0, %v3275
        %v3277 = vpop.f32.mrb[0].mxu0
        %3278 = vmatprep.mubr.f32.mxu0 0.0
        %3279 = vmatmul.mubr.f32.gmra.mrb[0].mxu0 %v3161
        %v3280 = vpop.f32.mrb[0].mxu0
        %v3281 = vadd.f32 0.0, %v3280
        %v3282 = vpop.f32.mrb[0].mxu0
        %3283 = vmatprep.mubr.f32.mxu0 0.0
        %3284 = vmatmul.mubr.f32.gmra.mrb[0].mxu0 %v3162
        %v3285 = vpop.f32.mrb[0].mxu0
        %v3286 = vadd.f32 0.0, %v3285
        %v3287 = vpop.f32.mrb[0].mxu0
        %3288 = vmatprep.mubr.f32.mxu0 0.0
        %3289 = vmatmul.mubr.f32.gmra.mrb[0].mxu0 %v3163
        %v3290 = vpop.f32.mrb[0].mxu0
        %v3291 = vadd.f32 0.0, %v3290
        %v3292 = vpop.f32.mrb[0].mxu0
        %3293 = vmatprep.mubr.f32.mxu0 0.0
        %3294 = vmatmul.mubr.f32.gmra.mrb[0].mxu0 %v3164
        %v3295 = vpop.f32.mrb[0].mxu0
        %v3296 = vadd.f32 0.0, %v3295
        %v3297 = vpop.f32.mrb[0].mxu0
        %3298 = vmatprep.mubr.f32.mxu0 0.0
        %3299 = vmatmul.mubr.f32.gmra.mrb[0].mxu0 %v3165
        %v3300 = vpop.f32.mrb[0].mxu0
        %v3301 = vadd.f32 0.0, %v3300
        %v3302 = vpop.f32.mrb[0].mxu0
        %3303 = vmatprep.mubr.f32.mxu0 0.0
        %3304 = vmatmul.mubr.f32.gmra.mrb[0].mxu0 %v3166
        %v3305 = vpop.f32.mrb[0].mxu0
        %v3306 = vadd.f32 0.0, %v3305
        %v3307 = vpop.f32.mrb[0].mxu0
        %3308 = vmatprep.mubr.f32.mxu0 0.0
        %3309 = vmatmul.mubr.f32.gmra.mrb[0].mxu0 %v3167
        %v3310 = vpop.f32.mrb[0].mxu0
        %v3311 = vadd.f32 0.0, %v3310
        %v3312 = vpop.f32.mrb[0].mxu0
        %3313 = vmatprep.mubr.f32.mxu0 0.0
        %3314 = vmatmul.mubr.f32.gmra.mrb[0].mxu0 %v3168
        %v3315 = vpop.f32.mrb[0].mxu0
        %v3316 = vadd.f32 0.0, %v3315
        %v3317 = vpop.f32.mrb[0].mxu0
        %3318 = vmatprep.mubr.f32.mxu0 0.0
        %3319 = vmatmul.mubr.f32.gmra.mrb[0].mxu0 %v3169
        %v3320 = vpop.f32.mrb[0].mxu0
        %v3321 = vadd.f32 0.0, %v3320
        %v3322 = vpop.f32.mrb[0].mxu0
        %3323 = vmatprep.mubr.f32.mxu0 0.0
        %3324 = vmatmul.mubr.f32.gmra.mrb[0].mxu0 %v3170
        %v3325 = vpop.f32.mrb[0].mxu0
        %v3326 = vadd.f32 0.0, %v3325
        %v3327 = vpop.f32.mrb[0].mxu0
        %3328 = vmatprep.mubr.f32.mxu0 0.0
        %3329 = vmatmul.mubr.f32.gmra.mrb[0].mxu0 %v3171
        %v3330 = vpop.f32.mrb[0].mxu0
        %v3331 = vadd.f32 0.0, %v3330
        %v3332 = vpop.f32.mrb[0].mxu0
        %3333 = vdwg.mxu0
        %v3334 = vld [vmem:[#allocation2] sm:$0xff]
        %v3335 = vld [vmem:[#allocation2 + $0x8] sm:$0xff]
        %v3336 = vld [vmem:[#allocation2 + $0x10] sm:$0xff]
        %v3337 = vld [vmem:[#allocation2 + $0x18] sm:$0xff]
        %v3338 = vld [vmem:[#allocation2 + $0x20] sm:$0xff]
        %v3339 = vld [vmem:[#allocation2 + $0x28] sm:$0xff]
        %v3340 = vld [vmem:[#allocation2 + $0x30] sm:$0xff]
        %v3341 = vld [vmem:[#allocation2 + $0x38] sm:$0xff]
        %v3342 = vld [vmem:[#allocation2 + $0x40] sm:$0xff]
        %v3343 = vld [vmem:[#allocation2 + $0x48] sm:$0xff]
        %v3344 = vld [vmem:[#allocation2 + $0x50] sm:$0xff]
        %v3345 = vld [vmem:[#allocation2 + $0x58] sm:$0xff]
        %v3346 = vld [vmem:[#allocation2 + $0x60] sm:$0xff]
        %v3347 = vld [vmem:[#allocation2 + $0x68] sm:$0xff]
        %v3348 = vld [vmem:[#allocation2 + $0x70] sm:$0xff]
        %v3349 = vld [vmem:[#allocation2 + $0x78] sm:$0xff]
        %v3350 = vadd.f32 %v3334, %v3256
        %v3351 = vadd.f32 %v3335, %v3261
        %v3352 = vadd.f32 %v3336, %v3266
        %v3353 = vadd.f32 %v3337, %v3271
        %v3354 = vadd.f32 %v3338, %v3276
        %v3355 = vadd.f32 %v3339, %v3281
        %v3356 = vadd.f32 %v3340, %v3286
        %v3357 = vadd.f32 %v3341, %v3291
        %v3358 = vadd.f32 %v3342, %v3296
        %v3359 = vadd.f32 %v3343, %v3301
        %v3360 = vadd.f32 %v3344, %v3306
        %v3361 = vadd.f32 %v3345, %v3311
        %v3362 = vadd.f32 %v3346, %v3316
        %v3363 = vadd.f32 %v3347, %v3321
        %v3364 = vadd.f32 %v3348, %v3326
        %v3365 = vadd.f32 %v3349, %v3331
        %3366 = vst [vmem:[#allocation2] sm:$0xff] %v3350
        %3367 = vst [vmem:[#allocation2 + $0x8] sm:$0xff] %v3351
        %3368 = vst [vmem:[#allocation2 + $0x10] sm:$0xff] %v3352
        %3369 = vst [vmem:[#allocation2 + $0x18] sm:$0xff] %v3353
        %3370 = vst [vmem:[#allocation2 + $0x20] sm:$0xff] %v3354
        %3371 = vst [vmem:[#allocation2 + $0x28] sm:$0xff] %v3355
        %3372 = vst [vmem:[#allocation2 + $0x30] sm:$0xff] %v3356
        %3373 = vst [vmem:[#allocation2 + $0x38] sm:$0xff] %v3357
        %3374 = vst [vmem:[#allocation2 + $0x40] sm:$0xff] %v3358
        %3375 = vst [vmem:[#allocation2 + $0x48] sm:$0xff] %v3359
        %3376 = vst [vmem:[#allocation2 + $0x50] sm:$0xff] %v3360
        %3377 = vst [vmem:[#allocation2 + $0x58] sm:$0xff] %v3361
        %3378 = vst [vmem:[#allocation2 + $0x60] sm:$0xff] %v3362
        %3379 = vst [vmem:[#allocation2 + $0x68] sm:$0xff] %v3363
        %3380 = vst [vmem:[#allocation2 + $0x70] sm:$0xff] %v3364
        %3381 = vst [vmem:[#allocation2 + $0x78] sm:$0xff] %v3365
        %s3382 = scalar_lea.vmem [#allocation3], 32
        %v3383 = vld [vmem:[%s3382 + $0x7] sm:$0xff]
        %v3384 = vld [vmem:[%s3382 + $0xf] sm:$0xff]
        %v3385 = vld [vmem:[%s3382 + $0x27] sm:$0xff]
        %v3386 = vld [vmem:[%s3382 + $0x2f] sm:$0xff]
        %v3387 = vld [vmem:[%s3382 + $0x47] sm:$0xff]
        %v3388 = vld [vmem:[%s3382 + $0x4f] sm:$0xff]
        %v3389 = vld [vmem:[%s3382 + $0x67] sm:$0xff]
        %v3390 = vld [vmem:[%s3382 + $0x6f] sm:$0xff]
        %v3391 = vld [vmem:[%s3382 + $0x87] sm:$0xff]
        %v3392 = vld [vmem:[%s3382 + $0x8f] sm:$0xff]
        %v3393 = vld [vmem:[%s3382 + $0xa7] sm:$0xff]
        %v3394 = vld [vmem:[%s3382 + $0xaf] sm:$0xff]
        %v3395 = vld [vmem:[%s3382 + $0xc7] sm:$0xff]
        %v3396 = vld [vmem:[%s3382 + $0xcf] sm:$0xff]
        %v3397 = vld [vmem:[%s3382 + $0xe7] sm:$0xff]
        %v3398 = vld [vmem:[%s3382 + $0xef] sm:$0xff]
        %s3399 = scalar_lea.vmem [#allocation9], 384
        %v3400 = vld [vmem:[%s3399] sm:$0xff]
        %v3401 = vld [vmem:[%s3399 + $0x8] sm:$0xff]
        %v3402 = vld [vmem:[%s3399 + $0x10] sm:$0xff]
        %v3403 = vld [vmem:[%s3399 + $0x18] sm:$0xff]
        %v3404 = vld [vmem:[%s3399 + $0x20] sm:$0xff]
        %v3405 = vld [vmem:[%s3399 + $0x28] sm:$0xff]
        %v3406 = vld [vmem:[%s3399 + $0x30] sm:$0xff]
        %v3407 = vld [vmem:[%s3399 + $0x38] sm:$0xff]
        %v3408 = vld [vmem:[%s3399 + $0x40] sm:$0xff]
        %v3409 = vld [vmem:[%s3399 + $0x48] sm:$0xff]
        %v3410 = vld [vmem:[%s3399 + $0x50] sm:$0xff]
        %v3411 = vld [vmem:[%s3399 + $0x58] sm:$0xff]
        %v3412 = vld [vmem:[%s3399 + $0x60] sm:$0xff]
        %v3413 = vld [vmem:[%s3399 + $0x68] sm:$0xff]
        %v3414 = vld [vmem:[%s3399 + $0x70] sm:$0xff]
        %v3415 = vld [vmem:[%s3399 + $0x78] sm:$0xff]
        %3416 = vmatprep.subr.mxu0 0.0
        %3417 = vmatpush1.msra.mxu0 %v3400
        %3418 = vmatprep.subr.mxu0 0.0
        %3419 = vmatpush1.msra.mxu0 %v3401
        %3420 = vmatprep.subr.mxu0 0.0
        %3421 = vmatpush1.msra.mxu0 %v3402
        %3422 = vmatprep.subr.mxu0 0.0
        %3423 = vmatpush1.msra.mxu0 %v3403
        %3424 = vmatprep.subr.mxu0 0.0
        %3425 = vmatpush1.msra.mxu0 %v3404
        %3426 = vmatprep.subr.mxu0 0.0
        %3427 = vmatpush1.msra.mxu0 %v3405
        %3428 = vmatprep.subr.mxu0 0.0
        %3429 = vmatpush1.msra.mxu0 %v3406
        %3430 = vmatprep.subr.mxu0 0.0
        %3431 = vmatpush1.msra.mxu0 %v3407
        %3432 = vmatprep.subr.mxu0 0.0
        %3433 = vmatpush1.msra.mxu0 %v3408
        %3434 = vmatprep.subr.mxu0 0.0
        %3435 = vmatpush1.msra.mxu0 %v3409
        %3436 = vmatprep.subr.mxu0 0.0
        %3437 = vmatpush1.msra.mxu0 %v3410
        %3438 = vmatprep.subr.mxu0 0.0
        %3439 = vmatpush1.msra.mxu0 %v3411
        %3440 = vmatprep.subr.mxu0 0.0
        %3441 = vmatpush1.msra.mxu0 %v3412
        %3442 = vmatprep.subr.mxu0 0.0
        %3443 = vmatpush1.msra.mxu0 %v3413
        %3444 = vmatprep.subr.mxu0 0.0
        %3445 = vmatpush1.msra.mxu0 %v3414
        %3446 = vmatprep.subr.mxu0 0.0
        %3447 = vmatpush1.msra.mxu0 %v3415
        %3448 = vmatprep.subr.mxu0 0.0
        %3449 = vmatpush1.msra.mxu0 0.0
        %3450 = vmatprep.subr.mxu0 0.0
        %3451 = vmatpush1.msra.mxu0 0.0
        %3452 = vmatprep.subr.mxu0 0.0
        %3453 = vmatpush1.msra.mxu0 0.0
        %3454 = vmatprep.subr.mxu0 0.0
        %3455 = vmatpush1.msra.mxu0 0.0
        %3456 = vmatprep.subr.mxu0 0.0
        %3457 = vmatpush1.msra.mxu0 0.0
        %3458 = vmatprep.subr.mxu0 0.0
        %3459 = vmatpush1.msra.mxu0 0.0
        %3460 = vmatprep.subr.mxu0 0.0
        %3461 = vmatpush1.msra.mxu0 0.0
        %3462 = vmatprep.subr.mxu0 0.0
        %3463 = vmatpush1.msra.mxu0 0.0
        %3464 = vmatprep.subr.mxu0 0.0
        %3465 = vmatpush1.msra.mxu0 0.0
        %3466 = vmatprep.subr.mxu0 0.0
        %3467 = vmatpush1.msra.mxu0 0.0
        %3468 = vmatprep.subr.mxu0 0.0
        %3469 = vmatpush1.msra.mxu0 0.0
        %3470 = vmatprep.subr.mxu0 0.0
        %3471 = vmatpush1.msra.mxu0 0.0
        %3472 = vmatprep.subr.mxu0 0.0
        %3473 = vmatpush1.msra.mxu0 0.0
        %3474 = vmatprep.subr.mxu0 0.0
        %3475 = vmatpush1.msra.mxu0 0.0
        %3476 = vmatprep.subr.mxu0 0.0
        %3477 = vmatpush1.msra.mxu0 0.0
        %3478 = vmatprep.subr.mxu0 0.0
        %3479 = vmatpush1.msra.mxu0 0.0
        %3480 = vmatprep.mubr.f32.mxu0 0.0
        %3481 = vmatmul.mubr.f32.gmra.mrb[0].mxu0 %v3383
        %v3482 = vpop.f32.mrb[0].mxu0
        %v3483 = vadd.f32 0.0, %v3482
        %v3484 = vpop.f32.mrb[0].mxu0
        %3485 = vmatprep.mubr.f32.mxu0 0.0
        %3486 = vmatmul.mubr.f32.gmra.mrb[0].mxu0 %v3384
        %v3487 = vpop.f32.mrb[0].mxu0
        %v3488 = vadd.f32 0.0, %v3487
        %v3489 = vpop.f32.mrb[0].mxu0
        %3490 = vmatprep.mubr.f32.mxu0 0.0
        %3491 = vmatmul.mubr.f32.gmra.mrb[0].mxu0 %v3385
        %v3492 = vpop.f32.mrb[0].mxu0
        %v3493 = vadd.f32 0.0, %v3492
        %v3494 = vpop.f32.mrb[0].mxu0
        %3495 = vmatprep.mubr.f32.mxu0 0.0
        %3496 = vmatmul.mubr.f32.gmra.mrb[0].mxu0 %v3386
        %v3497 = vpop.f32.mrb[0].mxu0
        %v3498 = vadd.f32 0.0, %v3497
        %v3499 = vpop.f32.mrb[0].mxu0
        %3500 = vmatprep.mubr.f32.mxu0 0.0
        %3501 = vmatmul.mubr.f32.gmra.mrb[0].mxu0 %v3387
        %v3502 = vpop.f32.mrb[0].mxu0
        %v3503 = vadd.f32 0.0, %v3502
        %v3504 = vpop.f32.mrb[0].mxu0
        %3505 = vmatprep.mubr.f32.mxu0 0.0
        %3506 = vmatmul.mubr.f32.gmra.mrb[0].mxu0 %v3388
        %v3507 = vpop.f32.mrb[0].mxu0
        %v3508 = vadd.f32 0.0, %v3507
        %v3509 = vpop.f32.mrb[0].mxu0
        %3510 = vmatprep.mubr.f32.mxu0 0.0
        %3511 = vmatmul.mubr.f32.gmra.mrb[0].mxu0 %v3389
        %v3512 = vpop.f32.mrb[0].mxu0
        %v3513 = vadd.f32 0.0, %v3512
        %v3514 = vpop.f32.mrb[0].mxu0
        %3515 = vmatprep.mubr.f32.mxu0 0.0
        %3516 = vmatmul.mubr.f32.gmra.mrb[0].mxu0 %v3390
        %v3517 = vpop.f32.mrb[0].mxu0
        %v3518 = vadd.f32 0.0, %v3517
        %v3519 = vpop.f32.mrb[0].mxu0
        %3520 = vmatprep.mubr.f32.mxu0 0.0
        %3521 = vmatmul.mubr.f32.gmra.mrb[0].mxu0 %v3391
        %v3522 = vpop.f32.mrb[0].mxu0
        %v3523 = vadd.f32 0.0, %v3522
        %v3524 = vpop.f32.mrb[0].mxu0
        %3525 = vmatprep.mubr.f32.mxu0 0.0
        %3526 = vmatmul.mubr.f32.gmra.mrb[0].mxu0 %v3392
        %v3527 = vpop.f32.mrb[0].mxu0
        %v3528 = vadd.f32 0.0, %v3527
        %v3529 = vpop.f32.mrb[0].mxu0
        %3530 = vmatprep.mubr.f32.mxu0 0.0
        %3531 = vmatmul.mubr.f32.gmra.mrb[0].mxu0 %v3393
        %v3532 = vpop.f32.mrb[0].mxu0
        %v3533 = vadd.f32 0.0, %v3532
        %v3534 = vpop.f32.mrb[0].mxu0
        %3535 = vmatprep.mubr.f32.mxu0 0.0
        %3536 = vmatmul.mubr.f32.gmra.mrb[0].mxu0 %v3394
        %v3537 = vpop.f32.mrb[0].mxu0
        %v3538 = vadd.f32 0.0, %v3537
        %v3539 = vpop.f32.mrb[0].mxu0
        %3540 = vmatprep.mubr.f32.mxu0 0.0
        %3541 = vmatmul.mubr.f32.gmra.mrb[0].mxu0 %v3395
        %v3542 = vpop.f32.mrb[0].mxu0
        %v3543 = vadd.f32 0.0, %v3542
        %v3544 = vpop.f32.mrb[0].mxu0
        %3545 = vmatprep.mubr.f32.mxu0 0.0
        %3546 = vmatmul.mubr.f32.gmra.mrb[0].mxu0 %v3396
        %v3547 = vpop.f32.mrb[0].mxu0
        %v3548 = vadd.f32 0.0, %v3547
        %v3549 = vpop.f32.mrb[0].mxu0
        %3550 = vmatprep.mubr.f32.mxu0 0.0
        %3551 = vmatmul.mubr.f32.gmra.mrb[0].mxu0 %v3397
        %v3552 = vpop.f32.mrb[0].mxu0
        %v3553 = vadd.f32 0.0, %v3552
        %v3554 = vpop.f32.mrb[0].mxu0
        %3555 = vmatprep.mubr.f32.mxu0 0.0
        %3556 = vmatmul.mubr.f32.gmra.mrb[0].mxu0 %v3398
        %v3557 = vpop.f32.mrb[0].mxu0
        %v3558 = vadd.f32 0.0, %v3557
        %v3559 = vpop.f32.mrb[0].mxu0
        %3560 = vdwg.mxu0
        %v3561 = vld [vmem:[#allocation2] sm:$0xff]
        %v3562 = vld [vmem:[#allocation2 + $0x8] sm:$0xff]
        %v3563 = vld [vmem:[#allocation2 + $0x10] sm:$0xff]
        %v3564 = vld [vmem:[#allocation2 + $0x18] sm:$0xff]
        %v3565 = vld [vmem:[#allocation2 + $0x20] sm:$0xff]
        %v3566 = vld [vmem:[#allocation2 + $0x28] sm:$0xff]
        %v3567 = vld [vmem:[#allocation2 + $0x30] sm:$0xff]
        %v3568 = vld [vmem:[#allocation2 + $0x38] sm:$0xff]
        %v3569 = vld [vmem:[#allocation2 + $0x40] sm:$0xff]
        %v3570 = vld [vmem:[#allocation2 + $0x48] sm:$0xff]
        %v3571 = vld [vmem:[#allocation2 + $0x50] sm:$0xff]
        %v3572 = vld [vmem:[#allocation2 + $0x58] sm:$0xff]
        %v3573 = vld [vmem:[#allocation2 + $0x60] sm:$0xff]
        %v3574 = vld [vmem:[#allocation2 + $0x68] sm:$0xff]
        %v3575 = vld [vmem:[#allocation2 + $0x70] sm:$0xff]
        %v3576 = vld [vmem:[#allocation2 + $0x78] sm:$0xff]
        %v3577 = vadd.f32 %v3561, %v3483
        %v3578 = vadd.f32 %v3562, %v3488
        %v3579 = vadd.f32 %v3563, %v3493
        %v3580 = vadd.f32 %v3564, %v3498
        %v3581 = vadd.f32 %v3565, %v3503
        %v3582 = vadd.f32 %v3566, %v3508
        %v3583 = vadd.f32 %v3567, %v3513
        %v3584 = vadd.f32 %v3568, %v3518
        %v3585 = vadd.f32 %v3569, %v3523
        %v3586 = vadd.f32 %v3570, %v3528
        %v3587 = vadd.f32 %v3571, %v3533
        %v3588 = vadd.f32 %v3572, %v3538
        %v3589 = vadd.f32 %v3573, %v3543
        %v3590 = vadd.f32 %v3574, %v3548
        %v3591 = vadd.f32 %v3575, %v3553
        %v3592 = vadd.f32 %v3576, %v3558
        %3593 = vst [vmem:[#allocation2] sm:$0xff] %v3577
        %3594 = vst [vmem:[#allocation2 + $0x8] sm:$0xff] %v3578
        %3595 = vst [vmem:[#allocation2 + $0x10] sm:$0xff] %v3579
        %3596 = vst [vmem:[#allocation2 + $0x18] sm:$0xff] %v3580
        %3597 = vst [vmem:[#allocation2 + $0x20] sm:$0xff] %v3581
        %3598 = vst [vmem:[#allocation2 + $0x28] sm:$0xff] %v3582
        %3599 = vst [vmem:[#allocation2 + $0x30] sm:$0xff] %v3583
        %3600 = vst [vmem:[#allocation2 + $0x38] sm:$0xff] %v3584
        %3601 = vst [vmem:[#allocation2 + $0x40] sm:$0xff] %v3585
        %3602 = vst [vmem:[#allocation2 + $0x48] sm:$0xff] %v3586
        %3603 = vst [vmem:[#allocation2 + $0x50] sm:$0xff] %v3587
        %3604 = vst [vmem:[#allocation2 + $0x58] sm:$0xff] %v3588
        %3605 = vst [vmem:[#allocation2 + $0x60] sm:$0xff] %v3589
        %3606 = vst [vmem:[#allocation2 + $0x68] sm:$0xff] %v3590
        %3607 = vst [vmem:[#allocation2 + $0x70] sm:$0xff] %v3591
        %3608 = vst [vmem:[#allocation2 + $0x78] sm:$0xff] %v3592
        %v3609 = vld [vmem:[%s3382 + $0x8] sm:$0xff]
        %v3610 = vld [vmem:[%s3382 + $0x10] sm:$0xff]
        %v3611 = vld [vmem:[%s3382 + $0x28] sm:$0xff]
        %v3612 = vld [vmem:[%s3382 + $0x30] sm:$0xff]
        %v3613 = vld [vmem:[%s3382 + $0x48] sm:$0xff]
        %v3614 = vld [vmem:[%s3382 + $0x50] sm:$0xff]
        %v3615 = vld [vmem:[%s3382 + $0x68] sm:$0xff]
        %v3616 = vld [vmem:[%s3382 + $0x70] sm:$0xff]
        %v3617 = vld [vmem:[%s3382 + $0x88] sm:$0xff]
        %v3618 = vld [vmem:[%s3382 + $0x90] sm:$0xff]
        %v3619 = vld [vmem:[%s3382 + $0xa8] sm:$0xff]
        %v3620 = vld [vmem:[%s3382 + $0xb0] sm:$0xff]
        %v3621 = vld [vmem:[%s3382 + $0xc8] sm:$0xff]
        %v3622 = vld [vmem:[%s3382 + $0xd0] sm:$0xff]
        %v3623 = vld [vmem:[%s3382 + $0xe8] sm:$0xff]
        %v3624 = vld [vmem:[%s3382 + $0xf0] sm:$0xff]
        %s3625 = scalar_lea.vmem [#allocation9], 512
        %v3626 = vld [vmem:[%s3625] sm:$0xff]
        %v3627 = vld [vmem:[%s3625 + $0x8] sm:$0xff]
        %v3628 = vld [vmem:[%s3625 + $0x10] sm:$0xff]
        %v3629 = vld [vmem:[%s3625 + $0x18] sm:$0xff]
        %v3630 = vld [vmem:[%s3625 + $0x20] sm:$0xff]
        %v3631 = vld [vmem:[%s3625 + $0x28] sm:$0xff]
        %v3632 = vld [vmem:[%s3625 + $0x30] sm:$0xff]
        %v3633 = vld [vmem:[%s3625 + $0x38] sm:$0xff]
        %v3634 = vld [vmem:[%s3625 + $0x40] sm:$0xff]
        %v3635 = vld [vmem:[%s3625 + $0x48] sm:$0xff]
        %v3636 = vld [vmem:[%s3625 + $0x50] sm:$0xff]
        %v3637 = vld [vmem:[%s3625 + $0x58] sm:$0xff]
        %v3638 = vld [vmem:[%s3625 + $0x60] sm:$0xff]
        %v3639 = vld [vmem:[%s3625 + $0x68] sm:$0xff]
        %v3640 = vld [vmem:[%s3625 + $0x70] sm:$0xff]
        %v3641 = vld [vmem:[%s3625 + $0x78] sm:$0xff]
        %3642 = vmatprep.subr.mxu0 0.0
        %3643 = vmatpush1.msra.mxu0 %v3626
        %3644 = vmatprep.subr.mxu0 0.0
        %3645 = vmatpush1.msra.mxu0 %v3627
        %3646 = vmatprep.subr.mxu0 0.0
        %3647 = vmatpush1.msra.mxu0 %v3628
        %3648 = vmatprep.subr.mxu0 0.0
        %3649 = vmatpush1.msra.mxu0 %v3629
        %3650 = vmatprep.subr.mxu0 0.0
        %3651 = vmatpush1.msra.mxu0 %v3630
        %3652 = vmatprep.subr.mxu0 0.0
        %3653 = vmatpush1.msra.mxu0 %v3631
        %3654 = vmatprep.subr.mxu0 0.0
        %3655 = vmatpush1.msra.mxu0 %v3632
        %3656 = vmatprep.subr.mxu0 0.0
        %3657 = vmatpush1.msra.mxu0 %v3633
        %3658 = vmatprep.subr.mxu0 0.0
        %3659 = vmatpush1.msra.mxu0 %v3634
        %3660 = vmatprep.subr.mxu0 0.0
        %3661 = vmatpush1.msra.mxu0 %v3635
        %3662 = vmatprep.subr.mxu0 0.0
        %3663 = vmatpush1.msra.mxu0 %v3636
        %3664 = vmatprep.subr.mxu0 0.0
        %3665 = vmatpush1.msra.mxu0 %v3637
        %3666 = vmatprep.subr.mxu0 0.0
        %3667 = vmatpush1.msra.mxu0 %v3638
        %3668 = vmatprep.subr.mxu0 0.0
        %3669 = vmatpush1.msra.mxu0 %v3639
        %3670 = vmatprep.subr.mxu0 0.0
        %3671 = vmatpush1.msra.mxu0 %v3640
        %3672 = vmatprep.subr.mxu0 0.0
        %3673 = vmatpush1.msra.mxu0 %v3641
        %3674 = vmatprep.subr.mxu0 0.0
        %3675 = vmatpush1.msra.mxu0 0.0
        %3676 = vmatprep.subr.mxu0 0.0
        %3677 = vmatpush1.msra.mxu0 0.0
        %3678 = vmatprep.subr.mxu0 0.0
        %3679 = vmatpush1.msra.mxu0 0.0
        %3680 = vmatprep.subr.mxu0 0.0
        %3681 = vmatpush1.msra.mxu0 0.0
        %3682 = vmatprep.subr.mxu0 0.0
        %3683 = vmatpush1.msra.mxu0 0.0
        %3684 = vmatprep.subr.mxu0 0.0
        %3685 = vmatpush1.msra.mxu0 0.0
        %3686 = vmatprep.subr.mxu0 0.0
        %3687 = vmatpush1.msra.mxu0 0.0
        %3688 = vmatprep.subr.mxu0 0.0
        %3689 = vmatpush1.msra.mxu0 0.0
        %3690 = vmatprep.subr.mxu0 0.0
        %3691 = vmatpush1.msra.mxu0 0.0
        %3692 = vmatprep.subr.mxu0 0.0
        %3693 = vmatpush1.msra.mxu0 0.0
        %3694 = vmatprep.subr.mxu0 0.0
        %3695 = vmatpush1.msra.mxu0 0.0
        %3696 = vmatprep.subr.mxu0 0.0
        %3697 = vmatpush1.msra.mxu0 0.0
        %3698 = vmatprep.subr.mxu0 0.0
        %3699 = vmatpush1.msra.mxu0 0.0
        %3700 = vmatprep.subr.mxu0 0.0
        %3701 = vmatpush1.msra.mxu0 0.0
        %3702 = vmatprep.subr.mxu0 0.0
        %3703 = vmatpush1.msra.mxu0 0.0
        %3704 = vmatprep.subr.mxu0 0.0
        %3705 = vmatpush1.msra.mxu0 0.0
        %3706 = vmatprep.mubr.f32.mxu0 0.0
        %3707 = vmatmul.mubr.f32.gmra.mrb[0].mxu0 %v3609
        %v3708 = vpop.f32.mrb[0].mxu0
        %v3709 = vadd.f32 0.0, %v3708
        %v3710 = vpop.f32.mrb[0].mxu0
        %3711 = vmatprep.mubr.f32.mxu0 0.0
        %3712 = vmatmul.mubr.f32.gmra.mrb[0].mxu0 %v3610
        %v3713 = vpop.f32.mrb[0].mxu0
        %v3714 = vadd.f32 0.0, %v3713
        %v3715 = vpop.f32.mrb[0].mxu0
        %3716 = vmatprep.mubr.f32.mxu0 0.0
        %3717 = vmatmul.mubr.f32.gmra.mrb[0].mxu0 %v3611
        %v3718 = vpop.f32.mrb[0].mxu0
        %v3719 = vadd.f32 0.0, %v3718
        %v3720 = vpop.f32.mrb[0].mxu0
        %3721 = vmatprep.mubr.f32.mxu0 0.0
        %3722 = vmatmul.mubr.f32.gmra.mrb[0].mxu0 %v3612
        %v3723 = vpop.f32.mrb[0].mxu0
        %v3724 = vadd.f32 0.0, %v3723
        %v3725 = vpop.f32.mrb[0].mxu0
        %3726 = vmatprep.mubr.f32.mxu0 0.0
        %3727 = vmatmul.mubr.f32.gmra.mrb[0].mxu0 %v3613
        %v3728 = vpop.f32.mrb[0].mxu0
        %v3729 = vadd.f32 0.0, %v3728
        %v3730 = vpop.f32.mrb[0].mxu0
        %3731 = vmatprep.mubr.f32.mxu0 0.0
        %3732 = vmatmul.mubr.f32.gmra.mrb[0].mxu0 %v3614
        %v3733 = vpop.f32.mrb[0].mxu0
        %v3734 = vadd.f32 0.0, %v3733
        %v3735 = vpop.f32.mrb[0].mxu0
        %3736 = vmatprep.mubr.f32.mxu0 0.0
        %3737 = vmatmul.mubr.f32.gmra.mrb[0].mxu0 %v3615
        %v3738 = vpop.f32.mrb[0].mxu0
        %v3739 = vadd.f32 0.0, %v3738
        %v3740 = vpop.f32.mrb[0].mxu0
        %3741 = vmatprep.mubr.f32.mxu0 0.0
        %3742 = vmatmul.mubr.f32.gmra.mrb[0].mxu0 %v3616
        %v3743 = vpop.f32.mrb[0].mxu0
        %v3744 = vadd.f32 0.0, %v3743
        %v3745 = vpop.f32.mrb[0].mxu0
        %3746 = vmatprep.mubr.f32.mxu0 0.0
        %3747 = vmatmul.mubr.f32.gmra.mrb[0].mxu0 %v3617
        %v3748 = vpop.f32.mrb[0].mxu0
        %v3749 = vadd.f32 0.0, %v3748
        %v3750 = vpop.f32.mrb[0].mxu0
        %3751 = vmatprep.mubr.f32.mxu0 0.0
        %3752 = vmatmul.mubr.f32.gmra.mrb[0].mxu0 %v3618
        %v3753 = vpop.f32.mrb[0].mxu0
        %v3754 = vadd.f32 0.0, %v3753
        %v3755 = vpop.f32.mrb[0].mxu0
        %3756 = vmatprep.mubr.f32.mxu0 0.0
        %3757 = vmatmul.mubr.f32.gmra.mrb[0].mxu0 %v3619
        %v3758 = vpop.f32.mrb[0].mxu0
        %v3759 = vadd.f32 0.0, %v3758
        %v3760 = vpop.f32.mrb[0].mxu0
        %3761 = vmatprep.mubr.f32.mxu0 0.0
        %3762 = vmatmul.mubr.f32.gmra.mrb[0].mxu0 %v3620
        %v3763 = vpop.f32.mrb[0].mxu0
        %v3764 = vadd.f32 0.0, %v3763
        %v3765 = vpop.f32.mrb[0].mxu0
        %3766 = vmatprep.mubr.f32.mxu0 0.0
        %3767 = vmatmul.mubr.f32.gmra.mrb[0].mxu0 %v3621
        %v3768 = vpop.f32.mrb[0].mxu0
        %v3769 = vadd.f32 0.0, %v3768
        %v3770 = vpop.f32.mrb[0].mxu0
        %3771 = vmatprep.mubr.f32.mxu0 0.0
        %3772 = vmatmul.mubr.f32.gmra.mrb[0].mxu0 %v3622
        %v3773 = vpop.f32.mrb[0].mxu0
        %v3774 = vadd.f32 0.0, %v3773
        %v3775 = vpop.f32.mrb[0].mxu0
        %3776 = vmatprep.mubr.f32.mxu0 0.0
        %3777 = vmatmul.mubr.f32.gmra.mrb[0].mxu0 %v3623
        %v3778 = vpop.f32.mrb[0].mxu0
        %v3779 = vadd.f32 0.0, %v3778
        %v3780 = vpop.f32.mrb[0].mxu0
        %3781 = vmatprep.mubr.f32.mxu0 0.0
        %3782 = vmatmul.mubr.f32.gmra.mrb[0].mxu0 %v3624
        %v3783 = vpop.f32.mrb[0].mxu0
        %v3784 = vadd.f32 0.0, %v3783
        %v3785 = vpop.f32.mrb[0].mxu0
        %3786 = vdwg.mxu0
        %v3787 = vld [vmem:[#allocation2] sm:$0xff]
        %v3788 = vld [vmem:[#allocation2 + $0x8] sm:$0xff]
        %v3789 = vld [vmem:[#allocation2 + $0x10] sm:$0xff]
        %v3790 = vld [vmem:[#allocation2 + $0x18] sm:$0xff]
        %v3791 = vld [vmem:[#allocation2 + $0x20] sm:$0xff]
        %v3792 = vld [vmem:[#allocation2 + $0x28] sm:$0xff]
        %v3793 = vld [vmem:[#allocation2 + $0x30] sm:$0xff]
        %v3794 = vld [vmem:[#allocation2 + $0x38] sm:$0xff]
        %v3795 = vld [vmem:[#allocation2 + $0x40] sm:$0xff]
        %v3796 = vld [vmem:[#allocation2 + $0x48] sm:$0xff]
        %v3797 = vld [vmem:[#allocation2 + $0x50] sm:$0xff]
        %v3798 = vld [vmem:[#allocation2 + $0x58] sm:$0xff]
        %v3799 = vld [vmem:[#allocation2 + $0x60] sm:$0xff]
        %v3800 = vld [vmem:[#allocation2 + $0x68] sm:$0xff]
        %v3801 = vld [vmem:[#allocation2 + $0x70] sm:$0xff]
        %v3802 = vld [vmem:[#allocation2 + $0x78] sm:$0xff]
        %v3803 = vadd.f32 %v3787, %v3709
        %v3804 = vadd.f32 %v3788, %v3714
        %v3805 = vadd.f32 %v3789, %v3719
        %v3806 = vadd.f32 %v3790, %v3724
        %v3807 = vadd.f32 %v3791, %v3729
        %v3808 = vadd.f32 %v3792, %v3734
        %v3809 = vadd.f32 %v3793, %v3739
        %v3810 = vadd.f32 %v3794, %v3744
        %v3811 = vadd.f32 %v3795, %v3749
        %v3812 = vadd.f32 %v3796, %v3754
        %v3813 = vadd.f32 %v3797, %v3759
        %v3814 = vadd.f32 %v3798, %v3764
        %v3815 = vadd.f32 %v3799, %v3769
        %v3816 = vadd.f32 %v3800, %v3774
        %v3817 = vadd.f32 %v3801, %v3779
        %v3818 = vadd.f32 %v3802, %v3784
        %3819 = vst [vmem:[#allocation2] sm:$0xff] %v3803
        %3820 = vst [vmem:[#allocation2 + $0x8] sm:$0xff] %v3804
        %3821 = vst [vmem:[#allocation2 + $0x10] sm:$0xff] %v3805
        %3822 = vst [vmem:[#allocation2 + $0x18] sm:$0xff] %v3806
        %3823 = vst [vmem:[#allocation2 + $0x20] sm:$0xff] %v3807
        %3824 = vst [vmem:[#allocation2 + $0x28] sm:$0xff] %v3808
        %3825 = vst [vmem:[#allocation2 + $0x30] sm:$0xff] %v3809
        %3826 = vst [vmem:[#allocation2 + $0x38] sm:$0xff] %v3810
        %3827 = vst [vmem:[#allocation2 + $0x40] sm:$0xff] %v3811
        %3828 = vst [vmem:[#allocation2 + $0x48] sm:$0xff] %v3812
        %3829 = vst [vmem:[#allocation2 + $0x50] sm:$0xff] %v3813
        %3830 = vst [vmem:[#allocation2 + $0x58] sm:$0xff] %v3814
        %3831 = vst [vmem:[#allocation2 + $0x60] sm:$0xff] %v3815
        %3832 = vst [vmem:[#allocation2 + $0x68] sm:$0xff] %v3816
        %3833 = vst [vmem:[#allocation2 + $0x70] sm:$0xff] %v3817
        %3834 = vst [vmem:[#allocation2 + $0x78] sm:$0xff] %v3818
        %v3835 = vld [vmem:[%s3382 + $0x9] sm:$0xff]
        %v3836 = vld [vmem:[%s3382 + $0x11] sm:$0xff]
        %v3837 = vld [vmem:[%s3382 + $0x29] sm:$0xff]
        %v3838 = vld [vmem:[%s3382 + $0x31] sm:$0xff]
        %v3839 = vld [vmem:[%s3382 + $0x49] sm:$0xff]
        %v3840 = vld [vmem:[%s3382 + $0x51] sm:$0xff]
        %v3841 = vld [vmem:[%s3382 + $0x69] sm:$0xff]
        %v3842 = vld [vmem:[%s3382 + $0x71] sm:$0xff]
        %v3843 = vld [vmem:[%s3382 + $0x89] sm:$0xff]
        %v3844 = vld [vmem:[%s3382 + $0x91] sm:$0xff]
        %v3845 = vld [vmem:[%s3382 + $0xa9] sm:$0xff]
        %v3846 = vld [vmem:[%s3382 + $0xb1] sm:$0xff]
        %v3847 = vld [vmem:[%s3382 + $0xc9] sm:$0xff]
        %v3848 = vld [vmem:[%s3382 + $0xd1] sm:$0xff]
        %v3849 = vld [vmem:[%s3382 + $0xe9] sm:$0xff]
        %v3850 = vld [vmem:[%s3382 + $0xf1] sm:$0xff]
        %s3851 = scalar_lea.vmem [#allocation9], 640
        %v3852 = vld [vmem:[%s3851] sm:$0xff]
        %v3853 = vld [vmem:[%s3851 + $0x8] sm:$0xff]
        %v3854 = vld [vmem:[%s3851 + $0x10] sm:$0xff]
        %v3855 = vld [vmem:[%s3851 + $0x18] sm:$0xff]
        %v3856 = vld [vmem:[%s3851 + $0x20] sm:$0xff]
        %v3857 = vld [vmem:[%s3851 + $0x28] sm:$0xff]
        %v3858 = vld [vmem:[%s3851 + $0x30] sm:$0xff]
        %v3859 = vld [vmem:[%s3851 + $0x38] sm:$0xff]
        %v3860 = vld [vmem:[%s3851 + $0x40] sm:$0xff]
        %v3861 = vld [vmem:[%s3851 + $0x48] sm:$0xff]
        %v3862 = vld [vmem:[%s3851 + $0x50] sm:$0xff]
        %v3863 = vld [vmem:[%s3851 + $0x58] sm:$0xff]
        %v3864 = vld [vmem:[%s3851 + $0x60] sm:$0xff]
        %v3865 = vld [vmem:[%s3851 + $0x68] sm:$0xff]
        %v3866 = vld [vmem:[%s3851 + $0x70] sm:$0xff]
        %v3867 = vld [vmem:[%s3851 + $0x78] sm:$0xff]
        %3868 = vmatprep.subr.mxu0 0.0
        %3869 = vmatpush1.msra.mxu0 %v3852
        %3870 = vmatprep.subr.mxu0 0.0
        %3871 = vmatpush1.msra.mxu0 %v3853
        %3872 = vmatprep.subr.mxu0 0.0
        %3873 = vmatpush1.msra.mxu0 %v3854
        %3874 = vmatprep.subr.mxu0 0.0
        %3875 = vmatpush1.msra.mxu0 %v3855
        %3876 = vmatprep.subr.mxu0 0.0
        %3877 = vmatpush1.msra.mxu0 %v3856
        %3878 = vmatprep.subr.mxu0 0.0
        %3879 = vmatpush1.msra.mxu0 %v3857
        %3880 = vmatprep.subr.mxu0 0.0
        %3881 = vmatpush1.msra.mxu0 %v3858
        %3882 = vmatprep.subr.mxu0 0.0
        %3883 = vmatpush1.msra.mxu0 %v3859
        %3884 = vmatprep.subr.mxu0 0.0
        %3885 = vmatpush1.msra.mxu0 %v3860
        %3886 = vmatprep.subr.mxu0 0.0
        %3887 = vmatpush1.msra.mxu0 %v3861
        %3888 = vmatprep.subr.mxu0 0.0
        %3889 = vmatpush1.msra.mxu0 %v3862
        %3890 = vmatprep.subr.mxu0 0.0
        %3891 = vmatpush1.msra.mxu0 %v3863
        %3892 = vmatprep.subr.mxu0 0.0
        %3893 = vmatpush1.msra.mxu0 %v3864
        %3894 = vmatprep.subr.mxu0 0.0
        %3895 = vmatpush1.msra.mxu0 %v3865
        %3896 = vmatprep.subr.mxu0 0.0
        %3897 = vmatpush1.msra.mxu0 %v3866
        %3898 = vmatprep.subr.mxu0 0.0
        %3899 = vmatpush1.msra.mxu0 %v3867
        %3900 = vmatprep.subr.mxu0 0.0
        %3901 = vmatpush1.msra.mxu0 0.0
        %3902 = vmatprep.subr.mxu0 0.0
        %3903 = vmatpush1.msra.mxu0 0.0
        %3904 = vmatprep.subr.mxu0 0.0
        %3905 = vmatpush1.msra.mxu0 0.0
        %3906 = vmatprep.subr.mxu0 0.0
        %3907 = vmatpush1.msra.mxu0 0.0
        %3908 = vmatprep.subr.mxu0 0.0
        %3909 = vmatpush1.msra.mxu0 0.0
        %3910 = vmatprep.subr.mxu0 0.0
        %3911 = vmatpush1.msra.mxu0 0.0
        %3912 = vmatprep.subr.mxu0 0.0
        %3913 = vmatpush1.msra.mxu0 0.0
        %3914 = vmatprep.subr.mxu0 0.0
        %3915 = vmatpush1.msra.mxu0 0.0
        %3916 = vmatprep.subr.mxu0 0.0
        %3917 = vmatpush1.msra.mxu0 0.0
        %3918 = vmatprep.subr.mxu0 0.0
        %3919 = vmatpush1.msra.mxu0 0.0
        %3920 = vmatprep.subr.mxu0 0.0
        %3921 = vmatpush1.msra.mxu0 0.0
        %3922 = vmatprep.subr.mxu0 0.0
        %3923 = vmatpush1.msra.mxu0 0.0
        %3924 = vmatprep.subr.mxu0 0.0
        %3925 = vmatpush1.msra.mxu0 0.0
        %3926 = vmatprep.subr.mxu0 0.0
        %3927 = vmatpush1.msra.mxu0 0.0
        %3928 = vmatprep.subr.mxu0 0.0
        %3929 = vmatpush1.msra.mxu0 0.0
        %3930 = vmatprep.subr.mxu0 0.0
        %3931 = vmatpush1.msra.mxu0 0.0
        %3932 = vmatprep.mubr.f32.mxu0 0.0
        %3933 = vmatmul.mubr.f32.gmra.mrb[0].mxu0 %v3835
        %v3934 = vpop.f32.mrb[0].mxu0
        %v3935 = vadd.f32 0.0, %v3934
        %v3936 = vpop.f32.mrb[0].mxu0
        %3937 = vmatprep.mubr.f32.mxu0 0.0
        %3938 = vmatmul.mubr.f32.gmra.mrb[0].mxu0 %v3836
        %v3939 = vpop.f32.mrb[0].mxu0
        %v3940 = vadd.f32 0.0, %v3939
        %v3941 = vpop.f32.mrb[0].mxu0
        %3942 = vmatprep.mubr.f32.mxu0 0.0
        %3943 = vmatmul.mubr.f32.gmra.mrb[0].mxu0 %v3837
        %v3944 = vpop.f32.mrb[0].mxu0
        %v3945 = vadd.f32 0.0, %v3944
        %v3946 = vpop.f32.mrb[0].mxu0
        %3947 = vmatprep.mubr.f32.mxu0 0.0
        %3948 = vmatmul.mubr.f32.gmra.mrb[0].mxu0 %v3838
        %v3949 = vpop.f32.mrb[0].mxu0
        %v3950 = vadd.f32 0.0, %v3949
        %v3951 = vpop.f32.mrb[0].mxu0
        %3952 = vmatprep.mubr.f32.mxu0 0.0
        %3953 = vmatmul.mubr.f32.gmra.mrb[0].mxu0 %v3839
        %v3954 = vpop.f32.mrb[0].mxu0
        %v3955 = vadd.f32 0.0, %v3954
        %v3956 = vpop.f32.mrb[0].mxu0
        %3957 = vmatprep.mubr.f32.mxu0 0.0
        %3958 = vmatmul.mubr.f32.gmra.mrb[0].mxu0 %v3840
        %v3959 = vpop.f32.mrb[0].mxu0
        %v3960 = vadd.f32 0.0, %v3959
        %v3961 = vpop.f32.mrb[0].mxu0
        %3962 = vmatprep.mubr.f32.mxu0 0.0
        %3963 = vmatmul.mubr.f32.gmra.mrb[0].mxu0 %v3841
        %v3964 = vpop.f32.mrb[0].mxu0
        %v3965 = vadd.f32 0.0, %v3964
        %v3966 = vpop.f32.mrb[0].mxu0
        %3967 = vmatprep.mubr.f32.mxu0 0.0
        %3968 = vmatmul.mubr.f32.gmra.mrb[0].mxu0 %v3842
        %v3969 = vpop.f32.mrb[0].mxu0
        %v3970 = vadd.f32 0.0, %v3969
        %v3971 = vpop.f32.mrb[0].mxu0
        %3972 = vmatprep.mubr.f32.mxu0 0.0
        %3973 = vmatmul.mubr.f32.gmra.mrb[0].mxu0 %v3843
        %v3974 = vpop.f32.mrb[0].mxu0
        %v3975 = vadd.f32 0.0, %v3974
        %v3976 = vpop.f32.mrb[0].mxu0
        %3977 = vmatprep.mubr.f32.mxu0 0.0
        %3978 = vmatmul.mubr.f32.gmra.mrb[0].mxu0 %v3844
        %v3979 = vpop.f32.mrb[0].mxu0
        %v3980 = vadd.f32 0.0, %v3979
        %v3981 = vpop.f32.mrb[0].mxu0
        %3982 = vmatprep.mubr.f32.mxu0 0.0
        %3983 = vmatmul.mubr.f32.gmra.mrb[0].mxu0 %v3845
        %v3984 = vpop.f32.mrb[0].mxu0
        %v3985 = vadd.f32 0.0, %v3984
        %v3986 = vpop.f32.mrb[0].mxu0
        %3987 = vmatprep.mubr.f32.mxu0 0.0
        %3988 = vmatmul.mubr.f32.gmra.mrb[0].mxu0 %v3846
        %v3989 = vpop.f32.mrb[0].mxu0
        %v3990 = vadd.f32 0.0, %v3989
        %v3991 = vpop.f32.mrb[0].mxu0
        %3992 = vmatprep.mubr.f32.mxu0 0.0
        %3993 = vmatmul.mubr.f32.gmra.mrb[0].mxu0 %v3847
        %v3994 = vpop.f32.mrb[0].mxu0
        %v3995 = vadd.f32 0.0, %v3994
        %v3996 = vpop.f32.mrb[0].mxu0
        %3997 = vmatprep.mubr.f32.mxu0 0.0
        %3998 = vmatmul.mubr.f32.gmra.mrb[0].mxu0 %v3848
        %v3999 = vpop.f32.mrb[0].mxu0
        %v4000 = vadd.f32 0.0, %v3999
        %v4001 = vpop.f32.mrb[0].mxu0
        %4002 = vmatprep.mubr.f32.mxu0 0.0
        %4003 = vmatmul.mubr.f32.gmra.mrb[0].mxu0 %v3849
        %v4004 = vpop.f32.mrb[0].mxu0
        %v4005 = vadd.f32 0.0, %v4004
        %v4006 = vpop.f32.mrb[0].mxu0
        %4007 = vmatprep.mubr.f32.mxu0 0.0
        %4008 = vmatmul.mubr.f32.gmra.mrb[0].mxu0 %v3850
        %v4009 = vpop.f32.mrb[0].mxu0
        %v4010 = vadd.f32 0.0, %v4009
        %v4011 = vpop.f32.mrb[0].mxu0
        %4012 = vdwg.mxu0
        %v4013 = vld [vmem:[#allocation2] sm:$0xff]
        %v4014 = vld [vmem:[#allocation2 + $0x8] sm:$0xff]
        %v4015 = vld [vmem:[#allocation2 + $0x10] sm:$0xff]
        %v4016 = vld [vmem:[#allocation2 + $0x18] sm:$0xff]
        %v4017 = vld [vmem:[#allocation2 + $0x20] sm:$0xff]
        %v4018 = vld [vmem:[#allocation2 + $0x28] sm:$0xff]
        %v4019 = vld [vmem:[#allocation2 + $0x30] sm:$0xff]
        %v4020 = vld [vmem:[#allocation2 + $0x38] sm:$0xff]
        %v4021 = vld [vmem:[#allocation2 + $0x40] sm:$0xff]
        %v4022 = vld [vmem:[#allocation2 + $0x48] sm:$0xff]
        %v4023 = vld [vmem:[#allocation2 + $0x50] sm:$0xff]
        %v4024 = vld [vmem:[#allocation2 + $0x58] sm:$0xff]
        %v4025 = vld [vmem:[#allocation2 + $0x60] sm:$0xff]
        %v4026 = vld [vmem:[#allocation2 + $0x68] sm:$0xff]
        %v4027 = vld [vmem:[#allocation2 + $0x70] sm:$0xff]
        %v4028 = vld [vmem:[#allocation2 + $0x78] sm:$0xff]
        %v4029 = vadd.f32 %v4013, %v3935
        %v4030 = vadd.f32 %v4014, %v3940
        %v4031 = vadd.f32 %v4015, %v3945
        %v4032 = vadd.f32 %v4016, %v3950
        %v4033 = vadd.f32 %v4017, %v3955
        %v4034 = vadd.f32 %v4018, %v3960
        %v4035 = vadd.f32 %v4019, %v3965
        %v4036 = vadd.f32 %v4020, %v3970
        %v4037 = vadd.f32 %v4021, %v3975
        %v4038 = vadd.f32 %v4022, %v3980
        %v4039 = vadd.f32 %v4023, %v3985
        %v4040 = vadd.f32 %v4024, %v3990
        %v4041 = vadd.f32 %v4025, %v3995
        %v4042 = vadd.f32 %v4026, %v4000
        %v4043 = vadd.f32 %v4027, %v4005
        %v4044 = vadd.f32 %v4028, %v4010
        %4045 = vst [vmem:[#allocation2] sm:$0xff] %v4029
        %4046 = vst [vmem:[#allocation2 + $0x8] sm:$0xff] %v4030
        %4047 = vst [vmem:[#allocation2 + $0x10] sm:$0xff] %v4031
        %4048 = vst [vmem:[#allocation2 + $0x18] sm:$0xff] %v4032
        %4049 = vst [vmem:[#allocation2 + $0x20] sm:$0xff] %v4033
        %4050 = vst [vmem:[#allocation2 + $0x28] sm:$0xff] %v4034
        %4051 = vst [vmem:[#allocation2 + $0x30] sm:$0xff] %v4035
        %4052 = vst [vmem:[#allocation2 + $0x38] sm:$0xff] %v4036
        %4053 = vst [vmem:[#allocation2 + $0x40] sm:$0xff] %v4037
        %4054 = vst [vmem:[#allocation2 + $0x48] sm:$0xff] %v4038
        %4055 = vst [vmem:[#allocation2 + $0x50] sm:$0xff] %v4039
        %4056 = vst [vmem:[#allocation2 + $0x58] sm:$0xff] %v4040
        %4057 = vst [vmem:[#allocation2 + $0x60] sm:$0xff] %v4041
        %4058 = vst [vmem:[#allocation2 + $0x68] sm:$0xff] %v4042
        %4059 = vst [vmem:[#allocation2 + $0x70] sm:$0xff] %v4043
        %4060 = vst [vmem:[#allocation2 + $0x78] sm:$0xff] %v4044
        %s4061 = scalar_lea.vmem [#allocation3], 64
        %v4062 = vld [vmem:[%s4061 + $0x7] sm:$0xff]
        %v4063 = vld [vmem:[%s4061 + $0xf] sm:$0xff]
        %v4064 = vld [vmem:[%s4061 + $0x27] sm:$0xff]
        %v4065 = vld [vmem:[%s4061 + $0x2f] sm:$0xff]
        %v4066 = vld [vmem:[%s4061 + $0x47] sm:$0xff]
        %v4067 = vld [vmem:[%s4061 + $0x4f] sm:$0xff]
        %v4068 = vld [vmem:[%s4061 + $0x67] sm:$0xff]
        %v4069 = vld [vmem:[%s4061 + $0x6f] sm:$0xff]
        %v4070 = vld [vmem:[%s4061 + $0x87] sm:$0xff]
        %v4071 = vld [vmem:[%s4061 + $0x8f] sm:$0xff]
        %v4072 = vld [vmem:[%s4061 + $0xa7] sm:$0xff]
        %v4073 = vld [vmem:[%s4061 + $0xaf] sm:$0xff]
        %v4074 = vld [vmem:[%s4061 + $0xc7] sm:$0xff]
        %v4075 = vld [vmem:[%s4061 + $0xcf] sm:$0xff]
        %v4076 = vld [vmem:[%s4061 + $0xe7] sm:$0xff]
        %v4077 = vld [vmem:[%s4061 + $0xef] sm:$0xff]
        %s4078 = scalar_lea.vmem [#allocation9], 768
        %v4079 = vld [vmem:[%s4078] sm:$0xff]
        %v4080 = vld [vmem:[%s4078 + $0x8] sm:$0xff]
        %v4081 = vld [vmem:[%s4078 + $0x10] sm:$0xff]
        %v4082 = vld [vmem:[%s4078 + $0x18] sm:$0xff]
        %v4083 = vld [vmem:[%s4078 + $0x20] sm:$0xff]
        %v4084 = vld [vmem:[%s4078 + $0x28] sm:$0xff]
        %v4085 = vld [vmem:[%s4078 + $0x30] sm:$0xff]
        %v4086 = vld [vmem:[%s4078 + $0x38] sm:$0xff]
        %v4087 = vld [vmem:[%s4078 + $0x40] sm:$0xff]
        %v4088 = vld [vmem:[%s4078 + $0x48] sm:$0xff]
        %v4089 = vld [vmem:[%s4078 + $0x50] sm:$0xff]
        %v4090 = vld [vmem:[%s4078 + $0x58] sm:$0xff]
        %v4091 = vld [vmem:[%s4078 + $0x60] sm:$0xff]
        %v4092 = vld [vmem:[%s4078 + $0x68] sm:$0xff]
        %v4093 = vld [vmem:[%s4078 + $0x70] sm:$0xff]
        %v4094 = vld [vmem:[%s4078 + $0x78] sm:$0xff]
        %4095 = vmatprep.subr.mxu0 0.0
        %4096 = vmatpush1.msra.mxu0 %v4079
        %4097 = vmatprep.subr.mxu0 0.0
        %4098 = vmatpush1.msra.mxu0 %v4080
        %4099 = vmatprep.subr.mxu0 0.0
        %4100 = vmatpush1.msra.mxu0 %v4081
        %4101 = vmatprep.subr.mxu0 0.0
        %4102 = vmatpush1.msra.mxu0 %v4082
        %4103 = vmatprep.subr.mxu0 0.0
        %4104 = vmatpush1.msra.mxu0 %v4083
        %4105 = vmatprep.subr.mxu0 0.0
        %4106 = vmatpush1.msra.mxu0 %v4084
        %4107 = vmatprep.subr.mxu0 0.0
        %4108 = vmatpush1.msra.mxu0 %v4085
        %4109 = vmatprep.subr.mxu0 0.0
        %4110 = vmatpush1.msra.mxu0 %v4086
        %4111 = vmatprep.subr.mxu0 0.0
        %4112 = vmatpush1.msra.mxu0 %v4087
        %4113 = vmatprep.subr.mxu0 0.0
        %4114 = vmatpush1.msra.mxu0 %v4088
        %4115 = vmatprep.subr.mxu0 0.0
        %4116 = vmatpush1.msra.mxu0 %v4089
        %4117 = vmatprep.subr.mxu0 0.0
        %4118 = vmatpush1.msra.mxu0 %v4090
        %4119 = vmatprep.subr.mxu0 0.0
        %4120 = vmatpush1.msra.mxu0 %v4091
        %4121 = vmatprep.subr.mxu0 0.0
        %4122 = vmatpush1.msra.mxu0 %v4092
        %4123 = vmatprep.subr.mxu0 0.0
        %4124 = vmatpush1.msra.mxu0 %v4093
        %4125 = vmatprep.subr.mxu0 0.0
        %4126 = vmatpush1.msra.mxu0 %v4094
        %4127 = vmatprep.subr.mxu0 0.0
        %4128 = vmatpush1.msra.mxu0 0.0
        %4129 = vmatprep.subr.mxu0 0.0
        %4130 = vmatpush1.msra.mxu0 0.0
        %4131 = vmatprep.subr.mxu0 0.0
        %4132 = vmatpush1.msra.mxu0 0.0
        %4133 = vmatprep.subr.mxu0 0.0
        %4134 = vmatpush1.msra.mxu0 0.0
        %4135 = vmatprep.subr.mxu0 0.0
        %4136 = vmatpush1.msra.mxu0 0.0
        %4137 = vmatprep.subr.mxu0 0.0
        %4138 = vmatpush1.msra.mxu0 0.0
        %4139 = vmatprep.subr.mxu0 0.0
        %4140 = vmatpush1.msra.mxu0 0.0
        %4141 = vmatprep.subr.mxu0 0.0
        %4142 = vmatpush1.msra.mxu0 0.0
        %4143 = vmatprep.subr.mxu0 0.0
        %4144 = vmatpush1.msra.mxu0 0.0
        %4145 = vmatprep.subr.mxu0 0.0
        %4146 = vmatpush1.msra.mxu0 0.0
        %4147 = vmatprep.subr.mxu0 0.0
        %4148 = vmatpush1.msra.mxu0 0.0
        %4149 = vmatprep.subr.mxu0 0.0
        %4150 = vmatpush1.msra.mxu0 0.0
        %4151 = vmatprep.subr.mxu0 0.0
        %4152 = vmatpush1.msra.mxu0 0.0
        %4153 = vmatprep.subr.mxu0 0.0
        %4154 = vmatpush1.msra.mxu0 0.0
        %4155 = vmatprep.subr.mxu0 0.0
        %4156 = vmatpush1.msra.mxu0 0.0
        %4157 = vmatprep.subr.mxu0 0.0
        %4158 = vmatpush1.msra.mxu0 0.0
        %4159 = vmatprep.mubr.f32.mxu0 0.0
        %4160 = vmatmul.mubr.f32.gmra.mrb[0].mxu0 %v4062
        %v4161 = vpop.f32.mrb[0].mxu0
        %v4162 = vadd.f32 0.0, %v4161
        %v4163 = vpop.f32.mrb[0].mxu0
        %4164 = vmatprep.mubr.f32.mxu0 0.0
        %4165 = vmatmul.mubr.f32.gmra.mrb[0].mxu0 %v4063
        %v4166 = vpop.f32.mrb[0].mxu0
        %v4167 = vadd.f32 0.0, %v4166
        %v4168 = vpop.f32.mrb[0].mxu0
        %4169 = vmatprep.mubr.f32.mxu0 0.0
        %4170 = vmatmul.mubr.f32.gmra.mrb[0].mxu0 %v4064
        %v4171 = vpop.f32.mrb[0].mxu0
        %v4172 = vadd.f32 0.0, %v4171
        %v4173 = vpop.f32.mrb[0].mxu0
        %4174 = vmatprep.mubr.f32.mxu0 0.0
        %4175 = vmatmul.mubr.f32.gmra.mrb[0].mxu0 %v4065
        %v4176 = vpop.f32.mrb[0].mxu0
        %v4177 = vadd.f32 0.0, %v4176
        %v4178 = vpop.f32.mrb[0].mxu0
        %4179 = vmatprep.mubr.f32.mxu0 0.0
        %4180 = vmatmul.mubr.f32.gmra.mrb[0].mxu0 %v4066
        %v4181 = vpop.f32.mrb[0].mxu0
        %v4182 = vadd.f32 0.0, %v4181
        %v4183 = vpop.f32.mrb[0].mxu0
        %4184 = vmatprep.mubr.f32.mxu0 0.0
        %4185 = vmatmul.mubr.f32.gmra.mrb[0].mxu0 %v4067
        %v4186 = vpop.f32.mrb[0].mxu0
        %v4187 = vadd.f32 0.0, %v4186
        %v4188 = vpop.f32.mrb[0].mxu0
        %4189 = vmatprep.mubr.f32.mxu0 0.0
        %4190 = vmatmul.mubr.f32.gmra.mrb[0].mxu0 %v4068
        %v4191 = vpop.f32.mrb[0].mxu0
        %v4192 = vadd.f32 0.0, %v4191
        %v4193 = vpop.f32.mrb[0].mxu0
        %4194 = vmatprep.mubr.f32.mxu0 0.0
        %4195 = vmatmul.mubr.f32.gmra.mrb[0].mxu0 %v4069
        %v4196 = vpop.f32.mrb[0].mxu0
        %v4197 = vadd.f32 0.0, %v4196
        %v4198 = vpop.f32.mrb[0].mxu0
        %4199 = vmatprep.mubr.f32.mxu0 0.0
        %4200 = vmatmul.mubr.f32.gmra.mrb[0].mxu0 %v4070
        %v4201 = vpop.f32.mrb[0].mxu0
        %v4202 = vadd.f32 0.0, %v4201
        %v4203 = vpop.f32.mrb[0].mxu0
        %4204 = vmatprep.mubr.f32.mxu0 0.0
        %4205 = vmatmul.mubr.f32.gmra.mrb[0].mxu0 %v4071
        %v4206 = vpop.f32.mrb[0].mxu0
        %v4207 = vadd.f32 0.0, %v4206
        %v4208 = vpop.f32.mrb[0].mxu0
        %4209 = vmatprep.mubr.f32.mxu0 0.0
        %4210 = vmatmul.mubr.f32.gmra.mrb[0].mxu0 %v4072
        %v4211 = vpop.f32.mrb[0].mxu0
        %v4212 = vadd.f32 0.0, %v4211
        %v4213 = vpop.f32.mrb[0].mxu0
        %4214 = vmatprep.mubr.f32.mxu0 0.0
        %4215 = vmatmul.mubr.f32.gmra.mrb[0].mxu0 %v4073
        %v4216 = vpop.f32.mrb[0].mxu0
        %v4217 = vadd.f32 0.0, %v4216
        %v4218 = vpop.f32.mrb[0].mxu0
        %4219 = vmatprep.mubr.f32.mxu0 0.0
        %4220 = vmatmul.mubr.f32.gmra.mrb[0].mxu0 %v4074
        %v4221 = vpop.f32.mrb[0].mxu0
        %v4222 = vadd.f32 0.0, %v4221
        %v4223 = vpop.f32.mrb[0].mxu0
        %4224 = vmatprep.mubr.f32.mxu0 0.0
        %4225 = vmatmul.mubr.f32.gmra.mrb[0].mxu0 %v4075
        %v4226 = vpop.f32.mrb[0].mxu0
        %v4227 = vadd.f32 0.0, %v4226
        %v4228 = vpop.f32.mrb[0].mxu0
        %4229 = vmatprep.mubr.f32.mxu0 0.0
        %4230 = vmatmul.mubr.f32.gmra.mrb[0].mxu0 %v4076
        %v4231 = vpop.f32.mrb[0].mxu0
        %v4232 = vadd.f32 0.0, %v4231
        %v4233 = vpop.f32.mrb[0].mxu0
        %4234 = vmatprep.mubr.f32.mxu0 0.0
        %4235 = vmatmul.mubr.f32.gmra.mrb[0].mxu0 %v4077
        %v4236 = vpop.f32.mrb[0].mxu0
        %v4237 = vadd.f32 0.0, %v4236
        %v4238 = vpop.f32.mrb[0].mxu0
        %4239 = vdwg.mxu0
        %v4240 = vld [vmem:[#allocation2] sm:$0xff]
        %v4241 = vld [vmem:[#allocation2 + $0x8] sm:$0xff]
        %v4242 = vld [vmem:[#allocation2 + $0x10] sm:$0xff]
        %v4243 = vld [vmem:[#allocation2 + $0x18] sm:$0xff]
        %v4244 = vld [vmem:[#allocation2 + $0x20] sm:$0xff]
        %v4245 = vld [vmem:[#allocation2 + $0x28] sm:$0xff]
        %v4246 = vld [vmem:[#allocation2 + $0x30] sm:$0xff]
        %v4247 = vld [vmem:[#allocation2 + $0x38] sm:$0xff]
        %v4248 = vld [vmem:[#allocation2 + $0x40] sm:$0xff]
        %v4249 = vld [vmem:[#allocation2 + $0x48] sm:$0xff]
        %v4250 = vld [vmem:[#allocation2 + $0x50] sm:$0xff]
        %v4251 = vld [vmem:[#allocation2 + $0x58] sm:$0xff]
        %v4252 = vld [vmem:[#allocation2 + $0x60] sm:$0xff]
        %v4253 = vld [vmem:[#allocation2 + $0x68] sm:$0xff]
        %v4254 = vld [vmem:[#allocation2 + $0x70] sm:$0xff]
        %v4255 = vld [vmem:[#allocation2 + $0x78] sm:$0xff]
        %v4256 = vadd.f32 %v4240, %v4162
        %v4257 = vadd.f32 %v4241, %v4167
        %v4258 = vadd.f32 %v4242, %v4172
        %v4259 = vadd.f32 %v4243, %v4177
        %v4260 = vadd.f32 %v4244, %v4182
        %v4261 = vadd.f32 %v4245, %v4187
        %v4262 = vadd.f32 %v4246, %v4192
        %v4263 = vadd.f32 %v4247, %v4197
        %v4264 = vadd.f32 %v4248, %v4202
        %v4265 = vadd.f32 %v4249, %v4207
        %v4266 = vadd.f32 %v4250, %v4212
        %v4267 = vadd.f32 %v4251, %v4217
        %v4268 = vadd.f32 %v4252, %v4222
        %v4269 = vadd.f32 %v4253, %v4227
        %v4270 = vadd.f32 %v4254, %v4232
        %v4271 = vadd.f32 %v4255, %v4237
        %4272 = vst [vmem:[#allocation2] sm:$0xff] %v4256
        %4273 = vst [vmem:[#allocation2 + $0x8] sm:$0xff] %v4257
        %4274 = vst [vmem:[#allocation2 + $0x10] sm:$0xff] %v4258
        %4275 = vst [vmem:[#allocation2 + $0x18] sm:$0xff] %v4259
        %4276 = vst [vmem:[#allocation2 + $0x20] sm:$0xff] %v4260
        %4277 = vst [vmem:[#allocation2 + $0x28] sm:$0xff] %v4261
        %4278 = vst [vmem:[#allocation2 + $0x30] sm:$0xff] %v4262
        %4279 = vst [vmem:[#allocation2 + $0x38] sm:$0xff] %v4263
        %4280 = vst [vmem:[#allocation2 + $0x40] sm:$0xff] %v4264
        %4281 = vst [vmem:[#allocation2 + $0x48] sm:$0xff] %v4265
        %4282 = vst [vmem:[#allocation2 + $0x50] sm:$0xff] %v4266
        %4283 = vst [vmem:[#allocation2 + $0x58] sm:$0xff] %v4267
        %4284 = vst [vmem:[#allocation2 + $0x60] sm:$0xff] %v4268
        %4285 = vst [vmem:[#allocation2 + $0x68] sm:$0xff] %v4269
        %4286 = vst [vmem:[#allocation2 + $0x70] sm:$0xff] %v4270
        %4287 = vst [vmem:[#allocation2 + $0x78] sm:$0xff] %v4271
        %v4288 = vld [vmem:[%s4061 + $0x8] sm:$0xff]
        %v4289 = vld [vmem:[%s4061 + $0x10] sm:$0xff]
        %v4290 = vld [vmem:[%s4061 + $0x28] sm:$0xff]
        %v4291 = vld [vmem:[%s4061 + $0x30] sm:$0xff]
        %v4292 = vld [vmem:[%s4061 + $0x48] sm:$0xff]
        %v4293 = vld [vmem:[%s4061 + $0x50] sm:$0xff]
        %v4294 = vld [vmem:[%s4061 + $0x68] sm:$0xff]
        %v4295 = vld [vmem:[%s4061 + $0x70] sm:$0xff]
        %v4296 = vld [vmem:[%s4061 + $0x88] sm:$0xff]
        %v4297 = vld [vmem:[%s4061 + $0x90] sm:$0xff]
        %v4298 = vld [vmem:[%s4061 + $0xa8] sm:$0xff]
        %v4299 = vld [vmem:[%s4061 + $0xb0] sm:$0xff]
        %v4300 = vld [vmem:[%s4061 + $0xc8] sm:$0xff]
        %v4301 = vld [vmem:[%s4061 + $0xd0] sm:$0xff]
        %v4302 = vld [vmem:[%s4061 + $0xe8] sm:$0xff]
        %v4303 = vld [vmem:[%s4061 + $0xf0] sm:$0xff]
        %s4304 = scalar_lea.vmem [#allocation9], 896
        %v4305 = vld [vmem:[%s4304] sm:$0xff]
        %v4306 = vld [vmem:[%s4304 + $0x8] sm:$0xff]
        %v4307 = vld [vmem:[%s4304 + $0x10] sm:$0xff]
        %v4308 = vld [vmem:[%s4304 + $0x18] sm:$0xff]
        %v4309 = vld [vmem:[%s4304 + $0x20] sm:$0xff]
        %v4310 = vld [vmem:[%s4304 + $0x28] sm:$0xff]
        %v4311 = vld [vmem:[%s4304 + $0x30] sm:$0xff]
        %v4312 = vld [vmem:[%s4304 + $0x38] sm:$0xff]
        %v4313 = vld [vmem:[%s4304 + $0x40] sm:$0xff]
        %v4314 = vld [vmem:[%s4304 + $0x48] sm:$0xff]
        %v4315 = vld [vmem:[%s4304 + $0x50] sm:$0xff]
        %v4316 = vld [vmem:[%s4304 + $0x58] sm:$0xff]
        %v4317 = vld [vmem:[%s4304 + $0x60] sm:$0xff]
        %v4318 = vld [vmem:[%s4304 + $0x68] sm:$0xff]
        %v4319 = vld [vmem:[%s4304 + $0x70] sm:$0xff]
        %v4320 = vld [vmem:[%s4304 + $0x78] sm:$0xff]
        %4321 = vmatprep.subr.mxu0 0.0
        %4322 = vmatpush1.msra.mxu0 %v4305
        %4323 = vmatprep.subr.mxu0 0.0
        %4324 = vmatpush1.msra.mxu0 %v4306
        %4325 = vmatprep.subr.mxu0 0.0
        %4326 = vmatpush1.msra.mxu0 %v4307
        %4327 = vmatprep.subr.mxu0 0.0
        %4328 = vmatpush1.msra.mxu0 %v4308
        %4329 = vmatprep.subr.mxu0 0.0
        %4330 = vmatpush1.msra.mxu0 %v4309
        %4331 = vmatprep.subr.mxu0 0.0
        %4332 = vmatpush1.msra.mxu0 %v4310
        %4333 = vmatprep.subr.mxu0 0.0
        %4334 = vmatpush1.msra.mxu0 %v4311
        %4335 = vmatprep.subr.mxu0 0.0
        %4336 = vmatpush1.msra.mxu0 %v4312
        %4337 = vmatprep.subr.mxu0 0.0
        %4338 = vmatpush1.msra.mxu0 %v4313
        %4339 = vmatprep.subr.mxu0 0.0
        %4340 = vmatpush1.msra.mxu0 %v4314
        %4341 = vmatprep.subr.mxu0 0.0
        %4342 = vmatpush1.msra.mxu0 %v4315
        %4343 = vmatprep.subr.mxu0 0.0
        %4344 = vmatpush1.msra.mxu0 %v4316
        %4345 = vmatprep.subr.mxu0 0.0
        %4346 = vmatpush1.msra.mxu0 %v4317
        %4347 = vmatprep.subr.mxu0 0.0
        %4348 = vmatpush1.msra.mxu0 %v4318
        %4349 = vmatprep.subr.mxu0 0.0
        %4350 = vmatpush1.msra.mxu0 %v4319
        %4351 = vmatprep.subr.mxu0 0.0
        %4352 = vmatpush1.msra.mxu0 %v4320
        %4353 = vmatprep.subr.mxu0 0.0
        %4354 = vmatpush1.msra.mxu0 0.0
        %4355 = vmatprep.subr.mxu0 0.0
        %4356 = vmatpush1.msra.mxu0 0.0
        %4357 = vmatprep.subr.mxu0 0.0
        %4358 = vmatpush1.msra.mxu0 0.0
        %4359 = vmatprep.subr.mxu0 0.0
        %4360 = vmatpush1.msra.mxu0 0.0
        %4361 = vmatprep.subr.mxu0 0.0
        %4362 = vmatpush1.msra.mxu0 0.0
        %4363 = vmatprep.subr.mxu0 0.0
        %4364 = vmatpush1.msra.mxu0 0.0
        %4365 = vmatprep.subr.mxu0 0.0
        %4366 = vmatpush1.msra.mxu0 0.0
        %4367 = vmatprep.subr.mxu0 0.0
        %4368 = vmatpush1.msra.mxu0 0.0
        %4369 = vmatprep.subr.mxu0 0.0
        %4370 = vmatpush1.msra.mxu0 0.0
        %4371 = vmatprep.subr.mxu0 0.0
        %4372 = vmatpush1.msra.mxu0 0.0
        %4373 = vmatprep.subr.mxu0 0.0
        %4374 = vmatpush1.msra.mxu0 0.0
        %4375 = vmatprep.subr.mxu0 0.0
        %4376 = vmatpush1.msra.mxu0 0.0
        %4377 = vmatprep.subr.mxu0 0.0
        %4378 = vmatpush1.msra.mxu0 0.0
        %4379 = vmatprep.subr.mxu0 0.0
        %4380 = vmatpush1.msra.mxu0 0.0
        %4381 = vmatprep.subr.mxu0 0.0
        %4382 = vmatpush1.msra.mxu0 0.0
        %4383 = vmatprep.subr.mxu0 0.0
        %4384 = vmatpush1.msra.mxu0 0.0
        %4385 = vmatprep.mubr.f32.mxu0 0.0
        %4386 = vmatmul.mubr.f32.gmra.mrb[0].mxu0 %v4288
        %v4387 = vpop.f32.mrb[0].mxu0
        %v4388 = vadd.f32 0.0, %v4387
        %v4389 = vpop.f32.mrb[0].mxu0
        %4390 = vmatprep.mubr.f32.mxu0 0.0
        %4391 = vmatmul.mubr.f32.gmra.mrb[0].mxu0 %v4289
        %v4392 = vpop.f32.mrb[0].mxu0
        %v4393 = vadd.f32 0.0, %v4392
        %v4394 = vpop.f32.mrb[0].mxu0
        %4395 = vmatprep.mubr.f32.mxu0 0.0
        %4396 = vmatmul.mubr.f32.gmra.mrb[0].mxu0 %v4290
        %v4397 = vpop.f32.mrb[0].mxu0
        %v4398 = vadd.f32 0.0, %v4397
        %v4399 = vpop.f32.mrb[0].mxu0
        %4400 = vmatprep.mubr.f32.mxu0 0.0
        %4401 = vmatmul.mubr.f32.gmra.mrb[0].mxu0 %v4291
        %v4402 = vpop.f32.mrb[0].mxu0
        %v4403 = vadd.f32 0.0, %v4402
        %v4404 = vpop.f32.mrb[0].mxu0
        %4405 = vmatprep.mubr.f32.mxu0 0.0
        %4406 = vmatmul.mubr.f32.gmra.mrb[0].mxu0 %v4292
        %v4407 = vpop.f32.mrb[0].mxu0
        %v4408 = vadd.f32 0.0, %v4407
        %v4409 = vpop.f32.mrb[0].mxu0
        %4410 = vmatprep.mubr.f32.mxu0 0.0
        %4411 = vmatmul.mubr.f32.gmra.mrb[0].mxu0 %v4293
        %v4412 = vpop.f32.mrb[0].mxu0
        %v4413 = vadd.f32 0.0, %v4412
        %v4414 = vpop.f32.mrb[0].mxu0
        %4415 = vmatprep.mubr.f32.mxu0 0.0
        %4416 = vmatmul.mubr.f32.gmra.mrb[0].mxu0 %v4294
        %v4417 = vpop.f32.mrb[0].mxu0
        %v4418 = vadd.f32 0.0, %v4417
        %v4419 = vpop.f32.mrb[0].mxu0
        %4420 = vmatprep.mubr.f32.mxu0 0.0
        %4421 = vmatmul.mubr.f32.gmra.mrb[0].mxu0 %v4295
        %v4422 = vpop.f32.mrb[0].mxu0
        %v4423 = vadd.f32 0.0, %v4422
        %v4424 = vpop.f32.mrb[0].mxu0
        %4425 = vmatprep.mubr.f32.mxu0 0.0
        %4426 = vmatmul.mubr.f32.gmra.mrb[0].mxu0 %v4296
        %v4427 = vpop.f32.mrb[0].mxu0
        %v4428 = vadd.f32 0.0, %v4427
        %v4429 = vpop.f32.mrb[0].mxu0
        %4430 = vmatprep.mubr.f32.mxu0 0.0
        %4431 = vmatmul.mubr.f32.gmra.mrb[0].mxu0 %v4297
        %v4432 = vpop.f32.mrb[0].mxu0
        %v4433 = vadd.f32 0.0, %v4432
        %v4434 = vpop.f32.mrb[0].mxu0
        %4435 = vmatprep.mubr.f32.mxu0 0.0
        %4436 = vmatmul.mubr.f32.gmra.mrb[0].mxu0 %v4298
        %v4437 = vpop.f32.mrb[0].mxu0
        %v4438 = vadd.f32 0.0, %v4437
        %v4439 = vpop.f32.mrb[0].mxu0
        %4440 = vmatprep.mubr.f32.mxu0 0.0
        %4441 = vmatmul.mubr.f32.gmra.mrb[0].mxu0 %v4299
        %v4442 = vpop.f32.mrb[0].mxu0
        %v4443 = vadd.f32 0.0, %v4442
        %v4444 = vpop.f32.mrb[0].mxu0
        %4445 = vmatprep.mubr.f32.mxu0 0.0
        %4446 = vmatmul.mubr.f32.gmra.mrb[0].mxu0 %v4300
        %v4447 = vpop.f32.mrb[0].mxu0
        %v4448 = vadd.f32 0.0, %v4447
        %v4449 = vpop.f32.mrb[0].mxu0
        %4450 = vmatprep.mubr.f32.mxu0 0.0
        %4451 = vmatmul.mubr.f32.gmra.mrb[0].mxu0 %v4301
        %v4452 = vpop.f32.mrb[0].mxu0
        %v4453 = vadd.f32 0.0, %v4452
        %v4454 = vpop.f32.mrb[0].mxu0
        %4455 = vmatprep.mubr.f32.mxu0 0.0
        %4456 = vmatmul.mubr.f32.gmra.mrb[0].mxu0 %v4302
        %v4457 = vpop.f32.mrb[0].mxu0
        %v4458 = vadd.f32 0.0, %v4457
        %v4459 = vpop.f32.mrb[0].mxu0
        %4460 = vmatprep.mubr.f32.mxu0 0.0
        %4461 = vmatmul.mubr.f32.gmra.mrb[0].mxu0 %v4303
        %v4462 = vpop.f32.mrb[0].mxu0
        %v4463 = vadd.f32 0.0, %v4462
        %v4464 = vpop.f32.mrb[0].mxu0
        %4465 = vdwg.mxu0
        %v4466 = vld [vmem:[#allocation2] sm:$0xff]
        %v4467 = vld [vmem:[#allocation2 + $0x8] sm:$0xff]
        %v4468 = vld [vmem:[#allocation2 + $0x10] sm:$0xff]
        %v4469 = vld [vmem:[#allocation2 + $0x18] sm:$0xff]
        %v4470 = vld [vmem:[#allocation2 + $0x20] sm:$0xff]
        %v4471 = vld [vmem:[#allocation2 + $0x28] sm:$0xff]
        %v4472 = vld [vmem:[#allocation2 + $0x30] sm:$0xff]
        %v4473 = vld [vmem:[#allocation2 + $0x38] sm:$0xff]
        %v4474 = vld [vmem:[#allocation2 + $0x40] sm:$0xff]
        %v4475 = vld [vmem:[#allocation2 + $0x48] sm:$0xff]
        %v4476 = vld [vmem:[#allocation2 + $0x50] sm:$0xff]
        %v4477 = vld [vmem:[#allocation2 + $0x58] sm:$0xff]
        %v4478 = vld [vmem:[#allocation2 + $0x60] sm:$0xff]
        %v4479 = vld [vmem:[#allocation2 + $0x68] sm:$0xff]
        %v4480 = vld [vmem:[#allocation2 + $0x70] sm:$0xff]
        %v4481 = vld [vmem:[#allocation2 + $0x78] sm:$0xff]
        %v4482 = vadd.f32 %v4466, %v4388
        %v4483 = vadd.f32 %v4467, %v4393
        %v4484 = vadd.f32 %v4468, %v4398
        %v4485 = vadd.f32 %v4469, %v4403
        %v4486 = vadd.f32 %v4470, %v4408
        %v4487 = vadd.f32 %v4471, %v4413
        %v4488 = vadd.f32 %v4472, %v4418
        %v4489 = vadd.f32 %v4473, %v4423
        %v4490 = vadd.f32 %v4474, %v4428
        %v4491 = vadd.f32 %v4475, %v4433
        %v4492 = vadd.f32 %v4476, %v4438
        %v4493 = vadd.f32 %v4477, %v4443
        %v4494 = vadd.f32 %v4478, %v4448
        %v4495 = vadd.f32 %v4479, %v4453
        %v4496 = vadd.f32 %v4480, %v4458
        %v4497 = vadd.f32 %v4481, %v4463
        %4498 = vst [vmem:[#allocation2] sm:$0xff] %v4482
        %4499 = vst [vmem:[#allocation2 + $0x8] sm:$0xff] %v4483
        %4500 = vst [vmem:[#allocation2 + $0x10] sm:$0xff] %v4484
        %4501 = vst [vmem:[#allocation2 + $0x18] sm:$0xff] %v4485
        %4502 = vst [vmem:[#allocation2 + $0x20] sm:$0xff] %v4486
        %4503 = vst [vmem:[#allocation2 + $0x28] sm:$0xff] %v4487
        %4504 = vst [vmem:[#allocation2 + $0x30] sm:$0xff] %v4488
        %4505 = vst [vmem:[#allocation2 + $0x38] sm:$0xff] %v4489
        %4506 = vst [vmem:[#allocation2 + $0x40] sm:$0xff] %v4490
        %4507 = vst [vmem:[#allocation2 + $0x48] sm:$0xff] %v4491
        %4508 = vst [vmem:[#allocation2 + $0x50] sm:$0xff] %v4492
        %4509 = vst [vmem:[#allocation2 + $0x58] sm:$0xff] %v4493
        %4510 = vst [vmem:[#allocation2 + $0x60] sm:$0xff] %v4494
        %4511 = vst [vmem:[#allocation2 + $0x68] sm:$0xff] %v4495
        %4512 = vst [vmem:[#allocation2 + $0x70] sm:$0xff] %v4496
        %4513 = vst [vmem:[#allocation2 + $0x78] sm:$0xff] %v4497
        %v4514 = vld [vmem:[%s4061 + $0x9] sm:$0xff]
        %v4515 = vld [vmem:[%s4061 + $0x11] sm:$0xff]
        %v4516 = vld [vmem:[%s4061 + $0x29] sm:$0xff]
        %v4517 = vld [vmem:[%s4061 + $0x31] sm:$0xff]
        %v4518 = vld [vmem:[%s4061 + $0x49] sm:$0xff]
        %v4519 = vld [vmem:[%s4061 + $0x51] sm:$0xff]
        %v4520 = vld [vmem:[%s4061 + $0x69] sm:$0xff]
        %v4521 = vld [vmem:[%s4061 + $0x71] sm:$0xff]
        %v4522 = vld [vmem:[%s4061 + $0x89] sm:$0xff]
        %v4523 = vld [vmem:[%s4061 + $0x91] sm:$0xff]
        %v4524 = vld [vmem:[%s4061 + $0xa9] sm:$0xff]
        %v4525 = vld [vmem:[%s4061 + $0xb1] sm:$0xff]
        %v4526 = vld [vmem:[%s4061 + $0xc9] sm:$0xff]
        %v4527 = vld [vmem:[%s4061 + $0xd1] sm:$0xff]
        %v4528 = vld [vmem:[%s4061 + $0xe9] sm:$0xff]
        %v4529 = vld [vmem:[%s4061 + $0xf1] sm:$0xff]
        %s4530 = scalar_lea.vmem [#allocation9], 1024
        %v4531 = vld [vmem:[%s4530] sm:$0xff]
        %v4532 = vld [vmem:[%s4530 + $0x8] sm:$0xff]
        %v4533 = vld [vmem:[%s4530 + $0x10] sm:$0xff]
        %v4534 = vld [vmem:[%s4530 + $0x18] sm:$0xff]
        %v4535 = vld [vmem:[%s4530 + $0x20] sm:$0xff]
        %v4536 = vld [vmem:[%s4530 + $0x28] sm:$0xff]
        %v4537 = vld [vmem:[%s4530 + $0x30] sm:$0xff]
        %v4538 = vld [vmem:[%s4530 + $0x38] sm:$0xff]
        %v4539 = vld [vmem:[%s4530 + $0x40] sm:$0xff]
        %v4540 = vld [vmem:[%s4530 + $0x48] sm:$0xff]
        %v4541 = vld [vmem:[%s4530 + $0x50] sm:$0xff]
        %v4542 = vld [vmem:[%s4530 + $0x58] sm:$0xff]
        %v4543 = vld [vmem:[%s4530 + $0x60] sm:$0xff]
        %v4544 = vld [vmem:[%s4530 + $0x68] sm:$0xff]
        %v4545 = vld [vmem:[%s4530 + $0x70] sm:$0xff]
        %v4546 = vld [vmem:[%s4530 + $0x78] sm:$0xff]
        %4547 = vmatprep.subr.mxu0 0.0
        %4548 = vmatpush1.msra.mxu0 %v4531
        %4549 = vmatprep.subr.mxu0 0.0
        %4550 = vmatpush1.msra.mxu0 %v4532
        %4551 = vmatprep.subr.mxu0 0.0
        %4552 = vmatpush1.msra.mxu0 %v4533
        %4553 = vmatprep.subr.mxu0 0.0
        %4554 = vmatpush1.msra.mxu0 %v4534
        %4555 = vmatprep.subr.mxu0 0.0
        %4556 = vmatpush1.msra.mxu0 %v4535
        %4557 = vmatprep.subr.mxu0 0.0
        %4558 = vmatpush1.msra.mxu0 %v4536
        %4559 = vmatprep.subr.mxu0 0.0
        %4560 = vmatpush1.msra.mxu0 %v4537
        %4561 = vmatprep.subr.mxu0 0.0
        %4562 = vmatpush1.msra.mxu0 %v4538
        %4563 = vmatprep.subr.mxu0 0.0
        %4564 = vmatpush1.msra.mxu0 %v4539
        %4565 = vmatprep.subr.mxu0 0.0
        %4566 = vmatpush1.msra.mxu0 %v4540
        %4567 = vmatprep.subr.mxu0 0.0
        %4568 = vmatpush1.msra.mxu0 %v4541
        %4569 = vmatprep.subr.mxu0 0.0
        %4570 = vmatpush1.msra.mxu0 %v4542
        %4571 = vmatprep.subr.mxu0 0.0
        %4572 = vmatpush1.msra.mxu0 %v4543
        %4573 = vmatprep.subr.mxu0 0.0
        %4574 = vmatpush1.msra.mxu0 %v4544
        %4575 = vmatprep.subr.mxu0 0.0
        %4576 = vmatpush1.msra.mxu0 %v4545
        %4577 = vmatprep.subr.mxu0 0.0
        %4578 = vmatpush1.msra.mxu0 %v4546
        %4579 = vmatprep.subr.mxu0 0.0
        %4580 = vmatpush1.msra.mxu0 0.0
        %4581 = vmatprep.subr.mxu0 0.0
        %4582 = vmatpush1.msra.mxu0 0.0
        %4583 = vmatprep.subr.mxu0 0.0
        %4584 = vmatpush1.msra.mxu0 0.0
        %4585 = vmatprep.subr.mxu0 0.0
        %4586 = vmatpush1.msra.mxu0 0.0
        %4587 = vmatprep.subr.mxu0 0.0
        %4588 = vmatpush1.msra.mxu0 0.0
        %4589 = vmatprep.subr.mxu0 0.0
        %4590 = vmatpush1.msra.mxu0 0.0
        %4591 = vmatprep.subr.mxu0 0.0
        %4592 = vmatpush1.msra.mxu0 0.0
        %4593 = vmatprep.subr.mxu0 0.0
        %4594 = vmatpush1.msra.mxu0 0.0
        %4595 = vmatprep.subr.mxu0 0.0
        %4596 = vmatpush1.msra.mxu0 0.0
        %4597 = vmatprep.subr.mxu0 0.0
        %4598 = vmatpush1.msra.mxu0 0.0
        %4599 = vmatprep.subr.mxu0 0.0
        %4600 = vmatpush1.msra.mxu0 0.0
        %4601 = vmatprep.subr.mxu0 0.0
        %4602 = vmatpush1.msra.mxu0 0.0
        %4603 = vmatprep.subr.mxu0 0.0
        %4604 = vmatpush1.msra.mxu0 0.0
        %4605 = vmatprep.subr.mxu0 0.0
        %4606 = vmatpush1.msra.mxu0 0.0
        %4607 = vmatprep.subr.mxu0 0.0
        %4608 = vmatpush1.msra.mxu0 0.0
        %4609 = vmatprep.subr.mxu0 0.0
        %4610 = vmatpush1.msra.mxu0 0.0
        %4611 = vmatprep.mubr.f32.mxu0 0.0
        %4612 = vmatmul.mubr.f32.gmra.mrb[0].mxu0 %v4514
        %v4613 = vpop.f32.mrb[0].mxu0
        %v4614 = vadd.f32 0.0, %v4613
        %v4615 = vpop.f32.mrb[0].mxu0
        %4616 = vmatprep.mubr.f32.mxu0 0.0
        %4617 = vmatmul.mubr.f32.gmra.mrb[0].mxu0 %v4515
        %v4618 = vpop.f32.mrb[0].mxu0
        %v4619 = vadd.f32 0.0, %v4618
        %v4620 = vpop.f32.mrb[0].mxu0
        %4621 = vmatprep.mubr.f32.mxu0 0.0
        %4622 = vmatmul.mubr.f32.gmra.mrb[0].mxu0 %v4516
        %v4623 = vpop.f32.mrb[0].mxu0
        %v4624 = vadd.f32 0.0, %v4623
        %v4625 = vpop.f32.mrb[0].mxu0
        %4626 = vmatprep.mubr.f32.mxu0 0.0
        %4627 = vmatmul.mubr.f32.gmra.mrb[0].mxu0 %v4517
        %v4628 = vpop.f32.mrb[0].mxu0
        %v4629 = vadd.f32 0.0, %v4628
        %v4630 = vpop.f32.mrb[0].mxu0
        %4631 = vmatprep.mubr.f32.mxu0 0.0
        %4632 = vmatmul.mubr.f32.gmra.mrb[0].mxu0 %v4518
        %v4633 = vpop.f32.mrb[0].mxu0
        %v4634 = vadd.f32 0.0, %v4633
        %v4635 = vpop.f32.mrb[0].mxu0
        %4636 = vmatprep.mubr.f32.mxu0 0.0
        %4637 = vmatmul.mubr.f32.gmra.mrb[0].mxu0 %v4519
        %v4638 = vpop.f32.mrb[0].mxu0
        %v4639 = vadd.f32 0.0, %v4638
        %v4640 = vpop.f32.mrb[0].mxu0
        %4641 = vmatprep.mubr.f32.mxu0 0.0
        %4642 = vmatmul.mubr.f32.gmra.mrb[0].mxu0 %v4520
        %v4643 = vpop.f32.mrb[0].mxu0
        %v4644 = vadd.f32 0.0, %v4643
        %v4645 = vpop.f32.mrb[0].mxu0
        %4646 = vmatprep.mubr.f32.mxu0 0.0
        %4647 = vmatmul.mubr.f32.gmra.mrb[0].mxu0 %v4521
        %v4648 = vpop.f32.mrb[0].mxu0
        %v4649 = vadd.f32 0.0, %v4648
        %v4650 = vpop.f32.mrb[0].mxu0
        %4651 = vmatprep.mubr.f32.mxu0 0.0
        %4652 = vmatmul.mubr.f32.gmra.mrb[0].mxu0 %v4522
        %v4653 = vpop.f32.mrb[0].mxu0
        %v4654 = vadd.f32 0.0, %v4653
        %v4655 = vpop.f32.mrb[0].mxu0
        %4656 = vmatprep.mubr.f32.mxu0 0.0
        %4657 = vmatmul.mubr.f32.gmra.mrb[0].mxu0 %v4523
        %v4658 = vpop.f32.mrb[0].mxu0
        %v4659 = vadd.f32 0.0, %v4658
        %v4660 = vpop.f32.mrb[0].mxu0
        %4661 = vmatprep.mubr.f32.mxu0 0.0
        %4662 = vmatmul.mubr.f32.gmra.mrb[0].mxu0 %v4524
        %v4663 = vpop.f32.mrb[0].mxu0
        %v4664 = vadd.f32 0.0, %v4663
        %v4665 = vpop.f32.mrb[0].mxu0
        %4666 = vmatprep.mubr.f32.mxu0 0.0
        %4667 = vmatmul.mubr.f32.gmra.mrb[0].mxu0 %v4525
        %v4668 = vpop.f32.mrb[0].mxu0
        %v4669 = vadd.f32 0.0, %v4668
        %v4670 = vpop.f32.mrb[0].mxu0
        %4671 = vmatprep.mubr.f32.mxu0 0.0
        %4672 = vmatmul.mubr.f32.gmra.mrb[0].mxu0 %v4526
        %v4673 = vpop.f32.mrb[0].mxu0
        %v4674 = vadd.f32 0.0, %v4673
        %v4675 = vpop.f32.mrb[0].mxu0
        %4676 = vmatprep.mubr.f32.mxu0 0.0
        %4677 = vmatmul.mubr.f32.gmra.mrb[0].mxu0 %v4527
        %v4678 = vpop.f32.mrb[0].mxu0
        %v4679 = vadd.f32 0.0, %v4678
        %v4680 = vpop.f32.mrb[0].mxu0
        %4681 = vmatprep.mubr.f32.mxu0 0.0
        %4682 = vmatmul.mubr.f32.gmra.mrb[0].mxu0 %v4528
        %v4683 = vpop.f32.mrb[0].mxu0
        %v4684 = vadd.f32 0.0, %v4683
        %v4685 = vpop.f32.mrb[0].mxu0
        %4686 = vmatprep.mubr.f32.mxu0 0.0
        %4687 = vmatmul.mubr.f32.gmra.mrb[0].mxu0 %v4529
        %v4688 = vpop.f32.mrb[0].mxu0
        %v4689 = vadd.f32 0.0, %v4688
        %v4690 = vpop.f32.mrb[0].mxu0
        %4691 = vdwg.mxu0
        %v4692 = vld [vmem:[#allocation2] sm:$0xff]
        %v4693 = vld [vmem:[#allocation2 + $0x8] sm:$0xff]
        %v4694 = vld [vmem:[#allocation2 + $0x10] sm:$0xff]
        %v4695 = vld [vmem:[#allocation2 + $0x18] sm:$0xff]
        %v4696 = vld [vmem:[#allocation2 + $0x20] sm:$0xff]
        %v4697 = vld [vmem:[#allocation2 + $0x28] sm:$0xff]
        %v4698 = vld [vmem:[#allocation2 + $0x30] sm:$0xff]
        %v4699 = vld [vmem:[#allocation2 + $0x38] sm:$0xff]
        %v4700 = vld [vmem:[#allocation2 + $0x40] sm:$0xff]
        %v4701 = vld [vmem:[#allocation2 + $0x48] sm:$0xff]
        %v4702 = vld [vmem:[#allocation2 + $0x50] sm:$0xff]
        %v4703 = vld [vmem:[#allocation2 + $0x58] sm:$0xff]
        %v4704 = vld [vmem:[#allocation2 + $0x60] sm:$0xff]
        %v4705 = vld [vmem:[#allocation2 + $0x68] sm:$0xff]
        %v4706 = vld [vmem:[#allocation2 + $0x70] sm:$0xff]
        %v4707 = vld [vmem:[#allocation2 + $0x78] sm:$0xff]
        %v4708 = vadd.f32 %v4692, %v4614
        %v4709 = vadd.f32 %v4693, %v4619
        %v4710 = vadd.f32 %v4694, %v4624
        %v4711 = vadd.f32 %v4695, %v4629
        %v4712 = vadd.f32 %v4696, %v4634
        %v4713 = vadd.f32 %v4697, %v4639
        %v4714 = vadd.f32 %v4698, %v4644
        %v4715 = vadd.f32 %v4699, %v4649
        %v4716 = vadd.f32 %v4700, %v4654
        %v4717 = vadd.f32 %v4701, %v4659
        %v4718 = vadd.f32 %v4702, %v4664
        %v4719 = vadd.f32 %v4703, %v4669
        %v4720 = vadd.f32 %v4704, %v4674
        %v4721 = vadd.f32 %v4705, %v4679
        %v4722 = vadd.f32 %v4706, %v4684
        %v4723 = vadd.f32 %v4707, %v4689
        %4724 = vst [vmem:[#allocation2] sm:$0xff] %v4708
        %4725 = vst [vmem:[#allocation2 + $0x8] sm:$0xff] %v4709
        %4726 = vst [vmem:[#allocation2 + $0x10] sm:$0xff] %v4710
        %4727 = vst [vmem:[#allocation2 + $0x18] sm:$0xff] %v4711
        %4728 = vst [vmem:[#allocation2 + $0x20] sm:$0xff] %v4712
        %4729 = vst [vmem:[#allocation2 + $0x28] sm:$0xff] %v4713
        %4730 = vst [vmem:[#allocation2 + $0x30] sm:$0xff] %v4714
        %4731 = vst [vmem:[#allocation2 + $0x38] sm:$0xff] %v4715
        %4732 = vst [vmem:[#allocation2 + $0x40] sm:$0xff] %v4716
        %4733 = vst [vmem:[#allocation2 + $0x48] sm:$0xff] %v4717
        %4734 = vst [vmem:[#allocation2 + $0x50] sm:$0xff] %v4718
        %4735 = vst [vmem:[#allocation2 + $0x58] sm:$0xff] %v4719
        %4736 = vst [vmem:[#allocation2 + $0x60] sm:$0xff] %v4720
        %4737 = vst [vmem:[#allocation2 + $0x68] sm:$0xff] %v4721
        %4738 = vst [vmem:[#allocation2 + $0x70] sm:$0xff] %v4722
        %4739 = vst [vmem:[#allocation2 + $0x78] sm:$0xff] %v4723
        %v4740 = vld [vmem:[%s1826 + $0x8] sm:$0xff]
        %v4741 = vld [vmem:[%s1826 + $0x10] sm:$0xff]
        %v4742 = vld [vmem:[%s1826 + $0x28] sm:$0xff]
        %v4743 = vld [vmem:[%s1826 + $0x30] sm:$0xff]
        %v4744 = vld [vmem:[%s1826 + $0x48] sm:$0xff]
        %v4745 = vld [vmem:[%s1826 + $0x50] sm:$0xff]
        %v4746 = vld [vmem:[%s1826 + $0x68] sm:$0xff]
        %v4747 = vld [vmem:[%s1826 + $0x70] sm:$0xff]
        %v4748 = vld [vmem:[%s1826 + $0x88] sm:$0xff]
        %v4749 = vld [vmem:[%s1826 + $0x90] sm:$0xff]
        %v4750 = vld [vmem:[%s1826 + $0xa8] sm:$0xff]
        %v4751 = vld [vmem:[%s1826 + $0xb0] sm:$0xff]
        %v4752 = vld [vmem:[%s1826 + $0xc8] sm:$0xff]
        %v4753 = vld [vmem:[%s1826 + $0xd0] sm:$0xff]
        %v4754 = vld [vmem:[%s1826 + $0xe8] sm:$0xff]
        %v4755 = vld [vmem:[%s1826 + $0xf0] sm:$0xff]
        %v4756 = vld [vmem:[#allocation2] sm:$0xff]
        %v4757 = vld [vmem:[#allocation2 + $0x8] sm:$0xff]
        %v4758 = vld [vmem:[#allocation2 + $0x10] sm:$0xff]
        %v4759 = vld [vmem:[#allocation2 + $0x18] sm:$0xff]
        %v4760 = vld [vmem:[#allocation2 + $0x20] sm:$0xff]
        %v4761 = vld [vmem:[#allocation2 + $0x28] sm:$0xff]
        %v4762 = vld [vmem:[#allocation2 + $0x30] sm:$0xff]
        %v4763 = vld [vmem:[#allocation2 + $0x38] sm:$0xff]
        %v4764 = vld [vmem:[#allocation2 + $0x40] sm:$0xff]
        %v4765 = vld [vmem:[#allocation2 + $0x48] sm:$0xff]
        %v4766 = vld [vmem:[#allocation2 + $0x50] sm:$0xff]
        %v4767 = vld [vmem:[#allocation2 + $0x58] sm:$0xff]
        %v4768 = vld [vmem:[#allocation2 + $0x60] sm:$0xff]
        %v4769 = vld [vmem:[#allocation2 + $0x68] sm:$0xff]
        %v4770 = vld [vmem:[#allocation2 + $0x70] sm:$0xff]
        %v4771 = vld [vmem:[#allocation2 + $0x78] sm:$0xff]
        %v4772 = vld [vmem:[%s4] sm:$0x1]
        %v4774 = vlaneseq
        %v4775 = vshrl.u32 %v4774, 7
        %v4776 = vsub.s32 0, %v4775
        %v4777 = vrot.slane %v4772, %v4776
        %v4779 = vadd.f32 %v4756, %v4777
        %v4780 = vadd.f32 %v4757, %v4777
        %v4781 = vadd.f32 %v4758, %v4777
        %v4782 = vadd.f32 %v4759, %v4777
        %v4783 = vadd.f32 %v4760, %v4777
        %v4784 = vadd.f32 %v4761, %v4777
        %v4785 = vadd.f32 %v4762, %v4777
        %v4786 = vadd.f32 %v4763, %v4777
        %v4787 = vadd.f32 %v4764, %v4777
        %v4788 = vadd.f32 %v4765, %v4777
        %v4789 = vadd.f32 %v4766, %v4777
        %v4790 = vadd.f32 %v4767, %v4777
        %v4791 = vadd.f32 %v4768, %v4777
        %v4792 = vadd.f32 %v4769, %v4777
        %v4793 = vadd.f32 %v4770, %v4777
        %v4794 = vadd.f32 %v4771, %v4777
        %v4795 = vadd.f32 %v4779, %v4740
        %v4796 = vadd.f32 %v4780, %v4741
        %v4797 = vadd.f32 %v4781, %v4742
        %v4798 = vadd.f32 %v4782, %v4743
        %v4799 = vadd.f32 %v4783, %v4744
        %v4800 = vadd.f32 %v4784, %v4745
        %v4801 = vadd.f32 %v4785, %v4746
        %v4802 = vadd.f32 %v4786, %v4747
        %v4803 = vadd.f32 %v4787, %v4748
        %v4804 = vadd.f32 %v4788, %v4749
        %v4805 = vadd.f32 %v4789, %v4750
        %v4806 = vadd.f32 %v4790, %v4751
        %v4807 = vadd.f32 %v4791, %v4752
        %v4808 = vadd.f32 %v4792, %v4753
        %v4809 = vadd.f32 %v4793, %v4754
        %v4810 = vadd.f32 %v4794, %v4755
        %v4811 = vmax.f32 %v4795, 0.0
        %v4812 = vmax.f32 %v4796, 0.0
        %v4813 = vmax.f32 %v4797, 0.0
        %v4814 = vmax.f32 %v4798, 0.0
        %v4815 = vmax.f32 %v4799, 0.0
        %v4816 = vmax.f32 %v4800, 0.0
        %v4817 = vmax.f32 %v4801, 0.0
        %v4818 = vmax.f32 %v4802, 0.0
        %v4819 = vmax.f32 %v4803, 0.0
        %v4820 = vmax.f32 %v4804, 0.0
        %v4821 = vmax.f32 %v4805, 0.0
        %v4822 = vmax.f32 %v4806, 0.0
        %v4823 = vmax.f32 %v4807, 0.0
        %v4824 = vmax.f32 %v4808, 0.0
        %v4825 = vmax.f32 %v4809, 0.0
        %v4826 = vmax.f32 %v4810, 0.0
        %4827 = vst [vmem:[%s285] sm:$0xff] %v4811
        %4828 = vst [vmem:[%s285 + $0x8] sm:$0xff] %v4812
        %4829 = vst [vmem:[%s285 + $0x10] sm:$0xff] %v4813
        %4830 = vst [vmem:[%s285 + $0x18] sm:$0xff] %v4814
        %4831 = vst [vmem:[%s285 + $0x20] sm:$0xff] %v4815
        %4832 = vst [vmem:[%s285 + $0x28] sm:$0xff] %v4816
        %4833 = vst [vmem:[%s285 + $0x30] sm:$0xff] %v4817
        %4834 = vst [vmem:[%s285 + $0x38] sm:$0xff] %v4818
        %4835 = vst [vmem:[%s285 + $0x40] sm:$0xff] %v4819
        %4836 = vst [vmem:[%s285 + $0x48] sm:$0xff] %v4820
        %4837 = vst [vmem:[%s285 + $0x50] sm:$0xff] %v4821
        %4838 = vst [vmem:[%s285 + $0x58] sm:$0xff] %v4822
        %4839 = vst [vmem:[%s285 + $0x60] sm:$0xff] %v4823
        %4840 = vst [vmem:[%s285 + $0x68] sm:$0xff] %v4824
        %4841 = vst [vmem:[%s285 + $0x70] sm:$0xff] %v4825
        %4842 = vst [vmem:[%s285 + $0x78] sm:$0xff] %v4826
        %s4843 = sand.u32 %s155, 1
        %s4844 = scalar_lea.sflag [#allocation6], %s4843
        %s4845 = sand.u32 %s155, 1
        %s4846 = smul.addr %s4845, 128
        %s4847 = scalar_lea.vmem [#allocation10], %s4846
        // Predicated region
        $region61: #{tpu_custom_call.1} parent=39 // pred_check
          %p4848 = pneg %p165
        $region62: #{tpu_custom_call.1} parent=39 // pred_check_branch
          %4850 = sbr.rel (%p4848) target = $region64
        $region63: #{tpu_custom_call.1} parent=39 // pred_region
          %s4851 = smul.u32 8, %s28
          %s4853 = ssub.s32 2048, 2048
          %4854 = vsyncadd %s4844, %s4853
          %s4855 = smul.addr %s4851, 2
          %s4856 = smul.addr %s27, 32
          %s4857 = sadd.s32 %s4855, %s4856
          %s4858 = smul.addr %s4857, 128
          %s4859 = scalar_lea.hbm %s5, %s4858
          %s4860 = sshll.u32 %s4847, 4
          %s4861 = int_to_ptr.vmem [resolvable:$true] %s4860
          %4866 = dma.vmem_to_hbm [thread:$0]  %s4861, 2048, %s4859, %s4844, 128, 128, 8
        $region64: #{tpu_custom_call.1} parent=39 // pred_fallthru
          _
      $region40: #{tpu_custom_call.1} parent=5 // pred_fallthru
        _
      %p4867 = scmp.le.s32.totalorder 2, %s18
      // Predicated region
      $region65: #{tpu_custom_call.1} parent=5 // pred_check
        %p4868 = pneg %p4867
      $region66: #{tpu_custom_call.1} parent=5 // pred_check_branch
        %4870 = sbr.rel (%p4868) target = $region68
      $region67: #{tpu_custom_call.1} parent=5 // pred_region
        %s4871 = ssub.s32 %s18, 2
        // Predicated region
        $region69: #{tpu_custom_call.1} parent=67 // pred_check
          %p4872 = pneg %p171
        $region70: #{tpu_custom_call.1} parent=67 // pred_check_branch
          %4874 = sbr.rel (%p4872) target = $region72
        $region71: #{tpu_custom_call.1} parent=67 // pred_region
          %s4875 = sand.u32 %s156, 1
          %s4876 = scalar_lea.sflag [#allocation6], %s4875
          %s4877 = sand.u32 %s156, 1
          %s4878 = smul.addr %s4877, 128
          %s4879 = scalar_lea.vmem [#allocation10], %s4878
          %4880 = dma.done %s4876, 2048
        $region72: #{tpu_custom_call.1} parent=67 // pred_fallthru
          _
      $region68: #{tpu_custom_call.1} parent=5 // pred_fallthru
        _
    $region6: #{tpu_custom_call.1} parent=1 // loop_footer
      %s22 = sadd.s32 1, %s18
    $region7: #{tpu_custom_call.1} parent=1 // loop_footer_branch
      %17 = sbr.rel target = $region3
    $region8: #{tpu_custom_call.1} parent=1 // loop_exit
      _
    %4881 = vsyncpa [#allocation5], 1
    %s4882 = scalar_lea.sflag [#allocation5], 1
    %4883 = vsyncpa %s4882, 1
    %4884 = vsyncpa [#allocation8], 1
    %4885 = vsyncpa [#allocation6], 1
    %s4886 = scalar_lea.sflag [#allocation6], 1
    %4887 = vsyncpa %s4886, 1

</llo_original>
